<compile_context>
chip_gen: v7x
topology: tpu7x:2x2x1
jax: 0.10.0
libtpu: 0.0.40
codegen_flags: <defaults>
</compile_context>

<pallas_src>
import jax
import jax.numpy as jnp
from jax.experimental import pallas as pl
from jax.experimental.pallas import tpu as pltpu


# ---------------------------------------------------------------------------
# weight packing helpers (run once at init)
# ---------------------------------------------------------------------------

def _pad_tap(w2d, cpad):
    cin, cout = w2d.shape
    return jnp.pad(w2d, ((0, cpad - cin), (0, cpad - cout)))


def _conv_slab(weight_oik, cpad):
    # torch Conv1d weight (Cout, Cin, 3) -> fused (3*cpad, cpad) slab so that
    #   y[t] = [x[t-1] | x[t] | x[t+1]] @ slab
    return jnp.concatenate(
        [_pad_tap(weight_oik[:, :, k].T, cpad) for k in range(3)], axis=0)


def _convT_slabs(weight_iok, cpad):
    # torch ConvTranspose1d(k=3, s=2, p=1, output_padding=1) weight
    # (Cin, Cout, 3).  Against the same window layout [x[m-1] | x[m] | x[m+1]]:
    #   y[2m]   = x[m] @ W1               -> slab [0 | W1 | 0 ]
    #   y[2m+1] = x[m] @ W2 + x[m+1] @ W0 -> slab [0 | W2 | W0]
    z = jnp.zeros((cpad, cpad), weight_iok.dtype)
    w0 = _pad_tap(weight_iok[:, :, 0], cpad)
    w1 = _pad_tap(weight_iok[:, :, 1], cpad)
    w2 = _pad_tap(weight_iok[:, :, 2], cpad)
    return (jnp.concatenate([z, w1, z], axis=0),
            jnp.concatenate([z, w2, w0], axis=0))


def _pad_bias(bias, cpad):
    return jnp.pad(bias, (0, cpad - bias.shape[0])).reshape(1, cpad)


# ---------------------------------------------------------------------------
# fused forward kernel (one grid step == one batch element, full network)
# ---------------------------------------------------------------------------

def _make_xgpn_kernel(num_levels, t_in, idx):
    L = num_levels
    t_enc = [t_in >> i for i in range(L)]

    def kernel(x_ref, w_ref, b_ref, *refs):
        out_enc = refs[:L]
        out_dec = refs[L:2 * L]
        bufs = refs[2 * L:]
        buf_x0 = bufs[0]
        buf_enc = bufs[1:1 + L]
        buf_dec = bufs[1 + L:2 * L]        # L-1 buffers
        buf_sum = bufs[2 * L:]             # L-1 buffers

        # Zero the haloed scratch; the always-zero halo rows provide the conv
        # zero padding so no concat-based time shifts are needed anywhere.
        for buf in bufs:
            buf[...] = jnp.zeros_like(buf)

        def window(buf, n, stride):
            # (n, 3*C) window from three static (optionally strided) slices of
            # a haloed buffer; lane-concat of full-width pieces is layout-only.
            if stride == 1:
                parts = [buf[pl.ds(k, n), :] for k in range(3)]
            else:
                parts = [buf[pl.ds(k, n, stride=stride), :] for k in range(3)]
            return jnp.concatenate(parts, axis=-1).astype(jnp.bfloat16)

        def conv(buf, n, stride, j):
            # Conv1d(k=3, p=1, stride) + bias + ReLU as one MXU matmul.
            y = jnp.dot(window(buf, n, stride), w_ref[j],
                        preferred_element_type=jnp.float32)
            return jnp.maximum(y + b_ref[j], 0.0)

        # ------------------------------ encoder -----------------------------
        y = conv(x_ref, t_in, 1, idx['conv0'])
        buf_x0[pl.ds(1, t_in), :] = y
        prev = buf_x0
        for i in range(L):
            n = t_enc[i]
            y = conv(prev, n, 1 if i == 0 else 2, idx['enc'][i])
            out_enc[i][...] = y.astype(out_enc[i].dtype)
            buf_enc[i][pl.ds(1, n), :] = y
            prev = buf_enc[i]

        # ------------------------------ decoder -----------------------------
        n = t_enc[L - 1]
        y = conv(buf_enc[L - 1], n, 1, idx['lv1'][0])
        out_dec[0][...] = y.astype(out_dec[0].dtype)
        if L > 1:
            buf_dec[0][pl.ds(1, n), :] = y

        for i in range(L - 1):
            ii = L - i - 2
            n_in = t_enc[L - 1 - i]        # length of current decoder state
            n_out = t_enc[ii]              # = 2 * n_in
            # ConvTranspose1d + ReLU: two matmuls on one window; even/odd rows
            # interleaved into the haloed sum buffer with strided stores.
            je, jo = idx['dect'][i]
            win = window(buf_dec[i], n_in, 1)
            ye = jnp.maximum(
                jnp.dot(win, w_ref[je], preferred_element_type=jnp.float32)
                + b_ref[je], 0.0)
            yo = jnp.maximum(
                jnp.dot(win, w_ref[jo], preferred_element_type=jnp.float32)
                + b_ref[jo], 0.0)
            buf_sum[i][pl.ds(1, n_in, stride=2), :] = ye
            buf_sum[i][pl.ds(2, n_in, stride=2), :] = yo
            # feat_enc = levels2[i](e_ii); accumulate into the sum buffer.
            fe = conv(buf_enc[ii], n_out, 1, idx['lv2'][i])
            buf_sum[i][pl.ds(1, n_out), :] = buf_sum[i][pl.ds(1, n_out), :] + fe
            # x = levels1[i + 1](feat_enc + feat_dec)
            y = conv(buf_sum[i], n_out, 1, idx['lv1'][i + 1])
            out_dec[i + 1][...] = y.astype(out_dec[i + 1].dtype)
            if i + 1 < L - 1:
                buf_dec[i + 1][pl.ds(1, n_out), :] = y

    return kernel


# ---------------------------------------------------------------------------
# XGPN module (parameters built deterministically in-script)
# ---------------------------------------------------------------------------

class XGPNPallas:
    """Plain-Conv1d XGPN with the whole forward fused in one Pallas kernel."""

    def __init__(self, opt, key):
        self.num_levels = int(opt['num_levels'])
        self.input_feat_dim = int(opt['input_feat_dim'])
        self.hidden_dim = int(opt['bb_hidden_dim'])
        # TODO(synk): ViT / ViT2 / xGN encoder branches are not implemented;
        # this reproduces the plain Conv1d path (all use_* flags False).

        F, H, L = self.input_feat_dim, self.hidden_dim, self.num_levels
        self.cpad = ((max(F, H) + 127) // 128) * 128   # lane-dense channels
        cpad = self.cpad
        keys = iter(jax.random.split(key, 4 * L + 8))

        def conv_params(cin, cout):
            k = next(keys)
            w = jax.random.normal(k, (cout, cin, 3), jnp.float32) * 0.05
            b = jax.random.normal(jax.random.fold_in(k, 1), (cout,),
                                  jnp.float32) * 0.05
            return w, b

        def convT_params(cin, cout):
            k = next(keys)
            w = jax.random.normal(k, (cin, cout, 3), jnp.float32) * 0.05
            b = jax.random.normal(jax.random.fold_in(k, 1), (cout,),
                                  jnp.float32) * 0.05
            return w, b

        slabs, biases = [], []

        def add(slab, bias):
            slabs.append(slab)
            biases.append(bias)
            return len(slabs) - 1

        idx = {}
        w, b = conv_params(F, H)
        idx['conv0'] = add(_conv_slab(w, cpad), _pad_bias(b, cpad))
        idx['enc'] = []
        for _ in range(L):
            w, b = conv_params(H, H)
            idx['enc'].append(add(_conv_slab(w, cpad), _pad_bias(b, cpad)))
        idx['lv1'] = []
        for _ in range(L):
            w, b = conv_params(H, H)
            idx['lv1'].append(add(_conv_slab(w, cpad), _pad_bias(b, cpad)))
        idx['lv2'] = []
        for _ in range(L - 1):
            w, b = conv_params(H, H)
            idx['lv2'].append(add(_conv_slab(w, cpad), _pad_bias(b, cpad)))
        idx['dect'] = []
        for _ in range(L - 1):
            w, b = convT_params(H, H)
            ev, od = _convT_slabs(w, cpad)
            bb = _pad_bias(b, cpad)
            idx['dect'].append((add(ev, bb), add(od, bb)))

        # Weights pre-transposed / padded / fused / bf16-cast once at init;
        # biases pre-reshaped to (1, cpad) f32.
        self.w_stack = jnp.stack(slabs).astype(jnp.bfloat16)  # (S, 3*cpad, cpad)
        self.b_stack = jnp.stack(biases)                       # (S, 1, cpad)
        self.idx = idx

    def __call__(self, input_nct, num_frms):
        del num_frms  # only used by the (unimplemented) xGPN branch
        L, H, cpad = self.num_levels, self.hidden_dim, self.cpad
        n, c, t = input_nct.shape
        assert c == self.input_feat_dim
        assert t % (1 << (L - 1)) == 0, (
            "temporal length must be divisible by 2**(num_levels-1)")

        t_enc = [t >> i for i in range(L)]
        dec_t = [t_enc[L - 1 - i] for i in range(L)]

        # NCT -> NTC, pad channels to 128 lanes, pad time with a 1-row halo.
        x = jnp.transpose(input_nct, (0, 2, 1))
        x = jnp.pad(x, ((0, 0), (1, 1), (0, cpad - c)))

        out_shapes = tuple(
            jax.ShapeDtypeStruct((n, tt, cpad), jnp.float32)
            for tt in t_enc + dec_t)
        out_specs = tuple(
            pl.BlockSpec((None, tt, cpad), lambda i: (i, 0, 0))
            for tt in t_enc + dec_t)

        s = self.w_stack.shape[0]
        in_specs = [
            pl.BlockSpec((None, t + 2, cpad), lambda i: (i, 0, 0)),
            pl.BlockSpec((s, 3 * cpad, cpad), lambda i: (0, 0, 0)),
            pl.BlockSpec((s, 1, cpad), lambda i: (0, 0, 0)),
        ]

        # Haloed VMEM scratch: conv0 output, encoder outputs, decoder states,
        # and the feat_enc+feat_dec sum buffers (all length+2 with zero halos).
        halo_lens = ([t] + t_enc
                     + [t_enc[L - 1 - i] for i in range(L - 1)]
                     + [t_enc[L - 2 - i] for i in range(L - 1)])
        scratch = [pltpu.VMEM((hl + 2, cpad), jnp.float32)
                   for hl in halo_lens]

        kernel = _make_xgpn_kernel(L, t, self.idx)
        outs = pl.pallas_call(
            kernel,
            out_shape=out_shapes,
            grid=(n,),
            in_specs=in_specs,
            out_specs=out_specs,
            scratch_shapes=scratch,
            compiler_params=pltpu.CompilerParams(
                dimension_semantics=("parallel",)),
        )(x, self.w_stack, self.b_stack)

        to_nct = lambda a: jnp.transpose(a[:, :, :H], (0, 2, 1))
        feats_enc = [to_nct(o) for o in outs[:L]]
        feats_dec = [to_nct(o) for o in outs[L:]]
        return feats_enc, feats_dec


if __name__ == "__main__":
    opt = dict(
        input_feat_dim=16,
        bb_hidden_dim=32,
        batch_size=2,
        num_levels=3,
        use_ViT=False,
        use_ViT2=False,
        use_ViTFeatures=False,
        use_xGPN=False,
        testing=False,
    )
    key = jax.random.PRNGKey(0)
    k_param, k_in = jax.random.split(key)

    model = XGPNPallas(opt, k_param)

    N, C, T = 2, opt['input_feat_dim'], 32
    x = jax.random.normal(k_in, (N, C, T), jnp.float32)
    num_frms = jnp.full((N,), T, jnp.int32)

    feats_enc, feats_dec = model(x, num_frms)
    for f in feats_enc + feats_dec:
        jax.block_until_ready(f)
    print("KERNEL_OK")
</pallas_src>

<mosaic_0001>
module attributes {stable_mosaic.version = 11 : i64} {
  func.func @kernel(%arg0: i32, %arg1: memref<1x34x128xf32, #tpu.memory_space<vmem>>, %arg2: memref<13x384x128xbf16, #tpu.memory_space<vmem>>, %arg3: memref<13x1x128xf32, #tpu.memory_space<vmem>>, %arg4: memref<1x32x128xf32, #tpu.memory_space<vmem>>, %arg5: memref<1x16x128xf32, #tpu.memory_space<vmem>>, %arg6: memref<1x8x128xf32, #tpu.memory_space<vmem>>, %arg7: memref<1x8x128xf32, #tpu.memory_space<vmem>>, %arg8: memref<1x16x128xf32, #tpu.memory_space<vmem>>, %arg9: memref<1x32x128xf32, #tpu.memory_space<vmem>>, %arg10: memref<34x128xf32, #tpu.memory_space<vmem>>, %arg11: memref<34x128xf32, #tpu.memory_space<vmem>>, %arg12: memref<18x128xf32, #tpu.memory_space<vmem>>, %arg13: memref<10x128xf32, #tpu.memory_space<vmem>>, %arg14: memref<10x128xf32, #tpu.memory_space<vmem>>, %arg15: memref<18x128xf32, #tpu.memory_space<vmem>>, %arg16: memref<18x128xf32, #tpu.memory_space<vmem>>, %arg17: memref<34x128xf32, #tpu.memory_space<vmem>>) attributes {dimension_semantics = [#tpu.dimension_semantics<parallel>], iteration_bounds = array<i64: 2>, scalar_prefetch = 0 : i64, scratch_operands = 8 : i64, tpu.core_type = #tpu.core_type<tc>, window_params = [{transform_indices = @transform_0, window_bounds = array<i64: 1, 34, 128>}, {pipeline_mode = #tpu.pipeline_mode<synchronous>, transform_indices = @transform_1, window_bounds = array<i64: 13, 384, 128>}, {pipeline_mode = #tpu.pipeline_mode<synchronous>, transform_indices = @transform_2, window_bounds = array<i64: 13, 1, 128>}, {transform_indices = @transform_3, window_bounds = array<i64: 1, 32, 128>}, {transform_indices = @transform_4, window_bounds = array<i64: 1, 16, 128>}, {transform_indices = @transform_5, window_bounds = array<i64: 1, 8, 128>}, {transform_indices = @transform_6, window_bounds = array<i64: 1, 8, 128>}, {transform_indices = @transform_7, window_bounds = array<i64: 1, 16, 128>}, {transform_indices = @transform_8, window_bounds = array<i64: 1, 32, 128>}]} {
    %cst = arith.constant 0.000000e+00 : f32
    %0 = vector.broadcast %cst : f32 to vector<34x128xf32>
    %c0 = arith.constant 0 : index
    %c0_0 = arith.constant 0 : index
    %1 = vector.load %arg10[%c0, %c0_0] : memref<34x128xf32, #tpu.memory_space<vmem>>, vector<34x128xf32>
    tpu.vector_store %arg10[%c0, %c0_0], %0 {strides = array<i32>} : memref<34x128xf32, #tpu.memory_space<vmem>>, vector<34x128xf32>,
    %cst_1 = arith.constant 0.000000e+00 : f32
    %2 = vector.broadcast %cst_1 : f32 to vector<34x128xf32>
    %c0_2 = arith.constant 0 : index
    %c0_3 = arith.constant 0 : index
    %3 = vector.load %arg11[%c0_2, %c0_3] : memref<34x128xf32, #tpu.memory_space<vmem>>, vector<34x128xf32>
    tpu.vector_store %arg11[%c0_2, %c0_3], %2 {strides = array<i32>} : memref<34x128xf32, #tpu.memory_space<vmem>>, vector<34x128xf32>,
    %cst_4 = arith.constant 0.000000e+00 : f32
    %4 = vector.broadcast %cst_4 : f32 to vector<18x128xf32>
    %c0_5 = arith.constant 0 : index
    %c0_6 = arith.constant 0 : index
    %5 = vector.load %arg12[%c0_5, %c0_6] : memref<18x128xf32, #tpu.memory_space<vmem>>, vector<18x128xf32>
    tpu.vector_store %arg12[%c0_5, %c0_6], %4 {strides = array<i32>} : memref<18x128xf32, #tpu.memory_space<vmem>>, vector<18x128xf32>,
    %cst_7 = arith.constant 0.000000e+00 : f32
    %6 = vector.broadcast %cst_7 : f32 to vector<10x128xf32>
    %c0_8 = arith.constant 0 : index
    %c0_9 = arith.constant 0 : index
    %7 = vector.load %arg13[%c0_8, %c0_9] : memref<10x128xf32, #tpu.memory_space<vmem>>, vector<10x128xf32>
    tpu.vector_store %arg13[%c0_8, %c0_9], %6 {strides = array<i32>} : memref<10x128xf32, #tpu.memory_space<vmem>>, vector<10x128xf32>,
    %cst_10 = arith.constant 0.000000e+00 : f32
    %8 = vector.broadcast %cst_10 : f32 to vector<10x128xf32>
    %c0_11 = arith.constant 0 : index
    %c0_12 = arith.constant 0 : index
    %9 = vector.load %arg14[%c0_11, %c0_12] : memref<10x128xf32, #tpu.memory_space<vmem>>, vector<10x128xf32>
    tpu.vector_store %arg14[%c0_11, %c0_12], %8 {strides = array<i32>} : memref<10x128xf32, #tpu.memory_space<vmem>>, vector<10x128xf32>,
    %cst_13 = arith.constant 0.000000e+00 : f32
    %10 = vector.broadcast %cst_13 : f32 to vector<18x128xf32>
    %c0_14 = arith.constant 0 : index
    %c0_15 = arith.constant 0 : index
    %11 = vector.load %arg15[%c0_14, %c0_15] : memref<18x128xf32, #tpu.memory_space<vmem>>, vector<18x128xf32>
    tpu.vector_store %arg15[%c0_14, %c0_15], %10 {strides = array<i32>} : memref<18x128xf32, #tpu.memory_space<vmem>>, vector<18x128xf32>,
    %cst_16 = arith.constant 0.000000e+00 : f32
    %12 = vector.broadcast %cst_16 : f32 to vector<18x128xf32>
    %c0_17 = arith.constant 0 : index
    %c0_18 = arith.constant 0 : index
    %13 = vector.load %arg16[%c0_17, %c0_18] : memref<18x128xf32, #tpu.memory_space<vmem>>, vector<18x128xf32>
    tpu.vector_store %arg16[%c0_17, %c0_18], %12 {strides = array<i32>} : memref<18x128xf32, #tpu.memory_space<vmem>>, vector<18x128xf32>,
    %cst_19 = arith.constant 0.000000e+00 : f32
    %14 = vector.broadcast %cst_19 : f32 to vector<34x128xf32>
    %c0_20 = arith.constant 0 : index
    %c0_21 = arith.constant 0 : index
    %15 = vector.load %arg17[%c0_20, %c0_21] : memref<34x128xf32, #tpu.memory_space<vmem>>, vector<34x128xf32>
    tpu.vector_store %arg17[%c0_20, %c0_21], %14 {strides = array<i32>} : memref<34x128xf32, #tpu.memory_space<vmem>>, vector<34x128xf32>,
    %c0_22 = arith.constant 0 : index
    %c0_23 = arith.constant 0 : index
    %c0_24 = arith.constant 0 : index
    %16 = vector.load %arg1[%c0_22, %c0_23, %c0_24] : memref<1x34x128xf32, #tpu.memory_space<vmem>>, vector<1x32x128xf32>
    %17 = vector.shape_cast %16 : vector<1x32x128xf32> to vector<32x128xf32>
    %c0_25 = arith.constant 0 : index
    %c1 = arith.constant 1 : index
    %c0_26 = arith.constant 0 : index
    %18 = vector.load %arg1[%c0_25, %c1, %c0_26] : memref<1x34x128xf32, #tpu.memory_space<vmem>>, vector<1x32x128xf32>
    %19 = vector.shape_cast %18 : vector<1x32x128xf32> to vector<32x128xf32>
    %c0_27 = arith.constant 0 : index
    %c2 = arith.constant 2 : index
    %c0_28 = arith.constant 0 : index
    %20 = vector.load %arg1[%c0_27, %c2, %c0_28] : memref<1x34x128xf32, #tpu.memory_space<vmem>>, vector<1x32x128xf32>
    %21 = vector.shape_cast %20 : vector<1x32x128xf32> to vector<32x128xf32>
    %22 = tpu.concatenate %17, %19, %21 in 1 : vector<32x128xf32>, vector<32x128xf32>, vector<32x128xf32> -> vector<32x384xf32>
    %23 = arith.truncf %22 : vector<32x384xf32> to vector<32x384xbf16>
    %c0_29 = arith.constant 0 : index
    %c0_30 = arith.constant 0 : index
    %c0_31 = arith.constant 0 : index
    %24 = vector.load %arg2[%c0_29, %c0_30, %c0_31] : memref<13x384x128xbf16, #tpu.memory_space<vmem>>, vector<1x384x128xbf16>
    %25 = vector.shape_cast %24 : vector<1x384x128xbf16> to vector<384x128xbf16>
    %cst_32 = arith.constant dense<0.000000e+00> : vector<32x128xf32>
    %26 = tpu.matmul %23, %25, %cst_32 {dimension_numbers = #tpu.dot_dimension_numbers<[1], [0], [0], [1], [0, 0, 1, 1], [], []>} : vector<32x384xbf16>, vector<384x128xbf16>, vector<32x128xf32> -> vector<32x128xf32>
    %c0_33 = arith.constant 0 : index
    %c0_34 = arith.constant 0 : index
    %c0_35 = arith.constant 0 : index
    %27 = vector.load %arg3[%c0_33, %c0_34, %c0_35] : memref<13x1x128xf32, #tpu.memory_space<vmem>>, vector<1x1x128xf32>
    %28 = vector.shape_cast %27 : vector<1x1x128xf32> to vector<1x128xf32>
    %29 = vector.broadcast %28 : vector<1x128xf32> to vector<32x128xf32>
    %30 = arith.addf %26, %29 : vector<32x128xf32>
    %cst_36 = arith.constant 0.000000e+00 : f32
    %31 = vector.broadcast %cst_36 : f32 to vector<32x128xf32>
    %32 = arith.maximumf %30, %31 : vector<32x128xf32>
    %c1_37 = arith.constant 1 : index
    %c0_38 = arith.constant 0 : index
    %33 = vector.load %arg10[%c1_37, %c0_38] : memref<34x128xf32, #tpu.memory_space<vmem>>, vector<32x128xf32>
    tpu.vector_store %arg10[%c1_37, %c0_38], %32 {strides = array<i32>} : memref<34x128xf32, #tpu.memory_space<vmem>>, vector<32x128xf32>,
    %c0_39 = arith.constant 0 : index
    %c0_40 = arith.constant 0 : index
    %34 = vector.load %arg10[%c0_39, %c0_40] : memref<34x128xf32, #tpu.memory_space<vmem>>, vector<32x128xf32>
    %c1_41 = arith.constant 1 : index
    %c0_42 = arith.constant 0 : index
    %35 = vector.load %arg10[%c1_41, %c0_42] : memref<34x128xf32, #tpu.memory_space<vmem>>, vector<32x128xf32>
    %c2_43 = arith.constant 2 : index
    %c0_44 = arith.constant 0 : index
    %36 = vector.load %arg10[%c2_43, %c0_44] : memref<34x128xf32, #tpu.memory_space<vmem>>, vector<32x128xf32>
    %37 = tpu.concatenate %34, %35, %36 in 1 : vector<32x128xf32>, vector<32x128xf32>, vector<32x128xf32> -> vector<32x384xf32>
    %38 = arith.truncf %37 : vector<32x384xf32> to vector<32x384xbf16>
    %c1_45 = arith.constant 1 : index
    %c0_46 = arith.constant 0 : index
    %c0_47 = arith.constant 0 : index
    %39 = vector.load %arg2[%c1_45, %c0_46, %c0_47] : memref<13x384x128xbf16, #tpu.memory_space<vmem>>, vector<1x384x128xbf16>
    %40 = vector.shape_cast %39 : vector<1x384x128xbf16> to vector<384x128xbf16>
    %cst_48 = arith.constant dense<0.000000e+00> : vector<32x128xf32>
    %41 = tpu.matmul %38, %40, %cst_48 {dimension_numbers = #tpu.dot_dimension_numbers<[1], [0], [0], [1], [0, 0, 1, 1], [], []>} : vector<32x384xbf16>, vector<384x128xbf16>, vector<32x128xf32> -> vector<32x128xf32>
    %c1_49 = arith.constant 1 : index
    %c0_50 = arith.constant 0 : index
    %c0_51 = arith.constant 0 : index
    %42 = vector.load %arg3[%c1_49, %c0_50, %c0_51] : memref<13x1x128xf32, #tpu.memory_space<vmem>>, vector<1x1x128xf32>
    %43 = vector.shape_cast %42 : vector<1x1x128xf32> to vector<1x128xf32>
    %44 = vector.broadcast %43 : vector<1x128xf32> to vector<32x128xf32>
    %45 = arith.addf %41, %44 : vector<32x128xf32>
    %cst_52 = arith.constant 0.000000e+00 : f32
    %46 = vector.broadcast %cst_52 : f32 to vector<32x128xf32>
    %47 = arith.maximumf %45, %46 : vector<32x128xf32>
    %c0_53 = arith.constant 0 : index
    %c0_54 = arith.constant 0 : index
    %c0_55 = arith.constant 0 : index
    %48 = vector.load %arg4[%c0_53, %c0_54, %c0_55] : memref<1x32x128xf32, #tpu.memory_space<vmem>>, vector<1x32x128xf32>
    %49 = vector.shape_cast %48 : vector<1x32x128xf32> to vector<32x128xf32>
    %50 = vector.shape_cast %47 : vector<32x128xf32> to vector<1x32x128xf32>
    tpu.vector_store %arg4[%c0_53, %c0_54, %c0_55], %50 {strides = array<i32>} : memref<1x32x128xf32, #tpu.memory_space<vmem>>, vector<1x32x128xf32>,
    %c1_56 = arith.constant 1 : index
    %c0_57 = arith.constant 0 : index
    %51 = vector.load %arg11[%c1_56, %c0_57] : memref<34x128xf32, #tpu.memory_space<vmem>>, vector<32x128xf32>
    tpu.vector_store %arg11[%c1_56, %c0_57], %47 {strides = array<i32>} : memref<34x128xf32, #tpu.memory_space<vmem>>, vector<32x128xf32>,
    %c0_58 = arith.constant 0 : index
    %c0_59 = arith.constant 0 : index
    %52 = tpu.strided_load %arg11[%c0_58, %c0_59] {strides = array<i32: 2, 1>} : memref<34x128xf32, #tpu.memory_space<vmem>>, vector<16x128xf32>
    %c1_60 = arith.constant 1 : index
    %c0_61 = arith.constant 0 : index
    %53 = tpu.strided_load %arg11[%c1_60, %c0_61] {strides = array<i32: 2, 1>} : memref<34x128xf32, #tpu.memory_space<vmem>>, vector<16x128xf32>
    %c2_62 = arith.constant 2 : index
    %c0_63 = arith.constant 0 : index
    %54 = tpu.strided_load %arg11[%c2_62, %c0_63] {strides = array<i32: 2, 1>} : memref<34x128xf32, #tpu.memory_space<vmem>>, vector<16x128xf32>
    %55 = tpu.concatenate %52, %53, %54 in 1 : vector<16x128xf32>, vector<16x128xf32>, vector<16x128xf32> -> vector<16x384xf32>
    %56 = arith.truncf %55 : vector<16x384xf32> to vector<16x384xbf16>
    %c2_64 = arith.constant 2 : index
    %c0_65 = arith.constant 0 : index
    %c0_66 = arith.constant 0 : index
    %57 = vector.load %arg2[%c2_64, %c0_65, %c0_66] : memref<13x384x128xbf16, #tpu.memory_space<vmem>>, vector<1x384x128xbf16>
    %58 = vector.shape_cast %57 : vector<1x384x128xbf16> to vector<384x128xbf16>
    %cst_67 = arith.constant dense<0.000000e+00> : vector<16x128xf32>
    %59 = tpu.matmul %56, %58, %cst_67 {dimension_numbers = #tpu.dot_dimension_numbers<[1], [0], [0], [1], [0, 0, 1, 1], [], []>} : vector<16x384xbf16>, vector<384x128xbf16>, vector<16x128xf32> -> vector<16x128xf32>
    %c2_68 = arith.constant 2 : index
    %c0_69 = arith.constant 0 : index
    %c0_70 = arith.constant 0 : index
    %60 = vector.load %arg3[%c2_68, %c0_69, %c0_70] : memref<13x1x128xf32, #tpu.memory_space<vmem>>, vector<1x1x128xf32>
    %61 = vector.shape_cast %60 : vector<1x1x128xf32> to vector<1x128xf32>
    %62 = vector.broadcast %61 : vector<1x128xf32> to vector<16x128xf32>
    %63 = arith.addf %59, %62 : vector<16x128xf32>
    %cst_71 = arith.constant 0.000000e+00 : f32
    %64 = vector.broadcast %cst_71 : f32 to vector<16x128xf32>
    %65 = arith.maximumf %63, %64 : vector<16x128xf32>
    %c0_72 = arith.constant 0 : index
    %c0_73 = arith.constant 0 : index
    %c0_74 = arith.constant 0 : index
    %66 = vector.load %arg5[%c0_72, %c0_73, %c0_74] : memref<1x16x128xf32, #tpu.memory_space<vmem>>, vector<1x16x128xf32>
    %67 = vector.shape_cast %66 : vector<1x16x128xf32> to vector<16x128xf32>
    %68 = vector.shape_cast %65 : vector<16x128xf32> to vector<1x16x128xf32>
    tpu.vector_store %arg5[%c0_72, %c0_73, %c0_74], %68 {strides = array<i32>} : memref<1x16x128xf32, #tpu.memory_space<vmem>>, vector<1x16x128xf32>,
    %c1_75 = arith.constant 1 : index
    %c0_76 = arith.constant 0 : index
    %69 = vector.load %arg12[%c1_75, %c0_76] : memref<18x128xf32, #tpu.memory_space<vmem>>, vector<16x128xf32>
    tpu.vector_store %arg12[%c1_75, %c0_76], %65 {strides = array<i32>} : memref<18x128xf32, #tpu.memory_space<vmem>>, vector<16x128xf32>,
    %c0_77 = arith.constant 0 : index
    %c0_78 = arith.constant 0 : index
    %70 = tpu.strided_load %arg12[%c0_77, %c0_78] {strides = array<i32: 2, 1>} : memref<18x128xf32, #tpu.memory_space<vmem>>, vector<8x128xf32>
    %c1_79 = arith.constant 1 : index
    %c0_80 = arith.constant 0 : index
    %71 = tpu.strided_load %arg12[%c1_79, %c0_80] {strides = array<i32: 2, 1>} : memref<18x128xf32, #tpu.memory_space<vmem>>, vector<8x128xf32>
    %c2_81 = arith.constant 2 : index
    %c0_82 = arith.constant 0 : index
    %72 = tpu.strided_load %arg12[%c2_81, %c0_82] {strides = array<i32: 2, 1>} : memref<18x128xf32, #tpu.memory_space<vmem>>, vector<8x128xf32>
    %73 = tpu.concatenate %70, %71, %72 in 1 : vector<8x128xf32>, vector<8x128xf32>, vector<8x128xf32> -> vector<8x384xf32>
    %74 = arith.truncf %73 : vector<8x384xf32> to vector<8x384xbf16>
    %c3 = arith.constant 3 : index
    %c0_83 = arith.constant 0 : index
    %c0_84 = arith.constant 0 : index
    %75 = vector.load %arg2[%c3, %c0_83, %c0_84] : memref<13x384x128xbf16, #tpu.memory_space<vmem>>, vector<1x384x128xbf16>
    %76 = vector.shape_cast %75 : vector<1x384x128xbf16> to vector<384x128xbf16>
    %cst_85 = arith.constant dense<0.000000e+00> : vector<8x128xf32>
    %77 = tpu.matmul %74, %76, %cst_85 {dimension_numbers = #tpu.dot_dimension_numbers<[1], [0], [0], [1], [0, 0, 1, 1], [], []>} : vector<8x384xbf16>, vector<384x128xbf16>, vector<8x128xf32> -> vector<8x128xf32>
    %c3_86 = arith.constant 3 : index
    %c0_87 = arith.constant 0 : index
    %c0_88 = arith.constant 0 : index
    %78 = vector.load %arg3[%c3_86, %c0_87, %c0_88] : memref<13x1x128xf32, #tpu.memory_space<vmem>>, vector<1x1x128xf32>
    %79 = vector.shape_cast %78 : vector<1x1x128xf32> to vector<1x128xf32>
    %80 = vector.broadcast %79 : vector<1x128xf32> to vector<8x128xf32>
    %81 = arith.addf %77, %80 : vector<8x128xf32>
    %cst_89 = arith.constant 0.000000e+00 : f32
    %82 = vector.broadcast %cst_89 : f32 to vector<8x128xf32>
    %83 = arith.maximumf %81, %82 : vector<8x128xf32>
    %c0_90 = arith.constant 0 : index
    %c0_91 = arith.constant 0 : index
    %c0_92 = arith.constant 0 : index
    %84 = vector.load %arg6[%c0_90, %c0_91, %c0_92] : memref<1x8x128xf32, #tpu.memory_space<vmem>>, vector<1x8x128xf32>
    %85 = vector.shape_cast %84 : vector<1x8x128xf32> to vector<8x128xf32>
    %86 = vector.shape_cast %83 : vector<8x128xf32> to vector<1x8x128xf32>
    tpu.vector_store %arg6[%c0_90, %c0_91, %c0_92], %86 {strides = array<i32>} : memref<1x8x128xf32, #tpu.memory_space<vmem>>, vector<1x8x128xf32>,
    %c1_93 = arith.constant 1 : index
    %c0_94 = arith.constant 0 : index
    %87 = vector.load %arg13[%c1_93, %c0_94] : memref<10x128xf32, #tpu.memory_space<vmem>>, vector<8x128xf32>
    tpu.vector_store %arg13[%c1_93, %c0_94], %83 {strides = array<i32>} : memref<10x128xf32, #tpu.memory_space<vmem>>, vector<8x128xf32>,
    %c0_95 = arith.constant 0 : index
    %c0_96 = arith.constant 0 : index
    %88 = vector.load %arg13[%c0_95, %c0_96] : memref<10x128xf32, #tpu.memory_space<vmem>>, vector<8x128xf32>
    %c1_97 = arith.constant 1 : index
    %c0_98 = arith.constant 0 : index
    %89 = vector.load %arg13[%c1_97, %c0_98] : memref<10x128xf32, #tpu.memory_space<vmem>>, vector<8x128xf32>
    %c2_99 = arith.constant 2 : index
    %c0_100 = arith.constant 0 : index
    %90 = vector.load %arg13[%c2_99, %c0_100] : memref<10x128xf32, #tpu.memory_space<vmem>>, vector<8x128xf32>
    %91 = tpu.concatenate %88, %89, %90 in 1 : vector<8x128xf32>, vector<8x128xf32>, vector<8x128xf32> -> vector<8x384xf32>
    %92 = arith.truncf %91 : vector<8x384xf32> to vector<8x384xbf16>
    %c4 = arith.constant 4 : index
    %c0_101 = arith.constant 0 : index
    %c0_102 = arith.constant 0 : index
    %93 = vector.load %arg2[%c4, %c0_101, %c0_102] : memref<13x384x128xbf16, #tpu.memory_space<vmem>>, vector<1x384x128xbf16>
    %94 = vector.shape_cast %93 : vector<1x384x128xbf16> to vector<384x128xbf16>
    %cst_103 = arith.constant dense<0.000000e+00> : vector<8x128xf32>
    %95 = tpu.matmul %92, %94, %cst_103 {dimension_numbers = #tpu.dot_dimension_numbers<[1], [0], [0], [1], [0, 0, 1, 1], [], []>} : vector<8x384xbf16>, vector<384x128xbf16>, vector<8x128xf32> -> vector<8x128xf32>
    %c4_104 = arith.constant 4 : index
    %c0_105 = arith.constant 0 : index
    %c0_106 = arith.constant 0 : index
    %96 = vector.load %arg3[%c4_104, %c0_105, %c0_106] : memref<13x1x128xf32, #tpu.memory_space<vmem>>, vector<1x1x128xf32>
    %97 = vector.shape_cast %96 : vector<1x1x128xf32> to vector<1x128xf32>
    %98 = vector.broadcast %97 : vector<1x128xf32> to vector<8x128xf32>
    %99 = arith.addf %95, %98 : vector<8x128xf32>
    %cst_107 = arith.constant 0.000000e+00 : f32
    %100 = vector.broadcast %cst_107 : f32 to vector<8x128xf32>
    %101 = arith.maximumf %99, %100 : vector<8x128xf32>
    %c0_108 = arith.constant 0 : index
    %c0_109 = arith.constant 0 : index
    %c0_110 = arith.constant 0 : index
    %102 = vector.load %arg7[%c0_108, %c0_109, %c0_110] : memref<1x8x128xf32, #tpu.memory_space<vmem>>, vector<1x8x128xf32>
    %103 = vector.shape_cast %102 : vector<1x8x128xf32> to vector<8x128xf32>
    %104 = vector.shape_cast %101 : vector<8x128xf32> to vector<1x8x128xf32>
    tpu.vector_store %arg7[%c0_108, %c0_109, %c0_110], %104 {strides = array<i32>} : memref<1x8x128xf32, #tpu.memory_space<vmem>>, vector<1x8x128xf32>,
    %c1_111 = arith.constant 1 : index
    %c0_112 = arith.constant 0 : index
    %105 = vector.load %arg14[%c1_111, %c0_112] : memref<10x128xf32, #tpu.memory_space<vmem>>, vector<8x128xf32>
    tpu.vector_store %arg14[%c1_111, %c0_112], %101 {strides = array<i32>} : memref<10x128xf32, #tpu.memory_space<vmem>>, vector<8x128xf32>,
    %c0_113 = arith.constant 0 : index
    %c0_114 = arith.constant 0 : index
    %106 = vector.load %arg14[%c0_113, %c0_114] : memref<10x128xf32, #tpu.memory_space<vmem>>, vector<8x128xf32>
    %c1_115 = arith.constant 1 : index
    %c0_116 = arith.constant 0 : index
    %107 = vector.load %arg14[%c1_115, %c0_116] : memref<10x128xf32, #tpu.memory_space<vmem>>, vector<8x128xf32>
    %c2_117 = arith.constant 2 : index
    %c0_118 = arith.constant 0 : index
    %108 = vector.load %arg14[%c2_117, %c0_118] : memref<10x128xf32, #tpu.memory_space<vmem>>, vector<8x128xf32>
    %109 = tpu.concatenate %106, %107, %108 in 1 : vector<8x128xf32>, vector<8x128xf32>, vector<8x128xf32> -> vector<8x384xf32>
    %110 = arith.truncf %109 : vector<8x384xf32> to vector<8x384xbf16>
    %c9 = arith.constant 9 : index
    %c0_119 = arith.constant 0 : index
    %c0_120 = arith.constant 0 : index
    %111 = vector.load %arg2[%c9, %c0_119, %c0_120] : memref<13x384x128xbf16, #tpu.memory_space<vmem>>, vector<1x384x128xbf16>
    %112 = vector.shape_cast %111 : vector<1x384x128xbf16> to vector<384x128xbf16>
    %cst_121 = arith.constant dense<0.000000e+00> : vector<8x128xf32>
    %113 = tpu.matmul %110, %112, %cst_121 {dimension_numbers = #tpu.dot_dimension_numbers<[1], [0], [0], [1], [0, 0, 1, 1], [], []>} : vector<8x384xbf16>, vector<384x128xbf16>, vector<8x128xf32> -> vector<8x128xf32>
    %c9_122 = arith.constant 9 : index
    %c0_123 = arith.constant 0 : index
    %c0_124 = arith.constant 0 : index
    %114 = vector.load %arg3[%c9_122, %c0_123, %c0_124] : memref<13x1x128xf32, #tpu.memory_space<vmem>>, vector<1x1x128xf32>
    %115 = vector.shape_cast %114 : vector<1x1x128xf32> to vector<1x128xf32>
    %116 = vector.broadcast %115 : vector<1x128xf32> to vector<8x128xf32>
    %117 = arith.addf %113, %116 : vector<8x128xf32>
    %cst_125 = arith.constant 0.000000e+00 : f32
    %118 = vector.broadcast %cst_125 : f32 to vector<8x128xf32>
    %119 = arith.maximumf %117, %118 : vector<8x128xf32>
    %c10 = arith.constant 10 : index
    %c0_126 = arith.constant 0 : index
    %c0_127 = arith.constant 0 : index
    %120 = vector.load %arg2[%c10, %c0_126, %c0_127] : memref<13x384x128xbf16, #tpu.memory_space<vmem>>, vector<1x384x128xbf16>
    %121 = vector.shape_cast %120 : vector<1x384x128xbf16> to vector<384x128xbf16>
    %cst_128 = arith.constant dense<0.000000e+00> : vector<8x128xf32>
    %122 = tpu.matmul %110, %121, %cst_128 {dimension_numbers = #tpu.dot_dimension_numbers<[1], [0], [0], [1], [0, 0, 1, 1], [], []>} : vector<8x384xbf16>, vector<384x128xbf16>, vector<8x128xf32> -> vector<8x128xf32>
    %c10_129 = arith.constant 10 : index
    %c0_130 = arith.constant 0 : index
    %c0_131 = arith.constant 0 : index
    %123 = vector.load %arg3[%c10_129, %c0_130, %c0_131] : memref<13x1x128xf32, #tpu.memory_space<vmem>>, vector<1x1x128xf32>
    %124 = vector.shape_cast %123 : vector<1x1x128xf32> to vector<1x128xf32>
    %125 = vector.broadcast %124 : vector<1x128xf32> to vector<8x128xf32>
    %126 = arith.addf %122, %125 : vector<8x128xf32>
    %cst_132 = arith.constant 0.000000e+00 : f32
    %127 = vector.broadcast %cst_132 : f32 to vector<8x128xf32>
    %128 = arith.maximumf %126, %127 : vector<8x128xf32>
    %c1_133 = arith.constant 1 : index
    %c0_134 = arith.constant 0 : index
    %129 = tpu.strided_load %arg16[%c1_133, %c0_134] {strides = array<i32: 2, 1>} : memref<18x128xf32, #tpu.memory_space<vmem>>, vector<8x128xf32>
    tpu.strided_store %arg16[%c1_133, %c0_134], %119 {strides = array<i32: 2, 1>} : memref<18x128xf32, #tpu.memory_space<vmem>>, vector<8x128xf32>
    %c2_135 = arith.constant 2 : index
    %c0_136 = arith.constant 0 : index
    %130 = tpu.strided_load %arg16[%c2_135, %c0_136] {strides = array<i32: 2, 1>} : memref<18x128xf32, #tpu.memory_space<vmem>>, vector<8x128xf32>
    tpu.strided_store %arg16[%c2_135, %c0_136], %128 {strides = array<i32: 2, 1>} : memref<18x128xf32, #tpu.memory_space<vmem>>, vector<8x128xf32>
    %c0_137 = arith.constant 0 : index
    %c0_138 = arith.constant 0 : index
    %131 = vector.load %arg12[%c0_137, %c0_138] : memref<18x128xf32, #tpu.memory_space<vmem>>, vector<16x128xf32>
    %c1_139 = arith.constant 1 : index
    %c0_140 = arith.constant 0 : index
    %132 = vector.load %arg12[%c1_139, %c0_140] : memref<18x128xf32, #tpu.memory_space<vmem>>, vector<16x128xf32>
    %c2_141 = arith.constant 2 : index
    %c0_142 = arith.constant 0 : index
    %133 = vector.load %arg12[%c2_141, %c0_142] : memref<18x128xf32, #tpu.memory_space<vmem>>, vector<16x128xf32>
    %134 = tpu.concatenate %131, %132, %133 in 1 : vector<16x128xf32>, vector<16x128xf32>, vector<16x128xf32> -> vector<16x384xf32>
    %135 = arith.truncf %134 : vector<16x384xf32> to vector<16x384xbf16>
    %c7 = arith.constant 7 : index
    %c0_143 = arith.constant 0 : index
    %c0_144 = arith.constant 0 : index
    %136 = vector.load %arg2[%c7, %c0_143, %c0_144] : memref<13x384x128xbf16, #tpu.memory_space<vmem>>, vector<1x384x128xbf16>
    %137 = vector.shape_cast %136 : vector<1x384x128xbf16> to vector<384x128xbf16>
    %cst_145 = arith.constant dense<0.000000e+00> : vector<16x128xf32>
    %138 = tpu.matmul %135, %137, %cst_145 {dimension_numbers = #tpu.dot_dimension_numbers<[1], [0], [0], [1], [0, 0, 1, 1], [], []>} : vector<16x384xbf16>, vector<384x128xbf16>, vector<16x128xf32> -> vector<16x128xf32>
    %c7_146 = arith.constant 7 : index
    %c0_147 = arith.constant 0 : index
    %c0_148 = arith.constant 0 : index
    %139 = vector.load %arg3[%c7_146, %c0_147, %c0_148] : memref<13x1x128xf32, #tpu.memory_space<vmem>>, vector<1x1x128xf32>
    %140 = vector.shape_cast %139 : vector<1x1x128xf32> to vector<1x128xf32>
    %141 = vector.broadcast %140 : vector<1x128xf32> to vector<16x128xf32>
    %142 = arith.addf %138, %141 : vector<16x128xf32>
    %cst_149 = arith.constant 0.000000e+00 : f32
    %143 = vector.broadcast %cst_149 : f32 to vector<16x128xf32>
    %144 = arith.maximumf %142, %143 : vector<16x128xf32>
    %c1_150 = arith.constant 1 : index
    %c0_151 = arith.constant 0 : index
    %145 = vector.load %arg16[%c1_150, %c0_151] : memref<18x128xf32, #tpu.memory_space<vmem>>, vector<16x128xf32>
    %146 = arith.addf %145, %144 : vector<16x128xf32>
    %c1_152 = arith.constant 1 : index
    %c0_153 = arith.constant 0 : index
    %147 = vector.load %arg16[%c1_152, %c0_153] : memref<18x128xf32, #tpu.memory_space<vmem>>, vector<16x128xf32>
    tpu.vector_store %arg16[%c1_152, %c0_153], %146 {strides = array<i32>} : memref<18x128xf32, #tpu.memory_space<vmem>>, vector<16x128xf32>,
    %c0_154 = arith.constant 0 : index
    %c0_155 = arith.constant 0 : index
    %148 = vector.load %arg16[%c0_154, %c0_155] : memref<18x128xf32, #tpu.memory_space<vmem>>, vector<16x128xf32>
    %c1_156 = arith.constant 1 : index
    %c0_157 = arith.constant 0 : index
    %149 = vector.load %arg16[%c1_156, %c0_157] : memref<18x128xf32, #tpu.memory_space<vmem>>, vector<16x128xf32>
    %c2_158 = arith.constant 2 : index
    %c0_159 = arith.constant 0 : index
    %150 = vector.load %arg16[%c2_158, %c0_159] : memref<18x128xf32, #tpu.memory_space<vmem>>, vector<16x128xf32>
    %151 = tpu.concatenate %148, %149, %150 in 1 : vector<16x128xf32>, vector<16x128xf32>, vector<16x128xf32> -> vector<16x384xf32>
    %152 = arith.truncf %151 : vector<16x384xf32> to vector<16x384xbf16>
    %c5 = arith.constant 5 : index
    %c0_160 = arith.constant 0 : index
    %c0_161 = arith.constant 0 : index
    %153 = vector.load %arg2[%c5, %c0_160, %c0_161] : memref<13x384x128xbf16, #tpu.memory_space<vmem>>, vector<1x384x128xbf16>
    %154 = vector.shape_cast %153 : vector<1x384x128xbf16> to vector<384x128xbf16>
    %cst_162 = arith.constant dense<0.000000e+00> : vector<16x128xf32>
    %155 = tpu.matmul %152, %154, %cst_162 {dimension_numbers = #tpu.dot_dimension_numbers<[1], [0], [0], [1], [0, 0, 1, 1], [], []>} : vector<16x384xbf16>, vector<384x128xbf16>, vector<16x128xf32> -> vector<16x128xf32>
    %c5_163 = arith.constant 5 : index
    %c0_164 = arith.constant 0 : index
    %c0_165 = arith.constant 0 : index
    %156 = vector.load %arg3[%c5_163, %c0_164, %c0_165] : memref<13x1x128xf32, #tpu.memory_space<vmem>>, vector<1x1x128xf32>
    %157 = vector.shape_cast %156 : vector<1x1x128xf32> to vector<1x128xf32>
    %158 = vector.broadcast %157 : vector<1x128xf32> to vector<16x128xf32>
    %159 = arith.addf %155, %158 : vector<16x128xf32>
    %cst_166 = arith.constant 0.000000e+00 : f32
    %160 = vector.broadcast %cst_166 : f32 to vector<16x128xf32>
    %161 = arith.maximumf %159, %160 : vector<16x128xf32>
    %c0_167 = arith.constant 0 : index
    %c0_168 = arith.constant 0 : index
    %c0_169 = arith.constant 0 : index
    %162 = vector.load %arg8[%c0_167, %c0_168, %c0_169] : memref<1x16x128xf32, #tpu.memory_space<vmem>>, vector<1x16x128xf32>
    %163 = vector.shape_cast %162 : vector<1x16x128xf32> to vector<16x128xf32>
    %164 = vector.shape_cast %161 : vector<16x128xf32> to vector<1x16x128xf32>
    tpu.vector_store %arg8[%c0_167, %c0_168, %c0_169], %164 {strides = array<i32>} : memref<1x16x128xf32, #tpu.memory_space<vmem>>, vector<1x16x128xf32>,
    %c1_170 = arith.constant 1 : index
    %c0_171 = arith.constant 0 : index
    %165 = vector.load %arg15[%c1_170, %c0_171] : memref<18x128xf32, #tpu.memory_space<vmem>>, vector<16x128xf32>
    tpu.vector_store %arg15[%c1_170, %c0_171], %161 {strides = array<i32>} : memref<18x128xf32, #tpu.memory_space<vmem>>, vector<16x128xf32>,
    %c0_172 = arith.constant 0 : index
    %c0_173 = arith.constant 0 : index
    %166 = vector.load %arg15[%c0_172, %c0_173] : memref<18x128xf32, #tpu.memory_space<vmem>>, vector<16x128xf32>
    %c1_174 = arith.constant 1 : index
    %c0_175 = arith.constant 0 : index
    %167 = vector.load %arg15[%c1_174, %c0_175] : memref<18x128xf32, #tpu.memory_space<vmem>>, vector<16x128xf32>
    %c2_176 = arith.constant 2 : index
    %c0_177 = arith.constant 0 : index
    %168 = vector.load %arg15[%c2_176, %c0_177] : memref<18x128xf32, #tpu.memory_space<vmem>>, vector<16x128xf32>
    %169 = tpu.concatenate %166, %167, %168 in 1 : vector<16x128xf32>, vector<16x128xf32>, vector<16x128xf32> -> vector<16x384xf32>
    %170 = arith.truncf %169 : vector<16x384xf32> to vector<16x384xbf16>
    %c11 = arith.constant 11 : index
    %c0_178 = arith.constant 0 : index
    %c0_179 = arith.constant 0 : index
    %171 = vector.load %arg2[%c11, %c0_178, %c0_179] : memref<13x384x128xbf16, #tpu.memory_space<vmem>>, vector<1x384x128xbf16>
    %172 = vector.shape_cast %171 : vector<1x384x128xbf16> to vector<384x128xbf16>
    %cst_180 = arith.constant dense<0.000000e+00> : vector<16x128xf32>
    %173 = tpu.matmul %170, %172, %cst_180 {dimension_numbers = #tpu.dot_dimension_numbers<[1], [0], [0], [1], [0, 0, 1, 1], [], []>} : vector<16x384xbf16>, vector<384x128xbf16>, vector<16x128xf32> -> vector<16x128xf32>
    %c11_181 = arith.constant 11 : index
    %c0_182 = arith.constant 0 : index
    %c0_183 = arith.constant 0 : index
    %174 = vector.load %arg3[%c11_181, %c0_182, %c0_183] : memref<13x1x128xf32, #tpu.memory_space<vmem>>, vector<1x1x128xf32>
    %175 = vector.shape_cast %174 : vector<1x1x128xf32> to vector<1x128xf32>
    %176 = vector.broadcast %175 : vector<1x128xf32> to vector<16x128xf32>
    %177 = arith.addf %173, %176 : vector<16x128xf32>
    %cst_184 = arith.constant 0.000000e+00 : f32
    %178 = vector.broadcast %cst_184 : f32 to vector<16x128xf32>
    %179 = arith.maximumf %177, %178 : vector<16x128xf32>
    %c12 = arith.constant 12 : index
    %c0_185 = arith.constant 0 : index
    %c0_186 = arith.constant 0 : index
    %180 = vector.load %arg2[%c12, %c0_185, %c0_186] : memref<13x384x128xbf16, #tpu.memory_space<vmem>>, vector<1x384x128xbf16>
    %181 = vector.shape_cast %180 : vector<1x384x128xbf16> to vector<384x128xbf16>
    %cst_187 = arith.constant dense<0.000000e+00> : vector<16x128xf32>
    %182 = tpu.matmul %170, %181, %cst_187 {dimension_numbers = #tpu.dot_dimension_numbers<[1], [0], [0], [1], [0, 0, 1, 1], [], []>} : vector<16x384xbf16>, vector<384x128xbf16>, vector<16x128xf32> -> vector<16x128xf32>
    %c12_188 = arith.constant 12 : index
    %c0_189 = arith.constant 0 : index
    %c0_190 = arith.constant 0 : index
    %183 = vector.load %arg3[%c12_188, %c0_189, %c0_190] : memref<13x1x128xf32, #tpu.memory_space<vmem>>, vector<1x1x128xf32>
    %184 = vector.shape_cast %183 : vector<1x1x128xf32> to vector<1x128xf32>
    %185 = vector.broadcast %184 : vector<1x128xf32> to vector<16x128xf32>
    %186 = arith.addf %182, %185 : vector<16x128xf32>
    %cst_191 = arith.constant 0.000000e+00 : f32
    %187 = vector.broadcast %cst_191 : f32 to vector<16x128xf32>
    %188 = arith.maximumf %186, %187 : vector<16x128xf32>
    %c1_192 = arith.constant 1 : index
    %c0_193 = arith.constant 0 : index
    %189 = tpu.strided_load %arg17[%c1_192, %c0_193] {strides = array<i32: 2, 1>} : memref<34x128xf32, #tpu.memory_space<vmem>>, vector<16x128xf32>
    tpu.strided_store %arg17[%c1_192, %c0_193], %179 {strides = array<i32: 2, 1>} : memref<34x128xf32, #tpu.memory_space<vmem>>, vector<16x128xf32>
    %c2_194 = arith.constant 2 : index
    %c0_195 = arith.constant 0 : index
    %190 = tpu.strided_load %arg17[%c2_194, %c0_195] {strides = array<i32: 2, 1>} : memref<34x128xf32, #tpu.memory_space<vmem>>, vector<16x128xf32>
    tpu.strided_store %arg17[%c2_194, %c0_195], %188 {strides = array<i32: 2, 1>} : memref<34x128xf32, #tpu.memory_space<vmem>>, vector<16x128xf32>
    %c0_196 = arith.constant 0 : index
    %c0_197 = arith.constant 0 : index
    %191 = vector.load %arg11[%c0_196, %c0_197] : memref<34x128xf32, #tpu.memory_space<vmem>>, vector<32x128xf32>
    %c1_198 = arith.constant 1 : index
    %c0_199 = arith.constant 0 : index
    %192 = vector.load %arg11[%c1_198, %c0_199] : memref<34x128xf32, #tpu.memory_space<vmem>>, vector<32x128xf32>
    %c2_200 = arith.constant 2 : index
    %c0_201 = arith.constant 0 : index
    %193 = vector.load %arg11[%c2_200, %c0_201] : memref<34x128xf32, #tpu.memory_space<vmem>>, vector<32x128xf32>
    %194 = tpu.concatenate %191, %192, %193 in 1 : vector<32x128xf32>, vector<32x128xf32>, vector<32x128xf32> -> vector<32x384xf32>
    %195 = arith.truncf %194 : vector<32x384xf32> to vector<32x384xbf16>
    %c8 = arith.constant 8 : index
    %c0_202 = arith.constant 0 : index
    %c0_203 = arith.constant 0 : index
    %196 = vector.load %arg2[%c8, %c0_202, %c0_203] : memref<13x384x128xbf16, #tpu.memory_space<vmem>>, vector<1x384x128xbf16>
    %197 = vector.shape_cast %196 : vector<1x384x128xbf16> to vector<384x128xbf16>
    %cst_204 = arith.constant dense<0.000000e+00> : vector<32x128xf32>
    %198 = tpu.matmul %195, %197, %cst_204 {dimension_numbers = #tpu.dot_dimension_numbers<[1], [0], [0], [1], [0, 0, 1, 1], [], []>} : vector<32x384xbf16>, vector<384x128xbf16>, vector<32x128xf32> -> vector<32x128xf32>
    %c8_205 = arith.constant 8 : index
    %c0_206 = arith.constant 0 : index
    %c0_207 = arith.constant 0 : index
    %199 = vector.load %arg3[%c8_205, %c0_206, %c0_207] : memref<13x1x128xf32, #tpu.memory_space<vmem>>, vector<1x1x128xf32>
    %200 = vector.shape_cast %199 : vector<1x1x128xf32> to vector<1x128xf32>
    %201 = vector.broadcast %200 : vector<1x128xf32> to vector<32x128xf32>
    %202 = arith.addf %198, %201 : vector<32x128xf32>
    %cst_208 = arith.constant 0.000000e+00 : f32
    %203 = vector.broadcast %cst_208 : f32 to vector<32x128xf32>
    %204 = arith.maximumf %202, %203 : vector<32x128xf32>
    %c1_209 = arith.constant 1 : index
    %c0_210 = arith.constant 0 : index
    %205 = vector.load %arg17[%c1_209, %c0_210] : memref<34x128xf32, #tpu.memory_space<vmem>>, vector<32x128xf32>
    %206 = arith.addf %205, %204 : vector<32x128xf32>
    %c1_211 = arith.constant 1 : index
    %c0_212 = arith.constant 0 : index
    %207 = vector.load %arg17[%c1_211, %c0_212] : memref<34x128xf32, #tpu.memory_space<vmem>>, vector<32x128xf32>
    tpu.vector_store %arg17[%c1_211, %c0_212], %206 {strides = array<i32>} : memref<34x128xf32, #tpu.memory_space<vmem>>, vector<32x128xf32>,
    %c0_213 = arith.constant 0 : index
    %c0_214 = arith.constant 0 : index
    %208 = vector.load %arg17[%c0_213, %c0_214] : memref<34x128xf32, #tpu.memory_space<vmem>>, vector<32x128xf32>
    %c1_215 = arith.constant 1 : index
    %c0_216 = arith.constant 0 : index
    %209 = vector.load %arg17[%c1_215, %c0_216] : memref<34x128xf32, #tpu.memory_space<vmem>>, vector<32x128xf32>
    %c2_217 = arith.constant 2 : index
    %c0_218 = arith.constant 0 : index
    %210 = vector.load %arg17[%c2_217, %c0_218] : memref<34x128xf32, #tpu.memory_space<vmem>>, vector<32x128xf32>
    %211 = tpu.concatenate %208, %209, %210 in 1 : vector<32x128xf32>, vector<32x128xf32>, vector<32x128xf32> -> vector<32x384xf32>
    %212 = arith.truncf %211 : vector<32x384xf32> to vector<32x384xbf16>
    %c6 = arith.constant 6 : index
    %c0_219 = arith.constant 0 : index
    %c0_220 = arith.constant 0 : index
    %213 = vector.load %arg2[%c6, %c0_219, %c0_220] : memref<13x384x128xbf16, #tpu.memory_space<vmem>>, vector<1x384x128xbf16>
    %214 = vector.shape_cast %213 : vector<1x384x128xbf16> to vector<384x128xbf16>
    %cst_221 = arith.constant dense<0.000000e+00> : vector<32x128xf32>
    %215 = tpu.matmul %212, %214, %cst_221 {dimension_numbers = #tpu.dot_dimension_numbers<[1], [0], [0], [1], [0, 0, 1, 1], [], []>} : vector<32x384xbf16>, vector<384x128xbf16>, vector<32x128xf32> -> vector<32x128xf32>
    %c6_222 = arith.constant 6 : index
    %c0_223 = arith.constant 0 : index
    %c0_224 = arith.constant 0 : index
    %216 = vector.load %arg3[%c6_222, %c0_223, %c0_224] : memref<13x1x128xf32, #tpu.memory_space<vmem>>, vector<1x1x128xf32>
    %217 = vector.shape_cast %216 : vector<1x1x128xf32> to vector<1x128xf32>
    %218 = vector.broadcast %217 : vector<1x128xf32> to vector<32x128xf32>
    %219 = arith.addf %215, %218 : vector<32x128xf32>
    %cst_225 = arith.constant 0.000000e+00 : f32
    %220 = vector.broadcast %cst_225 : f32 to vector<32x128xf32>
    %221 = arith.maximumf %219, %220 : vector<32x128xf32>
    %c0_226 = arith.constant 0 : index
    %c0_227 = arith.constant 0 : index
    %c0_228 = arith.constant 0 : index
    %222 = vector.load %arg9[%c0_226, %c0_227, %c0_228] : memref<1x32x128xf32, #tpu.memory_space<vmem>>, vector<1x32x128xf32>
    %223 = vector.shape_cast %222 : vector<1x32x128xf32> to vector<32x128xf32>
    %224 = vector.shape_cast %221 : vector<32x128xf32> to vector<1x32x128xf32>
    tpu.vector_store %arg9[%c0_226, %c0_227, %c0_228], %224 {strides = array<i32>} : memref<1x32x128xf32, #tpu.memory_space<vmem>>, vector<1x32x128xf32>,
    return
  }
  func.func @transform_0(%arg0: i32) -> (i32, i32, i32) {
    %c0_i32 = arith.constant 0 : i32
    %c0_i32_0 = arith.constant 0 : i32
    %c0_i32_1 = arith.constant 0 : i32
    return %arg0, %c0_i32, %c0_i32_0 : i32, i32, i32
  }
  func.func @transform_1(%arg0: i32) -> (i32, i32, i32) {
    %c0_i32 = arith.constant 0 : i32
    %c0_i32_0 = arith.constant 0 : i32
    %c0_i32_1 = arith.constant 0 : i32
    %c0_i32_2 = arith.constant 0 : i32
    return %c0_i32, %c0_i32_0, %c0_i32_1 : i32, i32, i32
  }
  func.func @transform_2(%arg0: i32) -> (i32, i32, i32) {
    %c0_i32 = arith.constant 0 : i32
    %c0_i32_0 = arith.constant 0 : i32
    %c0_i32_1 = arith.constant 0 : i32
    %c0_i32_2 = arith.constant 0 : i32
    return %c0_i32, %c0_i32_0, %c0_i32_1 : i32, i32, i32
  }
  func.func @transform_3(%arg0: i32) -> (i32, i32, i32) {
    %c0_i32 = arith.constant 0 : i32
    %c0_i32_0 = arith.constant 0 : i32
    %c0_i32_1 = arith.constant 0 : i32
    return %arg0, %c0_i32, %c0_i32_0 : i32, i32, i32
  }
  func.func @transform_4(%arg0: i32) -> (i32, i32, i32) {
    %c0_i32 = arith.constant 0 : i32
    %c0_i32_0 = arith.constant 0 : i32
    %c0_i32_1 = arith.constant 0 : i32
    return %arg0, %c0_i32, %c0_i32_0 : i32, i32, i32
  }
  func.func @transform_5(%arg0: i32) -> (i32, i32, i32) {
    %c0_i32 = arith.constant 0 : i32
    %c0_i32_0 = arith.constant 0 : i32
    %c0_i32_1 = arith.constant 0 : i32
    return %arg0, %c0_i32, %c0_i32_0 : i32, i32, i32
  }
  func.func @transform_6(%arg0: i32) -> (i32, i32, i32) {
    %c0_i32 = arith.constant 0 : i32
    %c0_i32_0 = arith.constant 0 : i32
    %c0_i32_1 = arith.constant 0 : i32
    return %arg0, %c0_i32, %c0_i32_0 : i32, i32, i32
  }
  func.func @transform_7(%arg0: i32) -> (i32, i32, i32) {
    %c0_i32 = arith.constant 0 : i32
    %c0_i32_0 = arith.constant 0 : i32
    %c0_i32_1 = arith.constant 0 : i32
    return %arg0, %c0_i32, %c0_i32_0 : i32, i32, i32
  }
  func.func @transform_8(%arg0: i32) -> (i32, i32, i32) {
    %c0_i32 = arith.constant 0 : i32
    %c0_i32_0 = arith.constant 0 : i32
    %c0_i32_1 = arith.constant 0 : i32
    return %arg0, %c0_i32, %c0_i32_0 : i32, i32, i32
  }
}

</mosaic_0001>

<llo_original>
// kernel: tpu_custom_call.1
$region0: #{tpu_custom_call.1}
  #allocation0 [shape = 'u32[]', space=smem, size = 0x4, offset = 0x4, fixed_abs, tag = 'smem constant byte address 0x4 - core index']
  #allocation1 [shape = 'u32[144,128]{1,0:T(1,128)}', space=vmem, size = 0x12000, scoped, tag = 'internal scratch']
  #allocation2 [shape = 'f32[34,128]{1,0:T(8,128)}', space=vmem, size = 0x5000, scoped, tag = 'scratch operand']
  #allocation3 [shape = 'f32[34,128]{1,0:T(8,128)}', space=vmem, size = 0x5000, scoped, tag = 'scratch operand']
  #allocation4 [shape = 'f32[18,128]{1,0:T(8,128)}', space=vmem, size = 0x3000, scoped, tag = 'scratch operand']
  #allocation5 [shape = 'f32[10,128]{1,0:T(8,128)}', space=vmem, size = 0x2000, scoped, tag = 'scratch operand']
  #allocation6 [shape = 'f32[10,128]{1,0:T(8,128)}', space=vmem, size = 0x2000, scoped, tag = 'scratch operand']
  #allocation7 [shape = 'f32[18,128]{1,0:T(8,128)}', space=vmem, size = 0x3000, scoped, tag = 'scratch operand']
  #allocation8 [shape = 'f32[18,128]{1,0:T(8,128)}', space=vmem, size = 0x3000, scoped, tag = 'scratch operand']
  #allocation9 [shape = 'f32[34,128]{1,0:T(8,128)}', space=vmem, size = 0x5000, scoped, tag = 'scratch operand']
  %s0 = inlined_call_operand.vmem [shape: f32[2,34,128], index: 0, kind: input, shape index: {}]
  %s1 = inlined_call_operand.hbm [shape: bf16[13,384,128], index: 1, kind: input, shape index: {}]
  %s2 = inlined_call_operand.hbm [shape: f32[13,1,128], index: 2, kind: input, shape index: {}]
  %s3 = inlined_call_operand.hbm [shape: f32[2,32,128], index: 3, kind: output, shape index: {0}]
  %s4 = inlined_call_operand.hbm [shape: f32[2,16,128], index: 4, kind: output, shape index: {1}]
  %s5 = inlined_call_operand.hbm [shape: f32[2,8,128], index: 5, kind: output, shape index: {2}]
  %s6 = inlined_call_operand.hbm [shape: f32[2,8,128], index: 6, kind: output, shape index: {3}]
  %s7 = inlined_call_operand.hbm [shape: f32[2,16,128], index: 7, kind: output, shape index: {4}]
  %s8 = inlined_call_operand.hbm [shape: f32[2,32,128], index: 8, kind: output, shape index: {5}]
  %9 = xla_tuple %s3, %s4, %s5, %s6, %s7, %s8
  %s10 = sld [smem:[#allocation0]]
  $region93: #{tpu_custom_call.1} parent=0
    _
  %s12 = ssub.s32 1, %s10
  %s13 = scalar_select 0, %s12, %s10
  $region1: #{tpu_custom_call.1} parent=0
    #allocation10 [shape = 'u8[1277952]{0}', space=vmem, size = 0x138000, scoped, tag = 'input window, operand 1, single buffered']
    #allocation11 [shape = 's32[2]{0}', space=sflag, size = 0x8, scoped, tag = 'scoped memory for tpu_custom_call.1']
    #allocation12 [shape = 's32[2]{0}', space=sflag, size = 0x8, scoped, tag = 'scoped memory for tpu_custom_call.1']
    #allocation13 [shape = 'u8[6656]{0}', space=vmem, size = 0x1c00, scoped, tag = 'input window, operand 2, single buffered']
    #allocation14 [shape = 's32[1]{0}', space=sflag, size = 0x4, scoped, tag = 'scoped memory for tpu_custom_call.1']
    #allocation15 [shape = 'u8[32768]{0}', space=vmem, size = 0x8000, scoped, tag = 'output window, operand 0']
    #allocation16 [shape = 'u8[16384]{0}', space=vmem, size = 0x4000, scoped, tag = 'output window, operand 1']
    #allocation17 [shape = 's32[2]{0}', space=sflag, size = 0x8, scoped, tag = 'scoped memory for tpu_custom_call.1']
    #allocation18 [shape = 'u8[8192]{0}', space=vmem, size = 0x2000, scoped, tag = 'output window, operand 2']
    #allocation19 [shape = 'u8[8192]{0}', space=vmem, size = 0x2000, scoped, tag = 'output window, operand 3']
    #allocation20 [shape = 's32[2]{0}', space=sflag, size = 0x8, scoped, tag = 'scoped memory for tpu_custom_call.1']
    #allocation21 [shape = 'u8[16384]{0}', space=vmem, size = 0x4000, scoped, tag = 'output window, operand 4']
    #allocation22 [shape = 'u8[32768]{0}', space=vmem, size = 0x8000, scoped, tag = 'output window, operand 5']
    #allocation23 [shape = 's32[2]{0}', space=sflag, size = 0x8, scoped, tag = 'scoped memory for tpu_custom_call.1']
    %14 = vsyncpa [#allocation11], 0
    %15 = vsyncpa [#allocation14], 0
    %16 = vsyncpa [#allocation12], 0
    %s17 = scalar_lea.sflag [#allocation12], 1
    %18 = vsyncpa %s17, 0
    %19 = vsyncpa [#allocation17], 0
    %s20 = scalar_lea.sflag [#allocation17], 1
    %21 = vsyncpa %s20, 0
    %22 = vsyncpa [#allocation20], 0
    %s23 = scalar_lea.sflag [#allocation20], 1
    %24 = vsyncpa %s23, 0
    %25 = vsyncpa [#allocation23], 0
    %s26 = scalar_lea.sflag [#allocation23], 1
    %27 = vsyncpa %s26, 0
    loop: start=0, step=1, limit=4
    $region2: #{tpu_custom_call.1} parent=1 // loop_pre_header
      _
    $region3: #{tpu_custom_call.1} parent=1 // loop_header
      %s29 = sphi 0, %s33
      %p30 = scmp.ge.s32.totalorder %s29, 4
      %s39 = sphi 0, %s41
      %s42 = sphi 0, %s39
      %s43 = sphi 0, %s42
      %s59 = sphi 0, %s43
      %s63 = sphi 0, %s63
      %s65 = sphi 0, %s63
      %s66 = sphi 0, %s65
      %s80 = sphi 0, %s66
      %s84 = sphi 0, %s84
      %s86 = sphi 0, %s84
      %s87 = sphi 0, %s86
      %s101 = sphi 0, %s87
      %s107 = sphi 0, %s109
      %s110 = sphi 0, %s107
      %s111 = sphi 0, %s110
      %s127 = sphi 0, %s111
      %s133 = sphi 0, %s135
      %s136 = sphi 0, %s133
      %s137 = sphi 0, %s136
      %s153 = sphi 0, %s137
      %s159 = sphi 0, %s161
      %s162 = sphi 0, %s159
      %s163 = sphi 0, %s162
      %s179 = sphi 0, %s163
      %s185 = sphi 0, %s187
      %s188 = sphi 0, %s185
      %s189 = sphi 0, %s188
      %s205 = sphi 0, %s189
      %s211 = sphi 0, %s213
      %s214 = sphi 0, %s211
      %s215 = sphi 0, %s214
      %s231 = sphi 0, %s215
      %s237 = sphi 0, %s239
      %s240 = sphi 0, %s237
      %s241 = sphi 0, %s240
      %s257 = sphi 0, %s241
    $region4: #{tpu_custom_call.1} parent=1 // loop_header_branch
      %32 = sbr.rel (%p30) target = $region8
    $region5: #{tpu_custom_call.1} parent=1 // loop_body
      %s34 = ssub.s32 %s29, 1
      %s35 = ssub.s32 %s29, 2
      %s36 = sadd.s32 %s29, 1
      %s37 = ssub.s32 %s29, %s36
      %p38 = scmp.eq.s32.totalorder %s37, 0
      %s40 = sadd.s32 %s39, 1
      %s41 = scalar_select %p38, %s39, %s40
      %p44 = pneg %p38
      %p45 = scmp.eq.s32.totalorder %s29, 1
      %p46 = por %p44, %p45
      %p47 = scmp.ne.s32.totalorder %s39, %s42
      %p48 = scmp.eq.s32.totalorder %s29, 0
      %p49 = por %p47, %p48
      %p50 = scmp.ne.s32.totalorder %s39, %s42
      %p51 = scmp.eq.s32.totalorder %s34, 1
      %p52 = por %p50, %p51
      %p53 = scmp.ne.s32.totalorder %s42, %s43
      %p54 = scmp.eq.s32.totalorder %s34, 0
      %p55 = por %p53, %p54
      %p56 = scmp.ne.s32.totalorder %s42, %s43
      %p57 = scmp.eq.s32.totalorder %s35, 1
      %p58 = por %p56, %p57
      %p60 = scmp.ne.s32.totalorder %s43, %s59
      %p61 = scmp.eq.s32.totalorder %s35, 0
      %p62 = por %p60, %p61
      %s64 = sadd.s32 %s63, 1
      %p67 = scmp.eq.s32.totalorder %s29, 1
      %p68 = scmp.ne.s32.totalorder %s63, %s65
      %p69 = scmp.eq.s32.totalorder %s29, 0
      %p70 = por %p68, %p69
      %p71 = scmp.ne.s32.totalorder %s63, %s65
      %p72 = scmp.eq.s32.totalorder %s34, 1
      %p73 = por %p71, %p72
      %p74 = scmp.ne.s32.totalorder %s65, %s66
      %p75 = scmp.eq.s32.totalorder %s34, 0
      %p76 = por %p74, %p75
      %p77 = scmp.ne.s32.totalorder %s65, %s66
      %p78 = scmp.eq.s32.totalorder %s35, 1
      %p79 = por %p77, %p78
      %p81 = scmp.ne.s32.totalorder %s66, %s80
      %p82 = scmp.eq.s32.totalorder %s35, 0
      %p83 = por %p81, %p82
      %s85 = sadd.s32 %s84, 1
      %p88 = scmp.eq.s32.totalorder %s29, 1
      %p89 = scmp.ne.s32.totalorder %s84, %s86
      %p90 = scmp.eq.s32.totalorder %s29, 0
      %p91 = por %p89, %p90
      %p92 = scmp.ne.s32.totalorder %s84, %s86
      %p93 = scmp.eq.s32.totalorder %s34, 1
      %p94 = por %p92, %p93
      %p95 = scmp.ne.s32.totalorder %s86, %s87
      %p96 = scmp.eq.s32.totalorder %s34, 0
      %p97 = por %p95, %p96
      %p98 = scmp.ne.s32.totalorder %s86, %s87
      %p99 = scmp.eq.s32.totalorder %s35, 1
      %p100 = por %p98, %p99
      %p102 = scmp.ne.s32.totalorder %s87, %s101
      %p103 = scmp.eq.s32.totalorder %s35, 0
      %p104 = por %p102, %p103
      %s105 = ssub.s32 %s29, %s36
      %p106 = scmp.eq.s32.totalorder %s105, 0
      %s108 = sadd.s32 %s107, 1
      %s109 = scalar_select %p106, %s107, %s108
      %p112 = pneg %p106
      %p113 = scmp.eq.s32.totalorder %s29, 1
      %p114 = por %p112, %p113
      %p115 = scmp.ne.s32.totalorder %s107, %s110
      %p116 = scmp.eq.s32.totalorder %s29, 0
      %p117 = por %p115, %p116
      %p118 = scmp.ne.s32.totalorder %s107, %s110
      %p119 = scmp.eq.s32.totalorder %s34, 1
      %p120 = por %p118, %p119
      %p121 = scmp.ne.s32.totalorder %s110, %s111
      %p122 = scmp.eq.s32.totalorder %s34, 0
      %p123 = por %p121, %p122
      %p124 = scmp.ne.s32.totalorder %s110, %s111
      %p125 = scmp.eq.s32.totalorder %s35, 1
      %p126 = por %p124, %p125
      %p128 = scmp.ne.s32.totalorder %s111, %s127
      %p129 = scmp.eq.s32.totalorder %s35, 0
      %p130 = por %p128, %p129
      %s131 = ssub.s32 %s29, %s36
      %p132 = scmp.eq.s32.totalorder %s131, 0
      %s134 = sadd.s32 %s133, 1
      %s135 = scalar_select %p132, %s133, %s134
      %p138 = pneg %p132
      %p139 = scmp.eq.s32.totalorder %s29, 1
      %p140 = por %p138, %p139
      %p141 = scmp.ne.s32.totalorder %s133, %s136
      %p142 = scmp.eq.s32.totalorder %s29, 0
      %p143 = por %p141, %p142
      %p144 = scmp.ne.s32.totalorder %s133, %s136
      %p145 = scmp.eq.s32.totalorder %s34, 1
      %p146 = por %p144, %p145
      %p147 = scmp.ne.s32.totalorder %s136, %s137
      %p148 = scmp.eq.s32.totalorder %s34, 0
      %p149 = por %p147, %p148
      %p150 = scmp.ne.s32.totalorder %s136, %s137
      %p151 = scmp.eq.s32.totalorder %s35, 1
      %p152 = por %p150, %p151
      %p154 = scmp.ne.s32.totalorder %s137, %s153
      %p155 = scmp.eq.s32.totalorder %s35, 0
      %p156 = por %p154, %p155
      %s157 = ssub.s32 %s29, %s36
      %p158 = scmp.eq.s32.totalorder %s157, 0
      %s160 = sadd.s32 %s159, 1
      %s161 = scalar_select %p158, %s159, %s160
      %p164 = pneg %p158
      %p165 = scmp.eq.s32.totalorder %s29, 1
      %p166 = por %p164, %p165
      %p167 = scmp.ne.s32.totalorder %s159, %s162
      %p168 = scmp.eq.s32.totalorder %s29, 0
      %p169 = por %p167, %p168
      %p170 = scmp.ne.s32.totalorder %s159, %s162
      %p171 = scmp.eq.s32.totalorder %s34, 1
      %p172 = por %p170, %p171
      %p173 = scmp.ne.s32.totalorder %s162, %s163
      %p174 = scmp.eq.s32.totalorder %s34, 0
      %p175 = por %p173, %p174
      %p176 = scmp.ne.s32.totalorder %s162, %s163
      %p177 = scmp.eq.s32.totalorder %s35, 1
      %p178 = por %p176, %p177
      %p180 = scmp.ne.s32.totalorder %s163, %s179
      %p181 = scmp.eq.s32.totalorder %s35, 0
      %p182 = por %p180, %p181
      %s183 = ssub.s32 %s29, %s36
      %p184 = scmp.eq.s32.totalorder %s183, 0
      %s186 = sadd.s32 %s185, 1
      %s187 = scalar_select %p184, %s185, %s186
      %p190 = pneg %p184
      %p191 = scmp.eq.s32.totalorder %s29, 1
      %p192 = por %p190, %p191
      %p193 = scmp.ne.s32.totalorder %s185, %s188
      %p194 = scmp.eq.s32.totalorder %s29, 0
      %p195 = por %p193, %p194
      %p196 = scmp.ne.s32.totalorder %s185, %s188
      %p197 = scmp.eq.s32.totalorder %s34, 1
      %p198 = por %p196, %p197
      %p199 = scmp.ne.s32.totalorder %s188, %s189
      %p200 = scmp.eq.s32.totalorder %s34, 0
      %p201 = por %p199, %p200
      %p202 = scmp.ne.s32.totalorder %s188, %s189
      %p203 = scmp.eq.s32.totalorder %s35, 1
      %p204 = por %p202, %p203
      %p206 = scmp.ne.s32.totalorder %s189, %s205
      %p207 = scmp.eq.s32.totalorder %s35, 0
      %p208 = por %p206, %p207
      %s209 = ssub.s32 %s29, %s36
      %p210 = scmp.eq.s32.totalorder %s209, 0
      %s212 = sadd.s32 %s211, 1
      %s213 = scalar_select %p210, %s211, %s212
      %p216 = pneg %p210
      %p217 = scmp.eq.s32.totalorder %s29, 1
      %p218 = por %p216, %p217
      %p219 = scmp.ne.s32.totalorder %s211, %s214
      %p220 = scmp.eq.s32.totalorder %s29, 0
      %p221 = por %p219, %p220
      %p222 = scmp.ne.s32.totalorder %s211, %s214
      %p223 = scmp.eq.s32.totalorder %s34, 1
      %p224 = por %p222, %p223
      %p225 = scmp.ne.s32.totalorder %s214, %s215
      %p226 = scmp.eq.s32.totalorder %s34, 0
      %p227 = por %p225, %p226
      %p228 = scmp.ne.s32.totalorder %s214, %s215
      %p229 = scmp.eq.s32.totalorder %s35, 1
      %p230 = por %p228, %p229
      %p232 = scmp.ne.s32.totalorder %s215, %s231
      %p233 = scmp.eq.s32.totalorder %s35, 0
      %p234 = por %p232, %p233
      %s235 = ssub.s32 %s29, %s36
      %p236 = scmp.eq.s32.totalorder %s235, 0
      %s238 = sadd.s32 %s237, 1
      %s239 = scalar_select %p236, %s237, %s238
      %p242 = pneg %p236
      %p243 = scmp.eq.s32.totalorder %s29, 1
      %p244 = por %p242, %p243
      %p245 = scmp.ne.s32.totalorder %s237, %s240
      %p246 = scmp.eq.s32.totalorder %s29, 0
      %p247 = por %p245, %p246
      %p248 = scmp.ne.s32.totalorder %s237, %s240
      %p249 = scmp.eq.s32.totalorder %s34, 1
      %p250 = por %p248, %p249
      %p251 = scmp.ne.s32.totalorder %s240, %s241
      %p252 = scmp.eq.s32.totalorder %s34, 0
      %p253 = por %p251, %p252
      %p254 = scmp.ne.s32.totalorder %s240, %s241
      %p255 = scmp.eq.s32.totalorder %s35, 1
      %p256 = por %p254, %p255
      %p258 = scmp.ne.s32.totalorder %s241, %s257
      %p259 = scmp.eq.s32.totalorder %s35, 0
      %p260 = por %p258, %p259
      %p261 = scmp.le.s32.totalorder 1, %s29
      %p262 = scmp.lt.s32.totalorder %s29, 3
      %p263 = pnand %p261, %p262
      %p264 = pneg %p263
      // Predicated region
      $region9: #{tpu_custom_call.1} parent=5 // pred_check
        _
      $region10: #{tpu_custom_call.1} parent=5 // pred_check_branch
        %266 = sbr.rel (%p263) target = $region12
      $region11: #{tpu_custom_call.1} parent=5 // pred_region
        %s267 = ssub.s32 %s29, 1
        // Predicated region
        $region13: #{tpu_custom_call.1} parent=11 // pred_check
          %p268 = pneg %p76
        $region14: #{tpu_custom_call.1} parent=11 // pred_check_branch
          %270 = sbr.rel (%p268) target = $region16
        $region15: #{tpu_custom_call.1} parent=11 // pred_region
          %s272 = ssub.s32 39936, 39936
          %273 = vsyncadd [#allocation11], %s272
          %s274 = sshll.u32 [#allocation10], 4
          %s275 = int_to_ptr.vmem [resolvable:$true] %s274
          %280 = dma.hbm_to_vmem [thread:$0]  %s1, 39936, %s275, [#allocation11], 64, 64, 4
        $region16: #{tpu_custom_call.1} parent=11 // pred_fallthru
          _
        // Predicated region
        $region17: #{tpu_custom_call.1} parent=11 // pred_check
          %p281 = pneg %p97
        $region18: #{tpu_custom_call.1} parent=11 // pred_check_branch
          %283 = sbr.rel (%p281) target = $region20
        $region19: #{tpu_custom_call.1} parent=11 // pred_region
          %s285 = ssub.s32 208, 208
          %286 = vsyncadd [#allocation14], %s285
          %s287 = sshll.u32 [#allocation13], 4
          %s288 = int_to_ptr.vmem [resolvable:$true] %s287
          %293 = dma.hbm_to_vmem [thread:$0]  %s2, 208, %s288, [#allocation14], 16, 16, 1
        $region20: #{tpu_custom_call.1} parent=11 // pred_fallthru
          _
      $region12: #{tpu_custom_call.1} parent=5 // pred_fallthru
        _
      %p294 = scmp.lt.s32.totalorder %s29, 2
      // Predicated region
      $region21: #{tpu_custom_call.1} parent=5 // pred_check
        %p295 = pneg %p294
      $region22: #{tpu_custom_call.1} parent=5 // pred_check_branch
        %297 = sbr.rel (%p295) target = $region24
      $region23: #{tpu_custom_call.1} parent=5 // pred_region
        // Predicated region
        $region25: #{tpu_custom_call.1} parent=23 // pred_check
          %p298 = pneg %p49
        $region26: #{tpu_custom_call.1} parent=23 // pred_check_branch
          %300 = sbr.rel (%p298) target = $region28
        $region27: #{tpu_custom_call.1} parent=23 // pred_region
          %p301 = scmp.lt.s32.totalorder %s29, 1
          %s302 = scalar_select %p301, %s29, 1
          %s303 = smul.addr %s302, 5
          %s304 = smul.addr %s303, 8
          %s305 = scalar_lea.vmem %s0, %s304
        $region28: #{tpu_custom_call.1} parent=23 // pred_fallthru
          _
      $region24: #{tpu_custom_call.1} parent=5 // pred_fallthru
        _
      %p306 = scmp.le.s32.totalorder 1, %s29
      %p307 = scmp.lt.s32.totalorder %s29, 3
      %p308 = pnand %p306, %p307
      %p309 = pneg %p308
      // Predicated region
      $region29: #{tpu_custom_call.1} parent=5 // pred_check
        _
      $region30: #{tpu_custom_call.1} parent=5 // pred_check_branch
        %311 = sbr.rel (%p308) target = $region32
      $region31: #{tpu_custom_call.1} parent=5 // pred_region
        %s312 = ssub.s32 %s29, 1
        // Predicated region
        $region33: #{tpu_custom_call.1} parent=31 // pred_check
          %p313 = pneg %p76
        $region34: #{tpu_custom_call.1} parent=31 // pred_check_branch
          %315 = sbr.rel (%p313) target = $region36
        $region35: #{tpu_custom_call.1} parent=31 // pred_region
          %316 = dma.done [#allocation11], 39936
        $region36: #{tpu_custom_call.1} parent=31 // pred_fallthru
          _
        // Predicated region
        $region37: #{tpu_custom_call.1} parent=31 // pred_check
          %p317 = pneg %p97
        $region38: #{tpu_custom_call.1} parent=31 // pred_check_branch
          %319 = sbr.rel (%p317) target = $region40
        $region39: #{tpu_custom_call.1} parent=31 // pred_region
          %320 = dma.done [#allocation14], 208
        $region40: #{tpu_custom_call.1} parent=31 // pred_fallthru
          _
        %p321 = scmp.lt.s32.totalorder %s34, 1
        %s322 = scalar_select %p321, %s34, 1
        %s323 = smul.addr %s322, 5
        %s324 = smul.addr %s323, 8
        %s325 = scalar_lea.vmem %s0, %s324
        %p326 = pneg %p55
        %p327 = pneg %p52
        %p328 = pneg %p76
        %p329 = pneg %p73
        %p330 = pneg %p97
        %p331 = pneg %p94
        %p332 = pneg %p123
        %p333 = pneg %p120
        %s334 = sand.u32 %s110, 1
        %s335 = scalar_lea.sflag [#allocation12], %s334
        %s336 = sand.u32 %s110, 1
        %s337 = smul.addr %s336, 32
        %s338 = scalar_lea.vmem [#allocation15], %s337
        %p339 = pneg %p149
        %p340 = pneg %p146
        %s341 = sand.u32 %s34, 1
        %s342 = scalar_lea.sflag [#allocation17], %s341
        %s343 = sand.u32 %s136, 1
        %s344 = smul.addr %s343, 16
        %s345 = scalar_lea.vmem [#allocation16], %s344
        %p346 = pneg %p175
        %p347 = pneg %p172
        %s348 = sand.u32 %s34, 1
        %s349 = scalar_lea.sflag [#allocation17], %s348
        %s350 = sand.u32 %s162, 1
        %s351 = smul.addr %s350, 8
        %s352 = scalar_lea.vmem [#allocation18], %s351
        %p353 = pneg %p201
        %p354 = pneg %p198
        %s355 = sand.u32 %s34, 1
        %s356 = scalar_lea.sflag [#allocation20], %s355
        %s357 = sand.u32 %s188, 1
        %s358 = smul.addr %s357, 8
        %s359 = scalar_lea.vmem [#allocation19], %s358
        %p360 = pneg %p227
        %p361 = pneg %p224
        %s362 = sand.u32 %s34, 1
        %s363 = scalar_lea.sflag [#allocation20], %s362
        %s364 = sand.u32 %s214, 1
        %s365 = smul.addr %s364, 16
        %s366 = scalar_lea.vmem [#allocation21], %s365
        %p367 = pneg %p253
        %p368 = pneg %p250
        %s369 = sand.u32 %s240, 1
        %s370 = scalar_lea.sflag [#allocation23], %s369
        %s371 = sand.u32 %s240, 1
        %s372 = smul.addr %s371, 32
        %s373 = scalar_lea.vmem [#allocation22], %s372
        %p374 = scmp.lt.s32.totalorder %s34, 1
        %s375 = scalar_select %p374, %s34, 1
        %s376 = smul.addr %s375, 5
        %s377 = smul.addr %s376, 8
        %s378 = scalar_lea.vmem %s0, %s377
        %380 = vst [vmem:[#allocation2] sm:$0xff] 0.0
        %381 = vst [vmem:[#allocation2 + $0x8] sm:$0xff] 0.0
        %382 = vst [vmem:[#allocation2 + $0x10] sm:$0xff] 0.0
        %383 = vst [vmem:[#allocation2 + $0x18] sm:$0xff] 0.0
        %384 = vst [vmem:[#allocation2 + $0x20] sm:$0x3] 0.0
        %385 = vst [vmem:[#allocation3] sm:$0xff] 0.0
        %386 = vst [vmem:[#allocation3 + $0x8] sm:$0xff] 0.0
        %387 = vst [vmem:[#allocation3 + $0x10] sm:$0xff] 0.0
        %388 = vst [vmem:[#allocation3 + $0x18] sm:$0xff] 0.0
        %389 = vst [vmem:[#allocation3 + $0x20] sm:$0x3] 0.0
        %390 = vst [vmem:[#allocation4] sm:$0xff] 0.0
        %391 = vst [vmem:[#allocation4 + $0x8] sm:$0xff] 0.0
        %392 = vst [vmem:[#allocation4 + $0x10] sm:$0x3] 0.0
        %393 = vst [vmem:[#allocation5] sm:$0xff] 0.0
        %394 = vst [vmem:[#allocation5 + $0x8] sm:$0x3] 0.0
        %395 = vst [vmem:[#allocation6] sm:$0xff] 0.0
        %396 = vst [vmem:[#allocation6 + $0x8] sm:$0x3] 0.0
        %397 = vst [vmem:[#allocation7] sm:$0xff] 0.0
        %398 = vst [vmem:[#allocation7 + $0x8] sm:$0xff] 0.0
        %399 = vst [vmem:[#allocation7 + $0x10] sm:$0x3] 0.0
        %400 = vst [vmem:[#allocation8] sm:$0xff] 0.0
        %401 = vst [vmem:[#allocation8 + $0x8] sm:$0xff] 0.0
        %402 = vst [vmem:[#allocation8 + $0x10] sm:$0x3] 0.0
        %403 = vst [vmem:[#allocation9] sm:$0xff] 0.0
        %404 = vst [vmem:[#allocation9 + $0x8] sm:$0xff] 0.0
        %405 = vst [vmem:[#allocation9 + $0x10] sm:$0xff] 0.0
        %406 = vst [vmem:[#allocation9 + $0x18] sm:$0xff] 0.0
        %407 = vst [vmem:[#allocation9 + $0x20] sm:$0x3] 0.0
        %v408 = vld [vmem:[%s378] sm:$0xff]
        %v409 = vld [vmem:[%s378 + $0x8] sm:$0xff]
        %v410 = vld [vmem:[%s378 + $0x10] sm:$0xff]
        %v411 = vld [vmem:[%s378 + $0x18] sm:$0xff]
        %v412 = vld [vmem:[%s378 + $0x1] sm:$0xff]
        %v413 = vld [vmem:[%s378 + $0x9] sm:$0xff]
        %v414 = vld [vmem:[%s378 + $0x11] sm:$0xff]
        %v415 = vld [vmem:[%s378 + $0x19] sm:$0xff]
        %v416 = vld [vmem:[%s378 + $0x2] sm:$0xff]
        %v417 = vld [vmem:[%s378 + $0xa] sm:$0xff]
        %v418 = vld [vmem:[%s378 + $0x12] sm:$0xff]
        %v419 = vld [vmem:[%s378 + $0x1a] sm:$0xff]
        %v420 = vpack.c.bf16 %v409, %v408
        %v421 = vpack.c.bf16 %v413, %v412
        %v422 = vpack.c.bf16 %v417, %v416
        %v423 = vpack.c.bf16 %v411, %v410
        %v424 = vpack.c.bf16 %v415, %v414
        %v425 = vpack.c.bf16 %v419, %v418
        %v426 = vld [vmem:[#allocation10] sm:$0xf]
        %v427 = vld [vmem:[#allocation10 + $0x4] sm:$0xf]
        %v428 = vld [vmem:[#allocation10 + $0x8] sm:$0xf]
        %v429 = vld [vmem:[#allocation10 + $0xc] sm:$0xf]
        %v430 = vld [vmem:[#allocation10 + $0x10] sm:$0xf]
        %v431 = vld [vmem:[#allocation10 + $0x14] sm:$0xf]
        %v432 = vld [vmem:[#allocation10 + $0x18] sm:$0xf]
        %v433 = vld [vmem:[#allocation10 + $0x1c] sm:$0xf]
        %v434 = vld [vmem:[#allocation10 + $0x20] sm:$0xf]
        %v435 = vld [vmem:[#allocation10 + $0x24] sm:$0xf]
        %v436 = vld [vmem:[#allocation10 + $0x28] sm:$0xf]
        %v437 = vld [vmem:[#allocation10 + $0x2c] sm:$0xf]
        %v438 = vld [vmem:[#allocation10 + $0x30] sm:$0xf]
        %v439 = vld [vmem:[#allocation10 + $0x34] sm:$0xf]
        %v440 = vld [vmem:[#allocation10 + $0x38] sm:$0xf]
        %v441 = vld [vmem:[#allocation10 + $0x3c] sm:$0xf]
        %v442 = vld [vmem:[#allocation10 + $0x40] sm:$0xf]
        %v443 = vld [vmem:[#allocation10 + $0x44] sm:$0xf]
        %v444 = vld [vmem:[#allocation10 + $0x48] sm:$0xf]
        %v445 = vld [vmem:[#allocation10 + $0x4c] sm:$0xf]
        %v446 = vld [vmem:[#allocation10 + $0x50] sm:$0xf]
        %v447 = vld [vmem:[#allocation10 + $0x54] sm:$0xf]
        %v448 = vld [vmem:[#allocation10 + $0x58] sm:$0xf]
        %v449 = vld [vmem:[#allocation10 + $0x5c] sm:$0xf]
        %v450 = vld [vmem:[#allocation10 + $0x60] sm:$0xf]
        %v451 = vld [vmem:[#allocation10 + $0x64] sm:$0xf]
        %v452 = vld [vmem:[#allocation10 + $0x68] sm:$0xf]
        %v453 = vld [vmem:[#allocation10 + $0x6c] sm:$0xf]
        %v454 = vld [vmem:[#allocation10 + $0x70] sm:$0xf]
        %v455 = vld [vmem:[#allocation10 + $0x74] sm:$0xf]
        %v456 = vld [vmem:[#allocation10 + $0x78] sm:$0xf]
        %v457 = vld [vmem:[#allocation10 + $0x7c] sm:$0xf]
        %v458 = vld [vmem:[#allocation10 + $0x80] sm:$0xf]
        %v459 = vld [vmem:[#allocation10 + $0x84] sm:$0xf]
        %v460 = vld [vmem:[#allocation10 + $0x88] sm:$0xf]
        %v461 = vld [vmem:[#allocation10 + $0x8c] sm:$0xf]
        %v462 = vld [vmem:[#allocation10 + $0x90] sm:$0xf]
        %v463 = vld [vmem:[#allocation10 + $0x94] sm:$0xf]
        %v464 = vld [vmem:[#allocation10 + $0x98] sm:$0xf]
        %v465 = vld [vmem:[#allocation10 + $0x9c] sm:$0xf]
        %v466 = vld [vmem:[#allocation10 + $0xa0] sm:$0xf]
        %v467 = vld [vmem:[#allocation10 + $0xa4] sm:$0xf]
        %v468 = vld [vmem:[#allocation10 + $0xa8] sm:$0xf]
        %v469 = vld [vmem:[#allocation10 + $0xac] sm:$0xf]
        %v470 = vld [vmem:[#allocation10 + $0xb0] sm:$0xf]
        %v471 = vld [vmem:[#allocation10 + $0xb4] sm:$0xf]
        %v472 = vld [vmem:[#allocation10 + $0xb8] sm:$0xf]
        %v473 = vld [vmem:[#allocation10 + $0xbc] sm:$0xf]
        %v474 = vld [vmem:[#allocation13] sm:$0x1]
        %v476 = vlaneseq
        %v477 = vshrl.u32 %v476, 7
        %v478 = vsub.s32 0, %v477
        %v479 = vrot.slane %v474, %v478
        %v529 = vunpack.c.l.b16 %v426
        %v530 = vunpack.c.l.b16 %v427
        %v531 = vunpack.c.l.b16 %v428
        %v532 = vunpack.c.l.b16 %v429
        %v533 = vunpack.c.l.b16 %v430
        %v534 = vunpack.c.l.b16 %v431
        %v535 = vunpack.c.l.b16 %v432
        %v536 = vunpack.c.l.b16 %v433
        %v537 = vunpack.c.l.b16 %v434
        %v538 = vunpack.c.l.b16 %v435
        %v539 = vunpack.c.l.b16 %v436
        %v540 = vunpack.c.l.b16 %v437
        %v541 = vunpack.c.l.b16 %v438
        %v542 = vunpack.c.l.b16 %v439
        %v543 = vunpack.c.l.b16 %v440
        %v544 = vunpack.c.l.b16 %v441
        %v545 = vunpack.c.l.b16 %v442
        %v546 = vunpack.c.l.b16 %v443
        %v547 = vunpack.c.l.b16 %v444
        %v548 = vunpack.c.l.b16 %v445
        %v549 = vunpack.c.l.b16 %v446
        %v550 = vunpack.c.l.b16 %v447
        %v551 = vunpack.c.l.b16 %v448
        %v552 = vunpack.c.l.b16 %v449
        %v553 = vunpack.c.l.b16 %v450
        %v554 = vunpack.c.l.b16 %v451
        %v555 = vunpack.c.l.b16 %v452
        %v556 = vunpack.c.l.b16 %v453
        %v557 = vunpack.c.l.b16 %v454
        %v558 = vunpack.c.l.b16 %v455
        %v559 = vunpack.c.l.b16 %v456
        %v560 = vunpack.c.l.b16 %v457
        %v561 = vunpack.c.l.b16 %v458
        %v562 = vunpack.c.l.b16 %v459
        %v563 = vunpack.c.l.b16 %v460
        %v564 = vunpack.c.l.b16 %v461
        %v565 = vunpack.c.l.b16 %v462
        %v566 = vunpack.c.l.b16 %v463
        %v567 = vunpack.c.l.b16 %v464
        %v568 = vunpack.c.l.b16 %v465
        %v569 = vunpack.c.l.b16 %v466
        %v570 = vunpack.c.l.b16 %v467
        %v571 = vunpack.c.l.b16 %v468
        %v572 = vunpack.c.l.b16 %v469
        %v573 = vunpack.c.l.b16 %v470
        %v574 = vunpack.c.l.b16 %v471
        %v575 = vunpack.c.l.b16 %v472
        %v576 = vunpack.c.l.b16 %v473
        %v577 = vpack.c.b16 %v530, %v529
        %v578 = vpack.c.b16 %v532, %v531
        %v579 = vpack.c.b16 %v534, %v533
        %v580 = vpack.c.b16 %v536, %v535
        %v581 = vpack.c.b16 %v538, %v537
        %v582 = vpack.c.b16 %v540, %v539
        %v583 = vpack.c.b16 %v542, %v541
        %v584 = vpack.c.b16 %v544, %v543
        %v585 = vpack.c.b16 %v546, %v545
        %v586 = vpack.c.b16 %v548, %v547
        %v587 = vpack.c.b16 %v550, %v549
        %v588 = vpack.c.b16 %v552, %v551
        %v589 = vpack.c.b16 %v554, %v553
        %v590 = vpack.c.b16 %v556, %v555
        %v591 = vpack.c.b16 %v558, %v557
        %v592 = vpack.c.b16 %v560, %v559
        %v593 = vpack.c.b16 %v562, %v561
        %v594 = vpack.c.b16 %v564, %v563
        %v595 = vpack.c.b16 %v566, %v565
        %v596 = vpack.c.b16 %v568, %v567
        %v597 = vpack.c.b16 %v570, %v569
        %v598 = vpack.c.b16 %v572, %v571
        %v599 = vpack.c.b16 %v574, %v573
        %v600 = vpack.c.b16 %v576, %v575
        %625 = vmatprep.subr.bf16.mxu0 0
        %626 = vmatpush1.bf16.msra.mxu0 %v577
        %627 = vmatprep.subr.bf16.mxu0 0
        %628 = vmatpush1.bf16.msra.mxu0 %v578
        %629 = vmatprep.subr.bf16.mxu0 0
        %630 = vmatpush1.bf16.msra.mxu0 %v579
        %631 = vmatprep.subr.bf16.mxu0 0
        %632 = vmatpush1.bf16.msra.mxu0 %v580
        %633 = vmatprep.subr.bf16.mxu0 0
        %634 = vmatpush1.bf16.msra.mxu0 %v581
        %635 = vmatprep.subr.bf16.mxu0 0
        %636 = vmatpush1.bf16.msra.mxu0 %v582
        %637 = vmatprep.subr.bf16.mxu0 0
        %638 = vmatpush1.bf16.msra.mxu0 %v583
        %639 = vmatprep.subr.bf16.mxu0 0
        %640 = vmatpush1.bf16.msra.mxu0 %v584
        %641 = vmatprep.subr.bf16.mxu0 0
        %642 = vmatpush1.bf16.msra.mxu0 %v585
        %643 = vmatprep.subr.bf16.mxu0 0
        %644 = vmatpush1.bf16.msra.mxu0 %v586
        %645 = vmatprep.subr.bf16.mxu0 0
        %646 = vmatpush1.bf16.msra.mxu0 %v587
        %647 = vmatprep.subr.bf16.mxu0 0
        %648 = vmatpush1.bf16.msra.mxu0 %v588
        %649 = vmatprep.subr.bf16.mxu0 0
        %650 = vmatpush1.bf16.msra.mxu0 %v589
        %651 = vmatprep.subr.bf16.mxu0 0
        %652 = vmatpush1.bf16.msra.mxu0 %v590
        %653 = vmatprep.subr.bf16.mxu0 0
        %654 = vmatpush1.bf16.msra.mxu0 %v591
        %655 = vmatprep.subr.bf16.mxu0 0
        %656 = vmatpush1.bf16.msra.mxu0 %v592
        %657 = vmatprep.mubr.bf16.mxu0 %v421
        %658 = vmatmul.mubr.bf16.gmra.mrb[0].mxu0 %v420
        %v659 = vpop.f32.mrb[0].mxu0
        %v660 = vadd.f32 %v479, %v659
        %v661 = vpop.f32.mrb[0].mxu0
        %v662 = vpop.f32.mrb[0].mxu0
        %v663 = vadd.f32 %v479, %v662
        %v664 = vpop.f32.mrb[0].mxu0
        %665 = vmatprep.mubr.bf16.mxu0 %v424
        %666 = vmatmul.mubr.bf16.gmra.mrb[0].mxu0 %v423
        %v667 = vpop.f32.mrb[0].mxu0
        %v668 = vadd.f32 %v479, %v667
        %v669 = vpop.f32.mrb[0].mxu0
        %v670 = vpop.f32.mrb[0].mxu0
        %v671 = vadd.f32 %v479, %v670
        %v672 = vpop.f32.mrb[0].mxu0
        %673 = vdwg.mxu0
        %674 = vmatprep.subr.bf16.mxu0 0
        %675 = vmatpush1.bf16.msra.mxu0 %v593
        %676 = vmatprep.subr.bf16.mxu0 0
        %677 = vmatpush1.bf16.msra.mxu0 %v594
        %678 = vmatprep.subr.bf16.mxu0 0
        %679 = vmatpush1.bf16.msra.mxu0 %v595
        %680 = vmatprep.subr.bf16.mxu0 0
        %681 = vmatpush1.bf16.msra.mxu0 %v596
        %682 = vmatprep.subr.bf16.mxu0 0
        %683 = vmatpush1.bf16.msra.mxu0 %v597
        %684 = vmatprep.subr.bf16.mxu0 0
        %685 = vmatpush1.bf16.msra.mxu0 %v598
        %686 = vmatprep.subr.bf16.mxu0 0
        %687 = vmatpush1.bf16.msra.mxu0 %v599
        %688 = vmatprep.subr.bf16.mxu0 0
        %689 = vmatpush1.bf16.msra.mxu0 %v600
        %690 = vmatprep.subr.bf16.mxu0 0
        %691 = vmatpush1.bf16.msra.mxu0 0
        %692 = vmatprep.subr.bf16.mxu0 0
        %693 = vmatpush1.bf16.msra.mxu0 0
        %694 = vmatprep.subr.bf16.mxu0 0
        %695 = vmatpush1.bf16.msra.mxu0 0
        %696 = vmatprep.subr.bf16.mxu0 0
        %697 = vmatpush1.bf16.msra.mxu0 0
        %698 = vmatprep.subr.bf16.mxu0 0
        %699 = vmatpush1.bf16.msra.mxu0 0
        %700 = vmatprep.subr.bf16.mxu0 0
        %701 = vmatpush1.bf16.msra.mxu0 0
        %702 = vmatprep.subr.bf16.mxu0 0
        %703 = vmatpush1.bf16.msra.mxu0 0
        %704 = vmatprep.subr.bf16.mxu0 0
        %705 = vmatpush1.bf16.msra.mxu0 0
        %706 = vmatprep.mubr.bf16.mxu0 0
        %707 = vmatmul.mubr.bf16.gmra.mrb[0].mxu0 %v422
        %v708 = vpop.f32.mrb[0].mxu0
        %v709 = vadd.f32 %v660, %v708
        %v710 = vpop.f32.mrb[0].mxu0
        %v711 = vpop.f32.mrb[0].mxu0
        %v712 = vadd.f32 %v663, %v711
        %v713 = vpop.f32.mrb[0].mxu0
        %714 = vmatprep.mubr.bf16.mxu0 0
        %715 = vmatmul.mubr.bf16.gmra.mrb[0].mxu0 %v425
        %v716 = vpop.f32.mrb[0].mxu0
        %v717 = vadd.f32 %v668, %v716
        %v718 = vpop.f32.mrb[0].mxu0
        %v719 = vpop.f32.mrb[0].mxu0
        %v720 = vadd.f32 %v671, %v719
        %v721 = vpop.f32.mrb[0].mxu0
        %722 = vdwg.mxu0
        %v723 = vmax.f32 %v709, 0.0
        %v724 = vmax.f32 %v712, 0.0
        %v725 = vmax.f32 %v717, 0.0
        %v726 = vmax.f32 %v720, 0.0
        %727 = vst [vmem:[#allocation2 + $0x1] sm:$0xff] %v723
        %728 = vst [vmem:[#allocation2 + $0x9] sm:$0xff] %v724
        %729 = vst [vmem:[#allocation2 + $0x11] sm:$0xff] %v725
        %730 = vst [vmem:[#allocation2 + $0x19] sm:$0xff] %v726
        %v731 = vld [vmem:[#allocation2] sm:$0xff]
        %v732 = vld [vmem:[#allocation2 + $0x8] sm:$0xff]
        %v733 = vld [vmem:[#allocation2 + $0x10] sm:$0xff]
        %v734 = vld [vmem:[#allocation2 + $0x18] sm:$0xff]
        %v735 = vld [vmem:[#allocation2 + $0x1] sm:$0xff]
        %v736 = vld [vmem:[#allocation2 + $0x9] sm:$0xff]
        %v737 = vld [vmem:[#allocation2 + $0x11] sm:$0xff]
        %v738 = vld [vmem:[#allocation2 + $0x19] sm:$0xff]
        %v739 = vld [vmem:[#allocation2 + $0x2] sm:$0xff]
        %v740 = vld [vmem:[#allocation2 + $0xa] sm:$0xff]
        %v741 = vld [vmem:[#allocation2 + $0x12] sm:$0xff]
        %v742 = vld [vmem:[#allocation2 + $0x1a] sm:$0xff]
        %v743 = vpack.c.bf16 %v732, %v731
        %v744 = vpack.c.bf16 %v736, %v735
        %v745 = vpack.c.bf16 %v740, %v739
        %v746 = vpack.c.bf16 %v734, %v733
        %v747 = vpack.c.bf16 %v738, %v737
        %v748 = vpack.c.bf16 %v742, %v741
        %s749 = scalar_lea.vmem [#allocation10], 192
        %v750 = vld [vmem:[%s749] sm:$0xf]
        %v751 = vld [vmem:[%s749 + $0x4] sm:$0xf]
        %v752 = vld [vmem:[%s749 + $0x8] sm:$0xf]
        %v753 = vld [vmem:[%s749 + $0xc] sm:$0xf]
        %v754 = vld [vmem:[%s749 + $0x10] sm:$0xf]
        %v755 = vld [vmem:[%s749 + $0x14] sm:$0xf]
        %v756 = vld [vmem:[%s749 + $0x18] sm:$0xf]
        %v757 = vld [vmem:[%s749 + $0x1c] sm:$0xf]
        %v758 = vld [vmem:[%s749 + $0x20] sm:$0xf]
        %v759 = vld [vmem:[%s749 + $0x24] sm:$0xf]
        %v760 = vld [vmem:[%s749 + $0x28] sm:$0xf]
        %v761 = vld [vmem:[%s749 + $0x2c] sm:$0xf]
        %v762 = vld [vmem:[%s749 + $0x30] sm:$0xf]
        %v763 = vld [vmem:[%s749 + $0x34] sm:$0xf]
        %v764 = vld [vmem:[%s749 + $0x38] sm:$0xf]
        %v765 = vld [vmem:[%s749 + $0x3c] sm:$0xf]
        %v766 = vld [vmem:[%s749 + $0x40] sm:$0xf]
        %v767 = vld [vmem:[%s749 + $0x44] sm:$0xf]
        %v768 = vld [vmem:[%s749 + $0x48] sm:$0xf]
        %v769 = vld [vmem:[%s749 + $0x4c] sm:$0xf]
        %v770 = vld [vmem:[%s749 + $0x50] sm:$0xf]
        %v771 = vld [vmem:[%s749 + $0x54] sm:$0xf]
        %v772 = vld [vmem:[%s749 + $0x58] sm:$0xf]
        %v773 = vld [vmem:[%s749 + $0x5c] sm:$0xf]
        %v774 = vld [vmem:[%s749 + $0x60] sm:$0xf]
        %v775 = vld [vmem:[%s749 + $0x64] sm:$0xf]
        %v776 = vld [vmem:[%s749 + $0x68] sm:$0xf]
        %v777 = vld [vmem:[%s749 + $0x6c] sm:$0xf]
        %v778 = vld [vmem:[%s749 + $0x70] sm:$0xf]
        %v779 = vld [vmem:[%s749 + $0x74] sm:$0xf]
        %v780 = vld [vmem:[%s749 + $0x78] sm:$0xf]
        %v781 = vld [vmem:[%s749 + $0x7c] sm:$0xf]
        %v782 = vld [vmem:[%s749 + $0x80] sm:$0xf]
        %v783 = vld [vmem:[%s749 + $0x84] sm:$0xf]
        %v784 = vld [vmem:[%s749 + $0x88] sm:$0xf]
        %v785 = vld [vmem:[%s749 + $0x8c] sm:$0xf]
        %v786 = vld [vmem:[%s749 + $0x90] sm:$0xf]
        %v787 = vld [vmem:[%s749 + $0x94] sm:$0xf]
        %v788 = vld [vmem:[%s749 + $0x98] sm:$0xf]
        %v789 = vld [vmem:[%s749 + $0x9c] sm:$0xf]
        %v790 = vld [vmem:[%s749 + $0xa0] sm:$0xf]
        %v791 = vld [vmem:[%s749 + $0xa4] sm:$0xf]
        %v792 = vld [vmem:[%s749 + $0xa8] sm:$0xf]
        %v793 = vld [vmem:[%s749 + $0xac] sm:$0xf]
        %v794 = vld [vmem:[%s749 + $0xb0] sm:$0xf]
        %v795 = vld [vmem:[%s749 + $0xb4] sm:$0xf]
        %v796 = vld [vmem:[%s749 + $0xb8] sm:$0xf]
        %v797 = vld [vmem:[%s749 + $0xbc] sm:$0xf]
        %s798 = scalar_lea.vmem [#allocation13], 1
        %v799 = vld [vmem:[%s798] sm:$0x1]
        %v801 = vlaneseq
        %v802 = vshrl.u32 %v801, 7
        %v803 = vsub.s32 0, %v802
        %v804 = vrot.slane %v799, %v803
        %v854 = vunpack.c.l.b16 %v750
        %v855 = vunpack.c.l.b16 %v751
        %v856 = vunpack.c.l.b16 %v752
        %v857 = vunpack.c.l.b16 %v753
        %v858 = vunpack.c.l.b16 %v754
        %v859 = vunpack.c.l.b16 %v755
        %v860 = vunpack.c.l.b16 %v756
        %v861 = vunpack.c.l.b16 %v757
        %v862 = vunpack.c.l.b16 %v758
        %v863 = vunpack.c.l.b16 %v759
        %v864 = vunpack.c.l.b16 %v760
        %v865 = vunpack.c.l.b16 %v761
        %v866 = vunpack.c.l.b16 %v762
        %v867 = vunpack.c.l.b16 %v763
        %v868 = vunpack.c.l.b16 %v764
        %v869 = vunpack.c.l.b16 %v765
        %v870 = vunpack.c.l.b16 %v766
        %v871 = vunpack.c.l.b16 %v767
        %v872 = vunpack.c.l.b16 %v768
        %v873 = vunpack.c.l.b16 %v769
        %v874 = vunpack.c.l.b16 %v770
        %v875 = vunpack.c.l.b16 %v771
        %v876 = vunpack.c.l.b16 %v772
        %v877 = vunpack.c.l.b16 %v773
        %v878 = vunpack.c.l.b16 %v774
        %v879 = vunpack.c.l.b16 %v775
        %v880 = vunpack.c.l.b16 %v776
        %v881 = vunpack.c.l.b16 %v777
        %v882 = vunpack.c.l.b16 %v778
        %v883 = vunpack.c.l.b16 %v779
        %v884 = vunpack.c.l.b16 %v780
        %v885 = vunpack.c.l.b16 %v781
        %v886 = vunpack.c.l.b16 %v782
        %v887 = vunpack.c.l.b16 %v783
        %v888 = vunpack.c.l.b16 %v784
        %v889 = vunpack.c.l.b16 %v785
        %v890 = vunpack.c.l.b16 %v786
        %v891 = vunpack.c.l.b16 %v787
        %v892 = vunpack.c.l.b16 %v788
        %v893 = vunpack.c.l.b16 %v789
        %v894 = vunpack.c.l.b16 %v790
        %v895 = vunpack.c.l.b16 %v791
        %v896 = vunpack.c.l.b16 %v792
        %v897 = vunpack.c.l.b16 %v793
        %v898 = vunpack.c.l.b16 %v794
        %v899 = vunpack.c.l.b16 %v795
        %v900 = vunpack.c.l.b16 %v796
        %v901 = vunpack.c.l.b16 %v797
        %v902 = vpack.c.b16 %v855, %v854
        %v903 = vpack.c.b16 %v857, %v856
        %v904 = vpack.c.b16 %v859, %v858
        %v905 = vpack.c.b16 %v861, %v860
        %v906 = vpack.c.b16 %v863, %v862
        %v907 = vpack.c.b16 %v865, %v864
        %v908 = vpack.c.b16 %v867, %v866
        %v909 = vpack.c.b16 %v869, %v868
        %v910 = vpack.c.b16 %v871, %v870
        %v911 = vpack.c.b16 %v873, %v872
        %v912 = vpack.c.b16 %v875, %v874
        %v913 = vpack.c.b16 %v877, %v876
        %v914 = vpack.c.b16 %v879, %v878
        %v915 = vpack.c.b16 %v881, %v880
        %v916 = vpack.c.b16 %v883, %v882
        %v917 = vpack.c.b16 %v885, %v884
        %v918 = vpack.c.b16 %v887, %v886
        %v919 = vpack.c.b16 %v889, %v888
        %v920 = vpack.c.b16 %v891, %v890
        %v921 = vpack.c.b16 %v893, %v892
        %v922 = vpack.c.b16 %v895, %v894
        %v923 = vpack.c.b16 %v897, %v896
        %v924 = vpack.c.b16 %v899, %v898
        %v925 = vpack.c.b16 %v901, %v900
        %950 = vmatprep.subr.bf16.mxu0 0
        %951 = vmatpush1.bf16.msra.mxu0 %v902
        %952 = vmatprep.subr.bf16.mxu0 0
        %953 = vmatpush1.bf16.msra.mxu0 %v903
        %954 = vmatprep.subr.bf16.mxu0 0
        %955 = vmatpush1.bf16.msra.mxu0 %v904
        %956 = vmatprep.subr.bf16.mxu0 0
        %957 = vmatpush1.bf16.msra.mxu0 %v905
        %958 = vmatprep.subr.bf16.mxu0 0
        %959 = vmatpush1.bf16.msra.mxu0 %v906
        %960 = vmatprep.subr.bf16.mxu0 0
        %961 = vmatpush1.bf16.msra.mxu0 %v907
        %962 = vmatprep.subr.bf16.mxu0 0
        %963 = vmatpush1.bf16.msra.mxu0 %v908
        %964 = vmatprep.subr.bf16.mxu0 0
        %965 = vmatpush1.bf16.msra.mxu0 %v909
        %966 = vmatprep.subr.bf16.mxu0 0
        %967 = vmatpush1.bf16.msra.mxu0 %v910
        %968 = vmatprep.subr.bf16.mxu0 0
        %969 = vmatpush1.bf16.msra.mxu0 %v911
        %970 = vmatprep.subr.bf16.mxu0 0
        %971 = vmatpush1.bf16.msra.mxu0 %v912
        %972 = vmatprep.subr.bf16.mxu0 0
        %973 = vmatpush1.bf16.msra.mxu0 %v913
        %974 = vmatprep.subr.bf16.mxu0 0
        %975 = vmatpush1.bf16.msra.mxu0 %v914
        %976 = vmatprep.subr.bf16.mxu0 0
        %977 = vmatpush1.bf16.msra.mxu0 %v915
        %978 = vmatprep.subr.bf16.mxu0 0
        %979 = vmatpush1.bf16.msra.mxu0 %v916
        %980 = vmatprep.subr.bf16.mxu0 0
        %981 = vmatpush1.bf16.msra.mxu0 %v917
        %982 = vmatprep.mubr.bf16.mxu0 %v744
        %983 = vmatmul.mubr.bf16.gmra.mrb[0].mxu0 %v743
        %v984 = vpop.f32.mrb[0].mxu0
        %v985 = vadd.f32 %v804, %v984
        %v986 = vpop.f32.mrb[0].mxu0
        %v987 = vpop.f32.mrb[0].mxu0
        %v988 = vadd.f32 %v804, %v987
        %v989 = vpop.f32.mrb[0].mxu0
        %990 = vmatprep.mubr.bf16.mxu0 %v747
        %991 = vmatmul.mubr.bf16.gmra.mrb[0].mxu0 %v746
        %v992 = vpop.f32.mrb[0].mxu0
        %v993 = vadd.f32 %v804, %v992
        %v994 = vpop.f32.mrb[0].mxu0
        %v995 = vpop.f32.mrb[0].mxu0
        %v996 = vadd.f32 %v804, %v995
        %v997 = vpop.f32.mrb[0].mxu0
        %998 = vdwg.mxu0
        %999 = vmatprep.subr.bf16.mxu0 0
        %1000 = vmatpush1.bf16.msra.mxu0 %v918
        %1001 = vmatprep.subr.bf16.mxu0 0
        %1002 = vmatpush1.bf16.msra.mxu0 %v919
        %1003 = vmatprep.subr.bf16.mxu0 0
        %1004 = vmatpush1.bf16.msra.mxu0 %v920
        %1005 = vmatprep.subr.bf16.mxu0 0
        %1006 = vmatpush1.bf16.msra.mxu0 %v921
        %1007 = vmatprep.subr.bf16.mxu0 0
        %1008 = vmatpush1.bf16.msra.mxu0 %v922
        %1009 = vmatprep.subr.bf16.mxu0 0
        %1010 = vmatpush1.bf16.msra.mxu0 %v923
        %1011 = vmatprep.subr.bf16.mxu0 0
        %1012 = vmatpush1.bf16.msra.mxu0 %v924
        %1013 = vmatprep.subr.bf16.mxu0 0
        %1014 = vmatpush1.bf16.msra.mxu0 %v925
        %1015 = vmatprep.subr.bf16.mxu0 0
        %1016 = vmatpush1.bf16.msra.mxu0 0
        %1017 = vmatprep.subr.bf16.mxu0 0
        %1018 = vmatpush1.bf16.msra.mxu0 0
        %1019 = vmatprep.subr.bf16.mxu0 0
        %1020 = vmatpush1.bf16.msra.mxu0 0
        %1021 = vmatprep.subr.bf16.mxu0 0
        %1022 = vmatpush1.bf16.msra.mxu0 0
        %1023 = vmatprep.subr.bf16.mxu0 0
        %1024 = vmatpush1.bf16.msra.mxu0 0
        %1025 = vmatprep.subr.bf16.mxu0 0
        %1026 = vmatpush1.bf16.msra.mxu0 0
        %1027 = vmatprep.subr.bf16.mxu0 0
        %1028 = vmatpush1.bf16.msra.mxu0 0
        %1029 = vmatprep.subr.bf16.mxu0 0
        %1030 = vmatpush1.bf16.msra.mxu0 0
        %1031 = vmatprep.mubr.bf16.mxu0 0
        %1032 = vmatmul.mubr.bf16.gmra.mrb[0].mxu0 %v745
        %v1033 = vpop.f32.mrb[0].mxu0
        %v1034 = vadd.f32 %v985, %v1033
        %v1035 = vpop.f32.mrb[0].mxu0
        %v1036 = vpop.f32.mrb[0].mxu0
        %v1037 = vadd.f32 %v988, %v1036
        %v1038 = vpop.f32.mrb[0].mxu0
        %1039 = vmatprep.mubr.bf16.mxu0 0
        %1040 = vmatmul.mubr.bf16.gmra.mrb[0].mxu0 %v748
        %v1041 = vpop.f32.mrb[0].mxu0
        %v1042 = vadd.f32 %v993, %v1041
        %v1043 = vpop.f32.mrb[0].mxu0
        %v1044 = vpop.f32.mrb[0].mxu0
        %v1045 = vadd.f32 %v996, %v1044
        %v1046 = vpop.f32.mrb[0].mxu0
        %1047 = vdwg.mxu0
        %v1048 = vmax.f32 %v1034, 0.0
        %v1049 = vmax.f32 %v1037, 0.0
        %v1050 = vmax.f32 %v1042, 0.0
        %v1051 = vmax.f32 %v1045, 0.0
        %1052 = vst [vmem:[%s338] sm:$0xff] %v1048
        %1053 = vst [vmem:[%s338 + $0x8] sm:$0xff] %v1049
        %1054 = vst [vmem:[%s338 + $0x10] sm:$0xff] %v1050
        %1055 = vst [vmem:[%s338 + $0x18] sm:$0xff] %v1051
        %1056 = vst [vmem:[#allocation3 + $0x1] sm:$0xff] %v1048
        %1057 = vst [vmem:[#allocation3 + $0x9] sm:$0xff] %v1049
        %1058 = vst [vmem:[#allocation3 + $0x11] sm:$0xff] %v1050
        %1059 = vst [vmem:[#allocation3 + $0x19] sm:$0xff] %v1051
        %v1060 = vld [vmem:[#allocation3] ss:$2 sm:$0xff]
        %s1061 = scalar_lea.vmem [#allocation3], 16
        %v1062 = vld [vmem:[%s1061] ss:$2 sm:$0xff]
        %s1063 = scalar_lea.vmem [#allocation3], 1
        %v1064 = vld [vmem:[%s1063] ss:$2 sm:$0xff]
        %s1065 = scalar_lea.vmem [#allocation3], 17
        %v1066 = vld [vmem:[%s1065] ss:$2 sm:$0xff]
        %s1067 = scalar_lea.vmem [#allocation3], 2
        %v1068 = vld [vmem:[%s1067] ss:$2 sm:$0xff]
        %s1069 = scalar_lea.vmem [#allocation3], 18
        %v1070 = vld [vmem:[%s1069] ss:$2 sm:$0xff]
        %v1071 = vpack.c.bf16 %v1062, %v1060
        %v1072 = vpack.c.bf16 %v1066, %v1064
        %v1073 = vpack.c.bf16 %v1070, %v1068
        %s1074 = scalar_lea.vmem [#allocation10], 384
        %v1075 = vld [vmem:[%s1074] sm:$0xf]
        %v1076 = vld [vmem:[%s1074 + $0x4] sm:$0xf]
        %v1077 = vld [vmem:[%s1074 + $0x8] sm:$0xf]
        %v1078 = vld [vmem:[%s1074 + $0xc] sm:$0xf]
        %v1079 = vld [vmem:[%s1074 + $0x10] sm:$0xf]
        %v1080 = vld [vmem:[%s1074 + $0x14] sm:$0xf]
        %v1081 = vld [vmem:[%s1074 + $0x18] sm:$0xf]
        %v1082 = vld [vmem:[%s1074 + $0x1c] sm:$0xf]
        %v1083 = vld [vmem:[%s1074 + $0x20] sm:$0xf]
        %v1084 = vld [vmem:[%s1074 + $0x24] sm:$0xf]
        %v1085 = vld [vmem:[%s1074 + $0x28] sm:$0xf]
        %v1086 = vld [vmem:[%s1074 + $0x2c] sm:$0xf]
        %v1087 = vld [vmem:[%s1074 + $0x30] sm:$0xf]
        %v1088 = vld [vmem:[%s1074 + $0x34] sm:$0xf]
        %v1089 = vld [vmem:[%s1074 + $0x38] sm:$0xf]
        %v1090 = vld [vmem:[%s1074 + $0x3c] sm:$0xf]
        %v1091 = vld [vmem:[%s1074 + $0x40] sm:$0xf]
        %v1092 = vld [vmem:[%s1074 + $0x44] sm:$0xf]
        %v1093 = vld [vmem:[%s1074 + $0x48] sm:$0xf]
        %v1094 = vld [vmem:[%s1074 + $0x4c] sm:$0xf]
        %v1095 = vld [vmem:[%s1074 + $0x50] sm:$0xf]
        %v1096 = vld [vmem:[%s1074 + $0x54] sm:$0xf]
        %v1097 = vld [vmem:[%s1074 + $0x58] sm:$0xf]
        %v1098 = vld [vmem:[%s1074 + $0x5c] sm:$0xf]
        %v1099 = vld [vmem:[%s1074 + $0x60] sm:$0xf]
        %v1100 = vld [vmem:[%s1074 + $0x64] sm:$0xf]
        %v1101 = vld [vmem:[%s1074 + $0x68] sm:$0xf]
        %v1102 = vld [vmem:[%s1074 + $0x6c] sm:$0xf]
        %v1103 = vld [vmem:[%s1074 + $0x70] sm:$0xf]
        %v1104 = vld [vmem:[%s1074 + $0x74] sm:$0xf]
        %v1105 = vld [vmem:[%s1074 + $0x78] sm:$0xf]
        %v1106 = vld [vmem:[%s1074 + $0x7c] sm:$0xf]
        %v1107 = vld [vmem:[%s1074 + $0x80] sm:$0xf]
        %v1108 = vld [vmem:[%s1074 + $0x84] sm:$0xf]
        %v1109 = vld [vmem:[%s1074 + $0x88] sm:$0xf]
        %v1110 = vld [vmem:[%s1074 + $0x8c] sm:$0xf]
        %v1111 = vld [vmem:[%s1074 + $0x90] sm:$0xf]
        %v1112 = vld [vmem:[%s1074 + $0x94] sm:$0xf]
        %v1113 = vld [vmem:[%s1074 + $0x98] sm:$0xf]
        %v1114 = vld [vmem:[%s1074 + $0x9c] sm:$0xf]
        %v1115 = vld [vmem:[%s1074 + $0xa0] sm:$0xf]
        %v1116 = vld [vmem:[%s1074 + $0xa4] sm:$0xf]
        %v1117 = vld [vmem:[%s1074 + $0xa8] sm:$0xf]
        %v1118 = vld [vmem:[%s1074 + $0xac] sm:$0xf]
        %v1119 = vld [vmem:[%s1074 + $0xb0] sm:$0xf]
        %v1120 = vld [vmem:[%s1074 + $0xb4] sm:$0xf]
        %v1121 = vld [vmem:[%s1074 + $0xb8] sm:$0xf]
        %v1122 = vld [vmem:[%s1074 + $0xbc] sm:$0xf]
        %s1123 = scalar_lea.vmem [#allocation13], 2
        %v1124 = vld [vmem:[%s1123] sm:$0x1]
        %v1126 = vlaneseq
        %v1127 = vshrl.u32 %v1126, 7
        %v1128 = vsub.s32 0, %v1127
        %v1129 = vrot.slane %v1124, %v1128
        %v1179 = vunpack.c.l.b16 %v1075
        %v1180 = vunpack.c.l.b16 %v1076
        %v1181 = vunpack.c.l.b16 %v1077
        %v1182 = vunpack.c.l.b16 %v1078
        %v1183 = vunpack.c.l.b16 %v1079
        %v1184 = vunpack.c.l.b16 %v1080
        %v1185 = vunpack.c.l.b16 %v1081
        %v1186 = vunpack.c.l.b16 %v1082
        %v1187 = vunpack.c.l.b16 %v1083
        %v1188 = vunpack.c.l.b16 %v1084
        %v1189 = vunpack.c.l.b16 %v1085
        %v1190 = vunpack.c.l.b16 %v1086
        %v1191 = vunpack.c.l.b16 %v1087
        %v1192 = vunpack.c.l.b16 %v1088
        %v1193 = vunpack.c.l.b16 %v1089
        %v1194 = vunpack.c.l.b16 %v1090
        %v1195 = vunpack.c.l.b16 %v1091
        %v1196 = vunpack.c.l.b16 %v1092
        %v1197 = vunpack.c.l.b16 %v1093
        %v1198 = vunpack.c.l.b16 %v1094
        %v1199 = vunpack.c.l.b16 %v1095
        %v1200 = vunpack.c.l.b16 %v1096
        %v1201 = vunpack.c.l.b16 %v1097
        %v1202 = vunpack.c.l.b16 %v1098
        %v1203 = vunpack.c.l.b16 %v1099
        %v1204 = vunpack.c.l.b16 %v1100
        %v1205 = vunpack.c.l.b16 %v1101
        %v1206 = vunpack.c.l.b16 %v1102
        %v1207 = vunpack.c.l.b16 %v1103
        %v1208 = vunpack.c.l.b16 %v1104
        %v1209 = vunpack.c.l.b16 %v1105
        %v1210 = vunpack.c.l.b16 %v1106
        %v1211 = vunpack.c.l.b16 %v1107
        %v1212 = vunpack.c.l.b16 %v1108
        %v1213 = vunpack.c.l.b16 %v1109
        %v1214 = vunpack.c.l.b16 %v1110
        %v1215 = vunpack.c.l.b16 %v1111
        %v1216 = vunpack.c.l.b16 %v1112
        %v1217 = vunpack.c.l.b16 %v1113
        %v1218 = vunpack.c.l.b16 %v1114
        %v1219 = vunpack.c.l.b16 %v1115
        %v1220 = vunpack.c.l.b16 %v1116
        %v1221 = vunpack.c.l.b16 %v1117
        %v1222 = vunpack.c.l.b16 %v1118
        %v1223 = vunpack.c.l.b16 %v1119
        %v1224 = vunpack.c.l.b16 %v1120
        %v1225 = vunpack.c.l.b16 %v1121
        %v1226 = vunpack.c.l.b16 %v1122
        %v1227 = vpack.c.b16 %v1180, %v1179
        %v1228 = vpack.c.b16 %v1182, %v1181
        %v1229 = vpack.c.b16 %v1184, %v1183
        %v1230 = vpack.c.b16 %v1186, %v1185
        %v1231 = vpack.c.b16 %v1188, %v1187
        %v1232 = vpack.c.b16 %v1190, %v1189
        %v1233 = vpack.c.b16 %v1192, %v1191
        %v1234 = vpack.c.b16 %v1194, %v1193
        %v1235 = vpack.c.b16 %v1196, %v1195
        %v1236 = vpack.c.b16 %v1198, %v1197
        %v1237 = vpack.c.b16 %v1200, %v1199
        %v1238 = vpack.c.b16 %v1202, %v1201
        %v1239 = vpack.c.b16 %v1204, %v1203
        %v1240 = vpack.c.b16 %v1206, %v1205
        %v1241 = vpack.c.b16 %v1208, %v1207
        %v1242 = vpack.c.b16 %v1210, %v1209
        %v1243 = vpack.c.b16 %v1212, %v1211
        %v1244 = vpack.c.b16 %v1214, %v1213
        %v1245 = vpack.c.b16 %v1216, %v1215
        %v1246 = vpack.c.b16 %v1218, %v1217
        %v1247 = vpack.c.b16 %v1220, %v1219
        %v1248 = vpack.c.b16 %v1222, %v1221
        %v1249 = vpack.c.b16 %v1224, %v1223
        %v1250 = vpack.c.b16 %v1226, %v1225
        %1275 = vmatprep.subr.bf16.mxu0 0
        %1276 = vmatpush1.bf16.msra.mxu0 %v1227
        %1277 = vmatprep.subr.bf16.mxu0 0
        %1278 = vmatpush1.bf16.msra.mxu0 %v1228
        %1279 = vmatprep.subr.bf16.mxu0 0
        %1280 = vmatpush1.bf16.msra.mxu0 %v1229
        %1281 = vmatprep.subr.bf16.mxu0 0
        %1282 = vmatpush1.bf16.msra.mxu0 %v1230
        %1283 = vmatprep.subr.bf16.mxu0 0
        %1284 = vmatpush1.bf16.msra.mxu0 %v1231
        %1285 = vmatprep.subr.bf16.mxu0 0
        %1286 = vmatpush1.bf16.msra.mxu0 %v1232
        %1287 = vmatprep.subr.bf16.mxu0 0
        %1288 = vmatpush1.bf16.msra.mxu0 %v1233
        %1289 = vmatprep.subr.bf16.mxu0 0
        %1290 = vmatpush1.bf16.msra.mxu0 %v1234
        %1291 = vmatprep.subr.bf16.mxu0 0
        %1292 = vmatpush1.bf16.msra.mxu0 %v1235
        %1293 = vmatprep.subr.bf16.mxu0 0
        %1294 = vmatpush1.bf16.msra.mxu0 %v1236
        %1295 = vmatprep.subr.bf16.mxu0 0
        %1296 = vmatpush1.bf16.msra.mxu0 %v1237
        %1297 = vmatprep.subr.bf16.mxu0 0
        %1298 = vmatpush1.bf16.msra.mxu0 %v1238
        %1299 = vmatprep.subr.bf16.mxu0 0
        %1300 = vmatpush1.bf16.msra.mxu0 %v1239
        %1301 = vmatprep.subr.bf16.mxu0 0
        %1302 = vmatpush1.bf16.msra.mxu0 %v1240
        %1303 = vmatprep.subr.bf16.mxu0 0
        %1304 = vmatpush1.bf16.msra.mxu0 %v1241
        %1305 = vmatprep.subr.bf16.mxu0 0
        %1306 = vmatpush1.bf16.msra.mxu0 %v1242
        %1307 = vmatprep.mubr.bf16.mxu0 %v1072
        %1308 = vmatmul.mubr.bf16.gmra.mrb[0].mxu0 %v1071
        %v1309 = vpop.f32.mrb[0].mxu0
        %v1310 = vadd.f32 %v1129, %v1309
        %v1311 = vpop.f32.mrb[0].mxu0
        %v1312 = vpop.f32.mrb[0].mxu0
        %v1313 = vadd.f32 %v1129, %v1312
        %v1314 = vpop.f32.mrb[0].mxu0
        %1315 = vdwg.mxu0
        %1316 = vmatprep.subr.bf16.mxu0 0
        %1317 = vmatpush1.bf16.msra.mxu0 %v1243
        %1318 = vmatprep.subr.bf16.mxu0 0
        %1319 = vmatpush1.bf16.msra.mxu0 %v1244
        %1320 = vmatprep.subr.bf16.mxu0 0
        %1321 = vmatpush1.bf16.msra.mxu0 %v1245
        %1322 = vmatprep.subr.bf16.mxu0 0
        %1323 = vmatpush1.bf16.msra.mxu0 %v1246
        %1324 = vmatprep.subr.bf16.mxu0 0
        %1325 = vmatpush1.bf16.msra.mxu0 %v1247
        %1326 = vmatprep.subr.bf16.mxu0 0
        %1327 = vmatpush1.bf16.msra.mxu0 %v1248
        %1328 = vmatprep.subr.bf16.mxu0 0
        %1329 = vmatpush1.bf16.msra.mxu0 %v1249
        %1330 = vmatprep.subr.bf16.mxu0 0
        %1331 = vmatpush1.bf16.msra.mxu0 %v1250
        %1332 = vmatprep.subr.bf16.mxu0 0
        %1333 = vmatpush1.bf16.msra.mxu0 0
        %1334 = vmatprep.subr.bf16.mxu0 0
        %1335 = vmatpush1.bf16.msra.mxu0 0
        %1336 = vmatprep.subr.bf16.mxu0 0
        %1337 = vmatpush1.bf16.msra.mxu0 0
        %1338 = vmatprep.subr.bf16.mxu0 0
        %1339 = vmatpush1.bf16.msra.mxu0 0
        %1340 = vmatprep.subr.bf16.mxu0 0
        %1341 = vmatpush1.bf16.msra.mxu0 0
        %1342 = vmatprep.subr.bf16.mxu0 0
        %1343 = vmatpush1.bf16.msra.mxu0 0
        %1344 = vmatprep.subr.bf16.mxu0 0
        %1345 = vmatpush1.bf16.msra.mxu0 0
        %1346 = vmatprep.subr.bf16.mxu0 0
        %1347 = vmatpush1.bf16.msra.mxu0 0
        %1348 = vmatprep.mubr.bf16.mxu0 0
        %1349 = vmatmul.mubr.bf16.gmra.mrb[0].mxu0 %v1073
        %v1350 = vpop.f32.mrb[0].mxu0
        %v1351 = vadd.f32 %v1310, %v1350
        %v1352 = vpop.f32.mrb[0].mxu0
        %v1353 = vpop.f32.mrb[0].mxu0
        %v1354 = vadd.f32 %v1313, %v1353
        %v1355 = vpop.f32.mrb[0].mxu0
        %1356 = vdwg.mxu0
        %v1357 = vmax.f32 %v1351, 0.0
        %v1358 = vmax.f32 %v1354, 0.0
        %1359 = vst [vmem:[%s345] sm:$0xff] %v1357
        %1360 = vst [vmem:[%s345 + $0x8] sm:$0xff] %v1358
        %1361 = vst [vmem:[#allocation4 + $0x1] sm:$0xff] %v1357
        %1362 = vst [vmem:[#allocation4 + $0x9] sm:$0xff] %v1358
        %v1363 = vld [vmem:[#allocation4] ss:$2 sm:$0xff]
        %s1364 = scalar_lea.vmem [#allocation4], 1
        %v1365 = vld [vmem:[%s1364] ss:$2 sm:$0xff]
        %s1366 = scalar_lea.vmem [#allocation4], 2
        %v1367 = vld [vmem:[%s1366] ss:$2 sm:$0xff]
        %v1368 = vpack.c.bf16 %v1363, %v1363
        %v1369 = vpack.c.bf16 %v1365, %v1365
        %v1370 = vpack.c.bf16 %v1367, %v1367
        %s1371 = scalar_lea.vmem [#allocation10], 576
        %v1372 = vld [vmem:[%s1371] sm:$0xf]
        %v1373 = vld [vmem:[%s1371 + $0x4] sm:$0xf]
        %v1374 = vld [vmem:[%s1371 + $0x8] sm:$0xf]
        %v1375 = vld [vmem:[%s1371 + $0xc] sm:$0xf]
        %v1376 = vld [vmem:[%s1371 + $0x10] sm:$0xf]
        %v1377 = vld [vmem:[%s1371 + $0x14] sm:$0xf]
        %v1378 = vld [vmem:[%s1371 + $0x18] sm:$0xf]
        %v1379 = vld [vmem:[%s1371 + $0x1c] sm:$0xf]
        %v1380 = vld [vmem:[%s1371 + $0x20] sm:$0xf]
        %v1381 = vld [vmem:[%s1371 + $0x24] sm:$0xf]
        %v1382 = vld [vmem:[%s1371 + $0x28] sm:$0xf]
        %v1383 = vld [vmem:[%s1371 + $0x2c] sm:$0xf]
        %v1384 = vld [vmem:[%s1371 + $0x30] sm:$0xf]
        %v1385 = vld [vmem:[%s1371 + $0x34] sm:$0xf]
        %v1386 = vld [vmem:[%s1371 + $0x38] sm:$0xf]
        %v1387 = vld [vmem:[%s1371 + $0x3c] sm:$0xf]
        %v1388 = vld [vmem:[%s1371 + $0x40] sm:$0xf]
        %v1389 = vld [vmem:[%s1371 + $0x44] sm:$0xf]
        %v1390 = vld [vmem:[%s1371 + $0x48] sm:$0xf]
        %v1391 = vld [vmem:[%s1371 + $0x4c] sm:$0xf]
        %v1392 = vld [vmem:[%s1371 + $0x50] sm:$0xf]
        %v1393 = vld [vmem:[%s1371 + $0x54] sm:$0xf]
        %v1394 = vld [vmem:[%s1371 + $0x58] sm:$0xf]
        %v1395 = vld [vmem:[%s1371 + $0x5c] sm:$0xf]
        %v1396 = vld [vmem:[%s1371 + $0x60] sm:$0xf]
        %v1397 = vld [vmem:[%s1371 + $0x64] sm:$0xf]
        %v1398 = vld [vmem:[%s1371 + $0x68] sm:$0xf]
        %v1399 = vld [vmem:[%s1371 + $0x6c] sm:$0xf]
        %v1400 = vld [vmem:[%s1371 + $0x70] sm:$0xf]
        %v1401 = vld [vmem:[%s1371 + $0x74] sm:$0xf]
        %v1402 = vld [vmem:[%s1371 + $0x78] sm:$0xf]
        %v1403 = vld [vmem:[%s1371 + $0x7c] sm:$0xf]
        %v1404 = vld [vmem:[%s1371 + $0x80] sm:$0xf]
        %v1405 = vld [vmem:[%s1371 + $0x84] sm:$0xf]
        %v1406 = vld [vmem:[%s1371 + $0x88] sm:$0xf]
        %v1407 = vld [vmem:[%s1371 + $0x8c] sm:$0xf]
        %v1408 = vld [vmem:[%s1371 + $0x90] sm:$0xf]
        %v1409 = vld [vmem:[%s1371 + $0x94] sm:$0xf]
        %v1410 = vld [vmem:[%s1371 + $0x98] sm:$0xf]
        %v1411 = vld [vmem:[%s1371 + $0x9c] sm:$0xf]
        %v1412 = vld [vmem:[%s1371 + $0xa0] sm:$0xf]
        %v1413 = vld [vmem:[%s1371 + $0xa4] sm:$0xf]
        %v1414 = vld [vmem:[%s1371 + $0xa8] sm:$0xf]
        %v1415 = vld [vmem:[%s1371 + $0xac] sm:$0xf]
        %v1416 = vld [vmem:[%s1371 + $0xb0] sm:$0xf]
        %v1417 = vld [vmem:[%s1371 + $0xb4] sm:$0xf]
        %v1418 = vld [vmem:[%s1371 + $0xb8] sm:$0xf]
        %v1419 = vld [vmem:[%s1371 + $0xbc] sm:$0xf]
        %s1420 = scalar_lea.vmem [#allocation13], 3
        %v1421 = vld [vmem:[%s1420] sm:$0x1]
        %v1423 = vlaneseq
        %v1424 = vshrl.u32 %v1423, 7
        %v1425 = vsub.s32 0, %v1424
        %v1426 = vrot.slane %v1421, %v1425
        %v1476 = vunpack.c.l.b16 %v1372
        %v1477 = vunpack.c.l.b16 %v1373
        %v1478 = vunpack.c.l.b16 %v1374
        %v1479 = vunpack.c.l.b16 %v1375
        %v1480 = vunpack.c.l.b16 %v1376
        %v1481 = vunpack.c.l.b16 %v1377
        %v1482 = vunpack.c.l.b16 %v1378
        %v1483 = vunpack.c.l.b16 %v1379
        %v1484 = vunpack.c.l.b16 %v1380
        %v1485 = vunpack.c.l.b16 %v1381
        %v1486 = vunpack.c.l.b16 %v1382
        %v1487 = vunpack.c.l.b16 %v1383
        %v1488 = vunpack.c.l.b16 %v1384
        %v1489 = vunpack.c.l.b16 %v1385
        %v1490 = vunpack.c.l.b16 %v1386
        %v1491 = vunpack.c.l.b16 %v1387
        %v1492 = vunpack.c.l.b16 %v1388
        %v1493 = vunpack.c.l.b16 %v1389
        %v1494 = vunpack.c.l.b16 %v1390
        %v1495 = vunpack.c.l.b16 %v1391
        %v1496 = vunpack.c.l.b16 %v1392
        %v1497 = vunpack.c.l.b16 %v1393
        %v1498 = vunpack.c.l.b16 %v1394
        %v1499 = vunpack.c.l.b16 %v1395
        %v1500 = vunpack.c.l.b16 %v1396
        %v1501 = vunpack.c.l.b16 %v1397
        %v1502 = vunpack.c.l.b16 %v1398
        %v1503 = vunpack.c.l.b16 %v1399
        %v1504 = vunpack.c.l.b16 %v1400
        %v1505 = vunpack.c.l.b16 %v1401
        %v1506 = vunpack.c.l.b16 %v1402
        %v1507 = vunpack.c.l.b16 %v1403
        %v1508 = vunpack.c.l.b16 %v1404
        %v1509 = vunpack.c.l.b16 %v1405
        %v1510 = vunpack.c.l.b16 %v1406
        %v1511 = vunpack.c.l.b16 %v1407
        %v1512 = vunpack.c.l.b16 %v1408
        %v1513 = vunpack.c.l.b16 %v1409
        %v1514 = vunpack.c.l.b16 %v1410
        %v1515 = vunpack.c.l.b16 %v1411
        %v1516 = vunpack.c.l.b16 %v1412
        %v1517 = vunpack.c.l.b16 %v1413
        %v1518 = vunpack.c.l.b16 %v1414
        %v1519 = vunpack.c.l.b16 %v1415
        %v1520 = vunpack.c.l.b16 %v1416
        %v1521 = vunpack.c.l.b16 %v1417
        %v1522 = vunpack.c.l.b16 %v1418
        %v1523 = vunpack.c.l.b16 %v1419
        %v1524 = vpack.c.b16 %v1477, %v1476
        %v1525 = vpack.c.b16 %v1479, %v1478
        %v1526 = vpack.c.b16 %v1481, %v1480
        %v1527 = vpack.c.b16 %v1483, %v1482
        %v1528 = vpack.c.b16 %v1485, %v1484
        %v1529 = vpack.c.b16 %v1487, %v1486
        %v1530 = vpack.c.b16 %v1489, %v1488
        %v1531 = vpack.c.b16 %v1491, %v1490
        %v1532 = vpack.c.b16 %v1493, %v1492
        %v1533 = vpack.c.b16 %v1495, %v1494
        %v1534 = vpack.c.b16 %v1497, %v1496
        %v1535 = vpack.c.b16 %v1499, %v1498
        %v1536 = vpack.c.b16 %v1501, %v1500
        %v1537 = vpack.c.b16 %v1503, %v1502
        %v1538 = vpack.c.b16 %v1505, %v1504
        %v1539 = vpack.c.b16 %v1507, %v1506
        %v1540 = vpack.c.b16 %v1509, %v1508
        %v1541 = vpack.c.b16 %v1511, %v1510
        %v1542 = vpack.c.b16 %v1513, %v1512
        %v1543 = vpack.c.b16 %v1515, %v1514
        %v1544 = vpack.c.b16 %v1517, %v1516
        %v1545 = vpack.c.b16 %v1519, %v1518
        %v1546 = vpack.c.b16 %v1521, %v1520
        %v1547 = vpack.c.b16 %v1523, %v1522
        %1572 = vmatprep.subr.bf16.mxu0 0
        %1573 = vmatpush1.bf16.msra.mxu0 %v1524
        %1574 = vmatprep.subr.bf16.mxu0 0
        %1575 = vmatpush1.bf16.msra.mxu0 %v1525
        %1576 = vmatprep.subr.bf16.mxu0 0
        %1577 = vmatpush1.bf16.msra.mxu0 %v1526
        %1578 = vmatprep.subr.bf16.mxu0 0
        %1579 = vmatpush1.bf16.msra.mxu0 %v1527
        %1580 = vmatprep.subr.bf16.mxu0 0
        %1581 = vmatpush1.bf16.msra.mxu0 %v1528
        %1582 = vmatprep.subr.bf16.mxu0 0
        %1583 = vmatpush1.bf16.msra.mxu0 %v1529
        %1584 = vmatprep.subr.bf16.mxu0 0
        %1585 = vmatpush1.bf16.msra.mxu0 %v1530
        %1586 = vmatprep.subr.bf16.mxu0 0
        %1587 = vmatpush1.bf16.msra.mxu0 %v1531
        %1588 = vmatprep.subr.bf16.mxu0 0
        %1589 = vmatpush1.bf16.msra.mxu0 %v1532
        %1590 = vmatprep.subr.bf16.mxu0 0
        %1591 = vmatpush1.bf16.msra.mxu0 %v1533
        %1592 = vmatprep.subr.bf16.mxu0 0
        %1593 = vmatpush1.bf16.msra.mxu0 %v1534
        %1594 = vmatprep.subr.bf16.mxu0 0
        %1595 = vmatpush1.bf16.msra.mxu0 %v1535
        %1596 = vmatprep.subr.bf16.mxu0 0
        %1597 = vmatpush1.bf16.msra.mxu0 %v1536
        %1598 = vmatprep.subr.bf16.mxu0 0
        %1599 = vmatpush1.bf16.msra.mxu0 %v1537
        %1600 = vmatprep.subr.bf16.mxu0 0
        %1601 = vmatpush1.bf16.msra.mxu0 %v1538
        %1602 = vmatprep.subr.bf16.mxu0 0
        %1603 = vmatpush1.bf16.msra.mxu0 %v1539
        %1604 = vmatprep.mubr.bf16.mxu0 %v1369
        %1605 = vmatmul.mubr.bf16.gmra.mrb[0].mxu0 %v1368
        %v1606 = vpop.f32.mrb[0].mxu0
        %v1607 = vadd.f32 %v1426, %v1606
        %v1608 = vpop.f32.mrb[0].mxu0
        %v1609 = vpop.f32.mrb[0].mxu0
        %v1610 = vpop.f32.mrb[0].mxu0
        %1611 = vdwg.mxu0
        %1612 = vmatprep.subr.bf16.mxu0 0
        %1613 = vmatpush1.bf16.msra.mxu0 %v1540
        %1614 = vmatprep.subr.bf16.mxu0 0
        %1615 = vmatpush1.bf16.msra.mxu0 %v1541
        %1616 = vmatprep.subr.bf16.mxu0 0
        %1617 = vmatpush1.bf16.msra.mxu0 %v1542
        %1618 = vmatprep.subr.bf16.mxu0 0
        %1619 = vmatpush1.bf16.msra.mxu0 %v1543
        %1620 = vmatprep.subr.bf16.mxu0 0
        %1621 = vmatpush1.bf16.msra.mxu0 %v1544
        %1622 = vmatprep.subr.bf16.mxu0 0
        %1623 = vmatpush1.bf16.msra.mxu0 %v1545
        %1624 = vmatprep.subr.bf16.mxu0 0
        %1625 = vmatpush1.bf16.msra.mxu0 %v1546
        %1626 = vmatprep.subr.bf16.mxu0 0
        %1627 = vmatpush1.bf16.msra.mxu0 %v1547
        %1628 = vmatprep.subr.bf16.mxu0 0
        %1629 = vmatpush1.bf16.msra.mxu0 0
        %1630 = vmatprep.subr.bf16.mxu0 0
        %1631 = vmatpush1.bf16.msra.mxu0 0
        %1632 = vmatprep.subr.bf16.mxu0 0
        %1633 = vmatpush1.bf16.msra.mxu0 0
        %1634 = vmatprep.subr.bf16.mxu0 0
        %1635 = vmatpush1.bf16.msra.mxu0 0
        %1636 = vmatprep.subr.bf16.mxu0 0
        %1637 = vmatpush1.bf16.msra.mxu0 0
        %1638 = vmatprep.subr.bf16.mxu0 0
        %1639 = vmatpush1.bf16.msra.mxu0 0
        %1640 = vmatprep.subr.bf16.mxu0 0
        %1641 = vmatpush1.bf16.msra.mxu0 0
        %1642 = vmatprep.subr.bf16.mxu0 0
        %1643 = vmatpush1.bf16.msra.mxu0 0
        %1644 = vmatprep.mubr.bf16.mxu0 0
        %1645 = vmatmul.mubr.bf16.gmra.mrb[0].mxu0 %v1370
        %v1646 = vpop.f32.mrb[0].mxu0
        %v1647 = vadd.f32 %v1607, %v1646
        %v1648 = vpop.f32.mrb[0].mxu0
        %v1649 = vpop.f32.mrb[0].mxu0
        %v1650 = vpop.f32.mrb[0].mxu0
        %1651 = vdwg.mxu0
        %v1652 = vmax.f32 %v1647, 0.0
        %1653 = vst [vmem:[%s352] sm:$0xff] %v1652
        %1654 = vst [vmem:[#allocation5 + $0x1] sm:$0xff] %v1652
        %v1655 = vld [vmem:[#allocation5] sm:$0xff]
        %v1656 = vld [vmem:[#allocation5 + $0x1] sm:$0xff]
        %v1657 = vld [vmem:[#allocation5 + $0x2] sm:$0xff]
        %v1658 = vpack.c.bf16 %v1655, %v1655
        %v1659 = vpack.c.bf16 %v1656, %v1656
        %v1660 = vpack.c.bf16 %v1657, %v1657
        %s1661 = scalar_lea.vmem [#allocation10], 768
        %v1662 = vld [vmem:[%s1661] sm:$0xf]
        %v1663 = vld [vmem:[%s1661 + $0x4] sm:$0xf]
        %v1664 = vld [vmem:[%s1661 + $0x8] sm:$0xf]
        %v1665 = vld [vmem:[%s1661 + $0xc] sm:$0xf]
        %v1666 = vld [vmem:[%s1661 + $0x10] sm:$0xf]
        %v1667 = vld [vmem:[%s1661 + $0x14] sm:$0xf]
        %v1668 = vld [vmem:[%s1661 + $0x18] sm:$0xf]
        %v1669 = vld [vmem:[%s1661 + $0x1c] sm:$0xf]
        %v1670 = vld [vmem:[%s1661 + $0x20] sm:$0xf]
        %v1671 = vld [vmem:[%s1661 + $0x24] sm:$0xf]
        %v1672 = vld [vmem:[%s1661 + $0x28] sm:$0xf]
        %v1673 = vld [vmem:[%s1661 + $0x2c] sm:$0xf]
        %v1674 = vld [vmem:[%s1661 + $0x30] sm:$0xf]
        %v1675 = vld [vmem:[%s1661 + $0x34] sm:$0xf]
        %v1676 = vld [vmem:[%s1661 + $0x38] sm:$0xf]
        %v1677 = vld [vmem:[%s1661 + $0x3c] sm:$0xf]
        %v1678 = vld [vmem:[%s1661 + $0x40] sm:$0xf]
        %v1679 = vld [vmem:[%s1661 + $0x44] sm:$0xf]
        %v1680 = vld [vmem:[%s1661 + $0x48] sm:$0xf]
        %v1681 = vld [vmem:[%s1661 + $0x4c] sm:$0xf]
        %v1682 = vld [vmem:[%s1661 + $0x50] sm:$0xf]
        %v1683 = vld [vmem:[%s1661 + $0x54] sm:$0xf]
        %v1684 = vld [vmem:[%s1661 + $0x58] sm:$0xf]
        %v1685 = vld [vmem:[%s1661 + $0x5c] sm:$0xf]
        %v1686 = vld [vmem:[%s1661 + $0x60] sm:$0xf]
        %v1687 = vld [vmem:[%s1661 + $0x64] sm:$0xf]
        %v1688 = vld [vmem:[%s1661 + $0x68] sm:$0xf]
        %v1689 = vld [vmem:[%s1661 + $0x6c] sm:$0xf]
        %v1690 = vld [vmem:[%s1661 + $0x70] sm:$0xf]
        %v1691 = vld [vmem:[%s1661 + $0x74] sm:$0xf]
        %v1692 = vld [vmem:[%s1661 + $0x78] sm:$0xf]
        %v1693 = vld [vmem:[%s1661 + $0x7c] sm:$0xf]
        %v1694 = vld [vmem:[%s1661 + $0x80] sm:$0xf]
        %v1695 = vld [vmem:[%s1661 + $0x84] sm:$0xf]
        %v1696 = vld [vmem:[%s1661 + $0x88] sm:$0xf]
        %v1697 = vld [vmem:[%s1661 + $0x8c] sm:$0xf]
        %v1698 = vld [vmem:[%s1661 + $0x90] sm:$0xf]
        %v1699 = vld [vmem:[%s1661 + $0x94] sm:$0xf]
        %v1700 = vld [vmem:[%s1661 + $0x98] sm:$0xf]
        %v1701 = vld [vmem:[%s1661 + $0x9c] sm:$0xf]
        %v1702 = vld [vmem:[%s1661 + $0xa0] sm:$0xf]
        %v1703 = vld [vmem:[%s1661 + $0xa4] sm:$0xf]
        %v1704 = vld [vmem:[%s1661 + $0xa8] sm:$0xf]
        %v1705 = vld [vmem:[%s1661 + $0xac] sm:$0xf]
        %v1706 = vld [vmem:[%s1661 + $0xb0] sm:$0xf]
        %v1707 = vld [vmem:[%s1661 + $0xb4] sm:$0xf]
        %v1708 = vld [vmem:[%s1661 + $0xb8] sm:$0xf]
        %v1709 = vld [vmem:[%s1661 + $0xbc] sm:$0xf]
        %s1710 = scalar_lea.vmem [#allocation13], 4
        %v1711 = vld [vmem:[%s1710] sm:$0x1]
        %v1713 = vlaneseq
        %v1714 = vshrl.u32 %v1713, 7
        %v1715 = vsub.s32 0, %v1714
        %v1716 = vrot.slane %v1711, %v1715
        %v1766 = vunpack.c.l.b16 %v1662
        %v1767 = vunpack.c.l.b16 %v1663
        %v1768 = vunpack.c.l.b16 %v1664
        %v1769 = vunpack.c.l.b16 %v1665
        %v1770 = vunpack.c.l.b16 %v1666
        %v1771 = vunpack.c.l.b16 %v1667
        %v1772 = vunpack.c.l.b16 %v1668
        %v1773 = vunpack.c.l.b16 %v1669
        %v1774 = vunpack.c.l.b16 %v1670
        %v1775 = vunpack.c.l.b16 %v1671
        %v1776 = vunpack.c.l.b16 %v1672
        %v1777 = vunpack.c.l.b16 %v1673
        %v1778 = vunpack.c.l.b16 %v1674
        %v1779 = vunpack.c.l.b16 %v1675
        %v1780 = vunpack.c.l.b16 %v1676
        %v1781 = vunpack.c.l.b16 %v1677
        %v1782 = vunpack.c.l.b16 %v1678
        %v1783 = vunpack.c.l.b16 %v1679
        %v1784 = vunpack.c.l.b16 %v1680
        %v1785 = vunpack.c.l.b16 %v1681
        %v1786 = vunpack.c.l.b16 %v1682
        %v1787 = vunpack.c.l.b16 %v1683
        %v1788 = vunpack.c.l.b16 %v1684
        %v1789 = vunpack.c.l.b16 %v1685
        %v1790 = vunpack.c.l.b16 %v1686
        %v1791 = vunpack.c.l.b16 %v1687
        %v1792 = vunpack.c.l.b16 %v1688
        %v1793 = vunpack.c.l.b16 %v1689
        %v1794 = vunpack.c.l.b16 %v1690
        %v1795 = vunpack.c.l.b16 %v1691
        %v1796 = vunpack.c.l.b16 %v1692
        %v1797 = vunpack.c.l.b16 %v1693
        %v1798 = vunpack.c.l.b16 %v1694
        %v1799 = vunpack.c.l.b16 %v1695
        %v1800 = vunpack.c.l.b16 %v1696
        %v1801 = vunpack.c.l.b16 %v1697
        %v1802 = vunpack.c.l.b16 %v1698
        %v1803 = vunpack.c.l.b16 %v1699
        %v1804 = vunpack.c.l.b16 %v1700
        %v1805 = vunpack.c.l.b16 %v1701
        %v1806 = vunpack.c.l.b16 %v1702
        %v1807 = vunpack.c.l.b16 %v1703
        %v1808 = vunpack.c.l.b16 %v1704
        %v1809 = vunpack.c.l.b16 %v1705
        %v1810 = vunpack.c.l.b16 %v1706
        %v1811 = vunpack.c.l.b16 %v1707
        %v1812 = vunpack.c.l.b16 %v1708
        %v1813 = vunpack.c.l.b16 %v1709
        %v1814 = vpack.c.b16 %v1767, %v1766
        %v1815 = vpack.c.b16 %v1769, %v1768
        %v1816 = vpack.c.b16 %v1771, %v1770
        %v1817 = vpack.c.b16 %v1773, %v1772
        %v1818 = vpack.c.b16 %v1775, %v1774
        %v1819 = vpack.c.b16 %v1777, %v1776
        %v1820 = vpack.c.b16 %v1779, %v1778
        %v1821 = vpack.c.b16 %v1781, %v1780
        %v1822 = vpack.c.b16 %v1783, %v1782
        %v1823 = vpack.c.b16 %v1785, %v1784
        %v1824 = vpack.c.b16 %v1787, %v1786
        %v1825 = vpack.c.b16 %v1789, %v1788
        %v1826 = vpack.c.b16 %v1791, %v1790
        %v1827 = vpack.c.b16 %v1793, %v1792
        %v1828 = vpack.c.b16 %v1795, %v1794
        %v1829 = vpack.c.b16 %v1797, %v1796
        %v1830 = vpack.c.b16 %v1799, %v1798
        %v1831 = vpack.c.b16 %v1801, %v1800
        %v1832 = vpack.c.b16 %v1803, %v1802
        %v1833 = vpack.c.b16 %v1805, %v1804
        %v1834 = vpack.c.b16 %v1807, %v1806
        %v1835 = vpack.c.b16 %v1809, %v1808
        %v1836 = vpack.c.b16 %v1811, %v1810
        %v1837 = vpack.c.b16 %v1813, %v1812
        %1862 = vmatprep.subr.bf16.mxu0 0
        %1863 = vmatpush1.bf16.msra.mxu0 %v1814
        %1864 = vmatprep.subr.bf16.mxu0 0
        %1865 = vmatpush1.bf16.msra.mxu0 %v1815
        %1866 = vmatprep.subr.bf16.mxu0 0
        %1867 = vmatpush1.bf16.msra.mxu0 %v1816
        %1868 = vmatprep.subr.bf16.mxu0 0
        %1869 = vmatpush1.bf16.msra.mxu0 %v1817
        %1870 = vmatprep.subr.bf16.mxu0 0
        %1871 = vmatpush1.bf16.msra.mxu0 %v1818
        %1872 = vmatprep.subr.bf16.mxu0 0
        %1873 = vmatpush1.bf16.msra.mxu0 %v1819
        %1874 = vmatprep.subr.bf16.mxu0 0
        %1875 = vmatpush1.bf16.msra.mxu0 %v1820
        %1876 = vmatprep.subr.bf16.mxu0 0
        %1877 = vmatpush1.bf16.msra.mxu0 %v1821
        %1878 = vmatprep.subr.bf16.mxu0 0
        %1879 = vmatpush1.bf16.msra.mxu0 %v1822
        %1880 = vmatprep.subr.bf16.mxu0 0
        %1881 = vmatpush1.bf16.msra.mxu0 %v1823
        %1882 = vmatprep.subr.bf16.mxu0 0
        %1883 = vmatpush1.bf16.msra.mxu0 %v1824
        %1884 = vmatprep.subr.bf16.mxu0 0
        %1885 = vmatpush1.bf16.msra.mxu0 %v1825
        %1886 = vmatprep.subr.bf16.mxu0 0
        %1887 = vmatpush1.bf16.msra.mxu0 %v1826
        %1888 = vmatprep.subr.bf16.mxu0 0
        %1889 = vmatpush1.bf16.msra.mxu0 %v1827
        %1890 = vmatprep.subr.bf16.mxu0 0
        %1891 = vmatpush1.bf16.msra.mxu0 %v1828
        %1892 = vmatprep.subr.bf16.mxu0 0
        %1893 = vmatpush1.bf16.msra.mxu0 %v1829
        %1894 = vmatprep.mubr.bf16.mxu0 %v1659
        %1895 = vmatmul.mubr.bf16.gmra.mrb[0].mxu0 %v1658
        %v1896 = vpop.f32.mrb[0].mxu0
        %v1897 = vadd.f32 %v1716, %v1896
        %v1898 = vpop.f32.mrb[0].mxu0
        %v1899 = vpop.f32.mrb[0].mxu0
        %v1900 = vpop.f32.mrb[0].mxu0
        %1901 = vdwg.mxu0
        %1902 = vmatprep.subr.bf16.mxu0 0
        %1903 = vmatpush1.bf16.msra.mxu0 %v1830
        %1904 = vmatprep.subr.bf16.mxu0 0
        %1905 = vmatpush1.bf16.msra.mxu0 %v1831
        %1906 = vmatprep.subr.bf16.mxu0 0
        %1907 = vmatpush1.bf16.msra.mxu0 %v1832
        %1908 = vmatprep.subr.bf16.mxu0 0
        %1909 = vmatpush1.bf16.msra.mxu0 %v1833
        %1910 = vmatprep.subr.bf16.mxu0 0
        %1911 = vmatpush1.bf16.msra.mxu0 %v1834
        %1912 = vmatprep.subr.bf16.mxu0 0
        %1913 = vmatpush1.bf16.msra.mxu0 %v1835
        %1914 = vmatprep.subr.bf16.mxu0 0
        %1915 = vmatpush1.bf16.msra.mxu0 %v1836
        %1916 = vmatprep.subr.bf16.mxu0 0
        %1917 = vmatpush1.bf16.msra.mxu0 %v1837
        %1918 = vmatprep.subr.bf16.mxu0 0
        %1919 = vmatpush1.bf16.msra.mxu0 0
        %1920 = vmatprep.subr.bf16.mxu0 0
        %1921 = vmatpush1.bf16.msra.mxu0 0
        %1922 = vmatprep.subr.bf16.mxu0 0
        %1923 = vmatpush1.bf16.msra.mxu0 0
        %1924 = vmatprep.subr.bf16.mxu0 0
        %1925 = vmatpush1.bf16.msra.mxu0 0
        %1926 = vmatprep.subr.bf16.mxu0 0
        %1927 = vmatpush1.bf16.msra.mxu0 0
        %1928 = vmatprep.subr.bf16.mxu0 0
        %1929 = vmatpush1.bf16.msra.mxu0 0
        %1930 = vmatprep.subr.bf16.mxu0 0
        %1931 = vmatpush1.bf16.msra.mxu0 0
        %1932 = vmatprep.subr.bf16.mxu0 0
        %1933 = vmatpush1.bf16.msra.mxu0 0
        %1934 = vmatprep.mubr.bf16.mxu0 0
        %1935 = vmatmul.mubr.bf16.gmra.mrb[0].mxu0 %v1660
        %v1936 = vpop.f32.mrb[0].mxu0
        %v1937 = vadd.f32 %v1897, %v1936
        %v1938 = vpop.f32.mrb[0].mxu0
        %v1939 = vpop.f32.mrb[0].mxu0
        %v1940 = vpop.f32.mrb[0].mxu0
        %1941 = vdwg.mxu0
        %v1942 = vmax.f32 %v1937, 0.0
        %1943 = vst [vmem:[%s359] sm:$0xff] %v1942
        %1944 = vst [vmem:[#allocation6 + $0x1] sm:$0xff] %v1942
        %v1945 = vld [vmem:[#allocation6] sm:$0xff]
        %v1946 = vld [vmem:[#allocation6 + $0x1] sm:$0xff]
        %v1947 = vld [vmem:[#allocation6 + $0x2] sm:$0xff]
        %v1948 = vpack.c.bf16 %v1945, %v1945
        %v1949 = vpack.c.bf16 %v1946, %v1946
        %v1950 = vpack.c.bf16 %v1947, %v1947
        %s1951 = scalar_lea.vmem [#allocation10], 1728
        %v1952 = vld [vmem:[%s1951] sm:$0xf]
        %v1953 = vld [vmem:[%s1951 + $0x4] sm:$0xf]
        %v1954 = vld [vmem:[%s1951 + $0x8] sm:$0xf]
        %v1955 = vld [vmem:[%s1951 + $0xc] sm:$0xf]
        %v1956 = vld [vmem:[%s1951 + $0x10] sm:$0xf]
        %v1957 = vld [vmem:[%s1951 + $0x14] sm:$0xf]
        %v1958 = vld [vmem:[%s1951 + $0x18] sm:$0xf]
        %v1959 = vld [vmem:[%s1951 + $0x1c] sm:$0xf]
        %v1960 = vld [vmem:[%s1951 + $0x20] sm:$0xf]
        %v1961 = vld [vmem:[%s1951 + $0x24] sm:$0xf]
        %v1962 = vld [vmem:[%s1951 + $0x28] sm:$0xf]
        %v1963 = vld [vmem:[%s1951 + $0x2c] sm:$0xf]
        %v1964 = vld [vmem:[%s1951 + $0x30] sm:$0xf]
        %v1965 = vld [vmem:[%s1951 + $0x34] sm:$0xf]
        %v1966 = vld [vmem:[%s1951 + $0x38] sm:$0xf]
        %v1967 = vld [vmem:[%s1951 + $0x3c] sm:$0xf]
        %v1968 = vld [vmem:[%s1951 + $0x40] sm:$0xf]
        %v1969 = vld [vmem:[%s1951 + $0x44] sm:$0xf]
        %v1970 = vld [vmem:[%s1951 + $0x48] sm:$0xf]
        %v1971 = vld [vmem:[%s1951 + $0x4c] sm:$0xf]
        %v1972 = vld [vmem:[%s1951 + $0x50] sm:$0xf]
        %v1973 = vld [vmem:[%s1951 + $0x54] sm:$0xf]
        %v1974 = vld [vmem:[%s1951 + $0x58] sm:$0xf]
        %v1975 = vld [vmem:[%s1951 + $0x5c] sm:$0xf]
        %v1976 = vld [vmem:[%s1951 + $0x60] sm:$0xf]
        %v1977 = vld [vmem:[%s1951 + $0x64] sm:$0xf]
        %v1978 = vld [vmem:[%s1951 + $0x68] sm:$0xf]
        %v1979 = vld [vmem:[%s1951 + $0x6c] sm:$0xf]
        %v1980 = vld [vmem:[%s1951 + $0x70] sm:$0xf]
        %v1981 = vld [vmem:[%s1951 + $0x74] sm:$0xf]
        %v1982 = vld [vmem:[%s1951 + $0x78] sm:$0xf]
        %v1983 = vld [vmem:[%s1951 + $0x7c] sm:$0xf]
        %v1984 = vld [vmem:[%s1951 + $0x80] sm:$0xf]
        %v1985 = vld [vmem:[%s1951 + $0x84] sm:$0xf]
        %v1986 = vld [vmem:[%s1951 + $0x88] sm:$0xf]
        %v1987 = vld [vmem:[%s1951 + $0x8c] sm:$0xf]
        %v1988 = vld [vmem:[%s1951 + $0x90] sm:$0xf]
        %v1989 = vld [vmem:[%s1951 + $0x94] sm:$0xf]
        %v1990 = vld [vmem:[%s1951 + $0x98] sm:$0xf]
        %v1991 = vld [vmem:[%s1951 + $0x9c] sm:$0xf]
        %v1992 = vld [vmem:[%s1951 + $0xa0] sm:$0xf]
        %v1993 = vld [vmem:[%s1951 + $0xa4] sm:$0xf]
        %v1994 = vld [vmem:[%s1951 + $0xa8] sm:$0xf]
        %v1995 = vld [vmem:[%s1951 + $0xac] sm:$0xf]
        %v1996 = vld [vmem:[%s1951 + $0xb0] sm:$0xf]
        %v1997 = vld [vmem:[%s1951 + $0xb4] sm:$0xf]
        %v1998 = vld [vmem:[%s1951 + $0xb8] sm:$0xf]
        %v1999 = vld [vmem:[%s1951 + $0xbc] sm:$0xf]
        %s2000 = scalar_lea.vmem [#allocation13], 9
        %v2001 = vld [vmem:[%s2000] sm:$0x1]
        %v2003 = vlaneseq
        %v2004 = vshrl.u32 %v2003, 7
        %v2005 = vsub.s32 0, %v2004
        %v2006 = vrot.slane %v2001, %v2005
        %v2056 = vunpack.c.l.b16 %v1952
        %v2057 = vunpack.c.l.b16 %v1953
        %v2058 = vunpack.c.l.b16 %v1954
        %v2059 = vunpack.c.l.b16 %v1955
        %v2060 = vunpack.c.l.b16 %v1956
        %v2061 = vunpack.c.l.b16 %v1957
        %v2062 = vunpack.c.l.b16 %v1958
        %v2063 = vunpack.c.l.b16 %v1959
        %v2064 = vunpack.c.l.b16 %v1960
        %v2065 = vunpack.c.l.b16 %v1961
        %v2066 = vunpack.c.l.b16 %v1962
        %v2067 = vunpack.c.l.b16 %v1963
        %v2068 = vunpack.c.l.b16 %v1964
        %v2069 = vunpack.c.l.b16 %v1965
        %v2070 = vunpack.c.l.b16 %v1966
        %v2071 = vunpack.c.l.b16 %v1967
        %v2072 = vunpack.c.l.b16 %v1968
        %v2073 = vunpack.c.l.b16 %v1969
        %v2074 = vunpack.c.l.b16 %v1970
        %v2075 = vunpack.c.l.b16 %v1971
        %v2076 = vunpack.c.l.b16 %v1972
        %v2077 = vunpack.c.l.b16 %v1973
        %v2078 = vunpack.c.l.b16 %v1974
        %v2079 = vunpack.c.l.b16 %v1975
        %v2080 = vunpack.c.l.b16 %v1976
        %v2081 = vunpack.c.l.b16 %v1977
        %v2082 = vunpack.c.l.b16 %v1978
        %v2083 = vunpack.c.l.b16 %v1979
        %v2084 = vunpack.c.l.b16 %v1980
        %v2085 = vunpack.c.l.b16 %v1981
        %v2086 = vunpack.c.l.b16 %v1982
        %v2087 = vunpack.c.l.b16 %v1983
        %v2088 = vunpack.c.l.b16 %v1984
        %v2089 = vunpack.c.l.b16 %v1985
        %v2090 = vunpack.c.l.b16 %v1986
        %v2091 = vunpack.c.l.b16 %v1987
        %v2092 = vunpack.c.l.b16 %v1988
        %v2093 = vunpack.c.l.b16 %v1989
        %v2094 = vunpack.c.l.b16 %v1990
        %v2095 = vunpack.c.l.b16 %v1991
        %v2096 = vunpack.c.l.b16 %v1992
        %v2097 = vunpack.c.l.b16 %v1993
        %v2098 = vunpack.c.l.b16 %v1994
        %v2099 = vunpack.c.l.b16 %v1995
        %v2100 = vunpack.c.l.b16 %v1996
        %v2101 = vunpack.c.l.b16 %v1997
        %v2102 = vunpack.c.l.b16 %v1998
        %v2103 = vunpack.c.l.b16 %v1999
        %v2104 = vpack.c.b16 %v2057, %v2056
        %v2105 = vpack.c.b16 %v2059, %v2058
        %v2106 = vpack.c.b16 %v2061, %v2060
        %v2107 = vpack.c.b16 %v2063, %v2062
        %v2108 = vpack.c.b16 %v2065, %v2064
        %v2109 = vpack.c.b16 %v2067, %v2066
        %v2110 = vpack.c.b16 %v2069, %v2068
        %v2111 = vpack.c.b16 %v2071, %v2070
        %v2112 = vpack.c.b16 %v2073, %v2072
        %v2113 = vpack.c.b16 %v2075, %v2074
        %v2114 = vpack.c.b16 %v2077, %v2076
        %v2115 = vpack.c.b16 %v2079, %v2078
        %v2116 = vpack.c.b16 %v2081, %v2080
        %v2117 = vpack.c.b16 %v2083, %v2082
        %v2118 = vpack.c.b16 %v2085, %v2084
        %v2119 = vpack.c.b16 %v2087, %v2086
        %v2120 = vpack.c.b16 %v2089, %v2088
        %v2121 = vpack.c.b16 %v2091, %v2090
        %v2122 = vpack.c.b16 %v2093, %v2092
        %v2123 = vpack.c.b16 %v2095, %v2094
        %v2124 = vpack.c.b16 %v2097, %v2096
        %v2125 = vpack.c.b16 %v2099, %v2098
        %v2126 = vpack.c.b16 %v2101, %v2100
        %v2127 = vpack.c.b16 %v2103, %v2102
        %2152 = vmatprep.subr.bf16.mxu0 0
        %2153 = vmatpush1.bf16.msra.mxu0 %v2104
        %2154 = vmatprep.subr.bf16.mxu0 0
        %2155 = vmatpush1.bf16.msra.mxu0 %v2105
        %2156 = vmatprep.subr.bf16.mxu0 0
        %2157 = vmatpush1.bf16.msra.mxu0 %v2106
        %2158 = vmatprep.subr.bf16.mxu0 0
        %2159 = vmatpush1.bf16.msra.mxu0 %v2107
        %2160 = vmatprep.subr.bf16.mxu0 0
        %2161 = vmatpush1.bf16.msra.mxu0 %v2108
        %2162 = vmatprep.subr.bf16.mxu0 0
        %2163 = vmatpush1.bf16.msra.mxu0 %v2109
        %2164 = vmatprep.subr.bf16.mxu0 0
        %2165 = vmatpush1.bf16.msra.mxu0 %v2110
        %2166 = vmatprep.subr.bf16.mxu0 0
        %2167 = vmatpush1.bf16.msra.mxu0 %v2111
        %2168 = vmatprep.subr.bf16.mxu0 0
        %2169 = vmatpush1.bf16.msra.mxu0 %v2112
        %2170 = vmatprep.subr.bf16.mxu0 0
        %2171 = vmatpush1.bf16.msra.mxu0 %v2113
        %2172 = vmatprep.subr.bf16.mxu0 0
        %2173 = vmatpush1.bf16.msra.mxu0 %v2114
        %2174 = vmatprep.subr.bf16.mxu0 0
        %2175 = vmatpush1.bf16.msra.mxu0 %v2115
        %2176 = vmatprep.subr.bf16.mxu0 0
        %2177 = vmatpush1.bf16.msra.mxu0 %v2116
        %2178 = vmatprep.subr.bf16.mxu0 0
        %2179 = vmatpush1.bf16.msra.mxu0 %v2117
        %2180 = vmatprep.subr.bf16.mxu0 0
        %2181 = vmatpush1.bf16.msra.mxu0 %v2118
        %2182 = vmatprep.subr.bf16.mxu0 0
        %2183 = vmatpush1.bf16.msra.mxu0 %v2119
        %2184 = vmatprep.mubr.bf16.mxu0 %v1949
        %2185 = vmatmul.mubr.bf16.gmra.mrb[0].mxu0 %v1948
        %v2186 = vpop.f32.mrb[0].mxu0
        %v2187 = vadd.f32 %v2006, %v2186
        %v2188 = vpop.f32.mrb[0].mxu0
        %v2189 = vpop.f32.mrb[0].mxu0
        %v2190 = vpop.f32.mrb[0].mxu0
        %2191 = vdwg.mxu0
        %2192 = vmatprep.subr.bf16.mxu0 0
        %2193 = vmatpush1.bf16.msra.mxu0 %v2120
        %2194 = vmatprep.subr.bf16.mxu0 0
        %2195 = vmatpush1.bf16.msra.mxu0 %v2121
        %2196 = vmatprep.subr.bf16.mxu0 0
        %2197 = vmatpush1.bf16.msra.mxu0 %v2122
        %2198 = vmatprep.subr.bf16.mxu0 0
        %2199 = vmatpush1.bf16.msra.mxu0 %v2123
        %2200 = vmatprep.subr.bf16.mxu0 0
        %2201 = vmatpush1.bf16.msra.mxu0 %v2124
        %2202 = vmatprep.subr.bf16.mxu0 0
        %2203 = vmatpush1.bf16.msra.mxu0 %v2125
        %2204 = vmatprep.subr.bf16.mxu0 0
        %2205 = vmatpush1.bf16.msra.mxu0 %v2126
        %2206 = vmatprep.subr.bf16.mxu0 0
        %2207 = vmatpush1.bf16.msra.mxu0 %v2127
        %2208 = vmatprep.subr.bf16.mxu0 0
        %2209 = vmatpush1.bf16.msra.mxu0 0
        %2210 = vmatprep.subr.bf16.mxu0 0
        %2211 = vmatpush1.bf16.msra.mxu0 0
        %2212 = vmatprep.subr.bf16.mxu0 0
        %2213 = vmatpush1.bf16.msra.mxu0 0
        %2214 = vmatprep.subr.bf16.mxu0 0
        %2215 = vmatpush1.bf16.msra.mxu0 0
        %2216 = vmatprep.subr.bf16.mxu0 0
        %2217 = vmatpush1.bf16.msra.mxu0 0
        %2218 = vmatprep.subr.bf16.mxu0 0
        %2219 = vmatpush1.bf16.msra.mxu0 0
        %2220 = vmatprep.subr.bf16.mxu0 0
        %2221 = vmatpush1.bf16.msra.mxu0 0
        %2222 = vmatprep.subr.bf16.mxu0 0
        %2223 = vmatpush1.bf16.msra.mxu0 0
        %2224 = vmatprep.mubr.bf16.mxu0 0
        %2225 = vmatmul.mubr.bf16.gmra.mrb[0].mxu0 %v1950
        %v2226 = vpop.f32.mrb[0].mxu0
        %v2227 = vadd.f32 %v2187, %v2226
        %v2228 = vpop.f32.mrb[0].mxu0
        %v2229 = vpop.f32.mrb[0].mxu0
        %v2230 = vpop.f32.mrb[0].mxu0
        %2231 = vdwg.mxu0
        %v2232 = vmax.f32 %v2227, 0.0
        %s2233 = scalar_lea.vmem [#allocation10], 1920
        %v2234 = vld [vmem:[%s2233] sm:$0xf]
        %v2235 = vld [vmem:[%s2233 + $0x4] sm:$0xf]
        %v2236 = vld [vmem:[%s2233 + $0x8] sm:$0xf]
        %v2237 = vld [vmem:[%s2233 + $0xc] sm:$0xf]
        %v2238 = vld [vmem:[%s2233 + $0x10] sm:$0xf]
        %v2239 = vld [vmem:[%s2233 + $0x14] sm:$0xf]
        %v2240 = vld [vmem:[%s2233 + $0x18] sm:$0xf]
        %v2241 = vld [vmem:[%s2233 + $0x1c] sm:$0xf]
        %v2242 = vld [vmem:[%s2233 + $0x20] sm:$0xf]
        %v2243 = vld [vmem:[%s2233 + $0x24] sm:$0xf]
        %v2244 = vld [vmem:[%s2233 + $0x28] sm:$0xf]
        %v2245 = vld [vmem:[%s2233 + $0x2c] sm:$0xf]
        %v2246 = vld [vmem:[%s2233 + $0x30] sm:$0xf]
        %v2247 = vld [vmem:[%s2233 + $0x34] sm:$0xf]
        %v2248 = vld [vmem:[%s2233 + $0x38] sm:$0xf]
        %v2249 = vld [vmem:[%s2233 + $0x3c] sm:$0xf]
        %v2250 = vld [vmem:[%s2233 + $0x40] sm:$0xf]
        %v2251 = vld [vmem:[%s2233 + $0x44] sm:$0xf]
        %v2252 = vld [vmem:[%s2233 + $0x48] sm:$0xf]
        %v2253 = vld [vmem:[%s2233 + $0x4c] sm:$0xf]
        %v2254 = vld [vmem:[%s2233 + $0x50] sm:$0xf]
        %v2255 = vld [vmem:[%s2233 + $0x54] sm:$0xf]
        %v2256 = vld [vmem:[%s2233 + $0x58] sm:$0xf]
        %v2257 = vld [vmem:[%s2233 + $0x5c] sm:$0xf]
        %v2258 = vld [vmem:[%s2233 + $0x60] sm:$0xf]
        %v2259 = vld [vmem:[%s2233 + $0x64] sm:$0xf]
        %v2260 = vld [vmem:[%s2233 + $0x68] sm:$0xf]
        %v2261 = vld [vmem:[%s2233 + $0x6c] sm:$0xf]
        %v2262 = vld [vmem:[%s2233 + $0x70] sm:$0xf]
        %v2263 = vld [vmem:[%s2233 + $0x74] sm:$0xf]
        %v2264 = vld [vmem:[%s2233 + $0x78] sm:$0xf]
        %v2265 = vld [vmem:[%s2233 + $0x7c] sm:$0xf]
        %v2266 = vld [vmem:[%s2233 + $0x80] sm:$0xf]
        %v2267 = vld [vmem:[%s2233 + $0x84] sm:$0xf]
        %v2268 = vld [vmem:[%s2233 + $0x88] sm:$0xf]
        %v2269 = vld [vmem:[%s2233 + $0x8c] sm:$0xf]
        %v2270 = vld [vmem:[%s2233 + $0x90] sm:$0xf]
        %v2271 = vld [vmem:[%s2233 + $0x94] sm:$0xf]
        %v2272 = vld [vmem:[%s2233 + $0x98] sm:$0xf]
        %v2273 = vld [vmem:[%s2233 + $0x9c] sm:$0xf]
        %v2274 = vld [vmem:[%s2233 + $0xa0] sm:$0xf]
        %v2275 = vld [vmem:[%s2233 + $0xa4] sm:$0xf]
        %v2276 = vld [vmem:[%s2233 + $0xa8] sm:$0xf]
        %v2277 = vld [vmem:[%s2233 + $0xac] sm:$0xf]
        %v2278 = vld [vmem:[%s2233 + $0xb0] sm:$0xf]
        %v2279 = vld [vmem:[%s2233 + $0xb4] sm:$0xf]
        %v2280 = vld [vmem:[%s2233 + $0xb8] sm:$0xf]
        %v2281 = vld [vmem:[%s2233 + $0xbc] sm:$0xf]
        %s2282 = scalar_lea.vmem [#allocation13], 10
        %v2283 = vld [vmem:[%s2282] sm:$0x1]
        %v2285 = vlaneseq
        %v2286 = vshrl.u32 %v2285, 7
        %v2287 = vsub.s32 0, %v2286
        %v2288 = vrot.slane %v2283, %v2287
        %v2338 = vunpack.c.l.b16 %v2234
        %v2339 = vunpack.c.l.b16 %v2235
        %v2340 = vunpack.c.l.b16 %v2236
        %v2341 = vunpack.c.l.b16 %v2237
        %v2342 = vunpack.c.l.b16 %v2238
        %v2343 = vunpack.c.l.b16 %v2239
        %v2344 = vunpack.c.l.b16 %v2240
        %v2345 = vunpack.c.l.b16 %v2241
        %v2346 = vunpack.c.l.b16 %v2242
        %v2347 = vunpack.c.l.b16 %v2243
        %v2348 = vunpack.c.l.b16 %v2244
        %v2349 = vunpack.c.l.b16 %v2245
        %v2350 = vunpack.c.l.b16 %v2246
        %v2351 = vunpack.c.l.b16 %v2247
        %v2352 = vunpack.c.l.b16 %v2248
        %v2353 = vunpack.c.l.b16 %v2249
        %v2354 = vunpack.c.l.b16 %v2250
        %v2355 = vunpack.c.l.b16 %v2251
        %v2356 = vunpack.c.l.b16 %v2252
        %v2357 = vunpack.c.l.b16 %v2253
        %v2358 = vunpack.c.l.b16 %v2254
        %v2359 = vunpack.c.l.b16 %v2255
        %v2360 = vunpack.c.l.b16 %v2256
        %v2361 = vunpack.c.l.b16 %v2257
        %v2362 = vunpack.c.l.b16 %v2258
        %v2363 = vunpack.c.l.b16 %v2259
        %v2364 = vunpack.c.l.b16 %v2260
        %v2365 = vunpack.c.l.b16 %v2261
        %v2366 = vunpack.c.l.b16 %v2262
        %v2367 = vunpack.c.l.b16 %v2263
        %v2368 = vunpack.c.l.b16 %v2264
        %v2369 = vunpack.c.l.b16 %v2265
        %v2370 = vunpack.c.l.b16 %v2266
        %v2371 = vunpack.c.l.b16 %v2267
        %v2372 = vunpack.c.l.b16 %v2268
        %v2373 = vunpack.c.l.b16 %v2269
        %v2374 = vunpack.c.l.b16 %v2270
        %v2375 = vunpack.c.l.b16 %v2271
        %v2376 = vunpack.c.l.b16 %v2272
        %v2377 = vunpack.c.l.b16 %v2273
        %v2378 = vunpack.c.l.b16 %v2274
        %v2379 = vunpack.c.l.b16 %v2275
        %v2380 = vunpack.c.l.b16 %v2276
        %v2381 = vunpack.c.l.b16 %v2277
        %v2382 = vunpack.c.l.b16 %v2278
        %v2383 = vunpack.c.l.b16 %v2279
        %v2384 = vunpack.c.l.b16 %v2280
        %v2385 = vunpack.c.l.b16 %v2281
        %v2386 = vpack.c.b16 %v2339, %v2338
        %v2387 = vpack.c.b16 %v2341, %v2340
        %v2388 = vpack.c.b16 %v2343, %v2342
        %v2389 = vpack.c.b16 %v2345, %v2344
        %v2390 = vpack.c.b16 %v2347, %v2346
        %v2391 = vpack.c.b16 %v2349, %v2348
        %v2392 = vpack.c.b16 %v2351, %v2350
        %v2393 = vpack.c.b16 %v2353, %v2352
        %v2394 = vpack.c.b16 %v2355, %v2354
        %v2395 = vpack.c.b16 %v2357, %v2356
        %v2396 = vpack.c.b16 %v2359, %v2358
        %v2397 = vpack.c.b16 %v2361, %v2360
        %v2398 = vpack.c.b16 %v2363, %v2362
        %v2399 = vpack.c.b16 %v2365, %v2364
        %v2400 = vpack.c.b16 %v2367, %v2366
        %v2401 = vpack.c.b16 %v2369, %v2368
        %v2402 = vpack.c.b16 %v2371, %v2370
        %v2403 = vpack.c.b16 %v2373, %v2372
        %v2404 = vpack.c.b16 %v2375, %v2374
        %v2405 = vpack.c.b16 %v2377, %v2376
        %v2406 = vpack.c.b16 %v2379, %v2378
        %v2407 = vpack.c.b16 %v2381, %v2380
        %v2408 = vpack.c.b16 %v2383, %v2382
        %v2409 = vpack.c.b16 %v2385, %v2384
        %2434 = vmatprep.subr.bf16.mxu0 0
        %2435 = vmatpush1.bf16.msra.mxu0 %v2386
        %2436 = vmatprep.subr.bf16.mxu0 0
        %2437 = vmatpush1.bf16.msra.mxu0 %v2387
        %2438 = vmatprep.subr.bf16.mxu0 0
        %2439 = vmatpush1.bf16.msra.mxu0 %v2388
        %2440 = vmatprep.subr.bf16.mxu0 0
        %2441 = vmatpush1.bf16.msra.mxu0 %v2389
        %2442 = vmatprep.subr.bf16.mxu0 0
        %2443 = vmatpush1.bf16.msra.mxu0 %v2390
        %2444 = vmatprep.subr.bf16.mxu0 0
        %2445 = vmatpush1.bf16.msra.mxu0 %v2391
        %2446 = vmatprep.subr.bf16.mxu0 0
        %2447 = vmatpush1.bf16.msra.mxu0 %v2392
        %2448 = vmatprep.subr.bf16.mxu0 0
        %2449 = vmatpush1.bf16.msra.mxu0 %v2393
        %2450 = vmatprep.subr.bf16.mxu0 0
        %2451 = vmatpush1.bf16.msra.mxu0 %v2394
        %2452 = vmatprep.subr.bf16.mxu0 0
        %2453 = vmatpush1.bf16.msra.mxu0 %v2395
        %2454 = vmatprep.subr.bf16.mxu0 0
        %2455 = vmatpush1.bf16.msra.mxu0 %v2396
        %2456 = vmatprep.subr.bf16.mxu0 0
        %2457 = vmatpush1.bf16.msra.mxu0 %v2397
        %2458 = vmatprep.subr.bf16.mxu0 0
        %2459 = vmatpush1.bf16.msra.mxu0 %v2398
        %2460 = vmatprep.subr.bf16.mxu0 0
        %2461 = vmatpush1.bf16.msra.mxu0 %v2399
        %2462 = vmatprep.subr.bf16.mxu0 0
        %2463 = vmatpush1.bf16.msra.mxu0 %v2400
        %2464 = vmatprep.subr.bf16.mxu0 0
        %2465 = vmatpush1.bf16.msra.mxu0 %v2401
        %2466 = vmatprep.mubr.bf16.mxu0 %v1949
        %2467 = vmatmul.mubr.bf16.gmra.mrb[0].mxu0 %v1948
        %v2468 = vpop.f32.mrb[0].mxu0
        %v2469 = vadd.f32 %v2288, %v2468
        %v2470 = vpop.f32.mrb[0].mxu0
        %v2471 = vpop.f32.mrb[0].mxu0
        %v2472 = vpop.f32.mrb[0].mxu0
        %2473 = vdwg.mxu0
        %2474 = vmatprep.subr.bf16.mxu0 0
        %2475 = vmatpush1.bf16.msra.mxu0 %v2402
        %2476 = vmatprep.subr.bf16.mxu0 0
        %2477 = vmatpush1.bf16.msra.mxu0 %v2403
        %2478 = vmatprep.subr.bf16.mxu0 0
        %2479 = vmatpush1.bf16.msra.mxu0 %v2404
        %2480 = vmatprep.subr.bf16.mxu0 0
        %2481 = vmatpush1.bf16.msra.mxu0 %v2405
        %2482 = vmatprep.subr.bf16.mxu0 0
        %2483 = vmatpush1.bf16.msra.mxu0 %v2406
        %2484 = vmatprep.subr.bf16.mxu0 0
        %2485 = vmatpush1.bf16.msra.mxu0 %v2407
        %2486 = vmatprep.subr.bf16.mxu0 0
        %2487 = vmatpush1.bf16.msra.mxu0 %v2408
        %2488 = vmatprep.subr.bf16.mxu0 0
        %2489 = vmatpush1.bf16.msra.mxu0 %v2409
        %2490 = vmatprep.subr.bf16.mxu0 0
        %2491 = vmatpush1.bf16.msra.mxu0 0
        %2492 = vmatprep.subr.bf16.mxu0 0
        %2493 = vmatpush1.bf16.msra.mxu0 0
        %2494 = vmatprep.subr.bf16.mxu0 0
        %2495 = vmatpush1.bf16.msra.mxu0 0
        %2496 = vmatprep.subr.bf16.mxu0 0
        %2497 = vmatpush1.bf16.msra.mxu0 0
        %2498 = vmatprep.subr.bf16.mxu0 0
        %2499 = vmatpush1.bf16.msra.mxu0 0
        %2500 = vmatprep.subr.bf16.mxu0 0
        %2501 = vmatpush1.bf16.msra.mxu0 0
        %2502 = vmatprep.subr.bf16.mxu0 0
        %2503 = vmatpush1.bf16.msra.mxu0 0
        %2504 = vmatprep.subr.bf16.mxu0 0
        %2505 = vmatpush1.bf16.msra.mxu0 0
        %2506 = vmatprep.mubr.bf16.mxu0 0
        %2507 = vmatmul.mubr.bf16.gmra.mrb[0].mxu0 %v1950
        %v2508 = vpop.f32.mrb[0].mxu0
        %v2509 = vadd.f32 %v2469, %v2508
        %v2510 = vpop.f32.mrb[0].mxu0
        %v2511 = vpop.f32.mrb[0].mxu0
        %v2512 = vpop.f32.mrb[0].mxu0
        %2513 = vdwg.mxu0
        %v2514 = vmax.f32 %v2509, 0.0
        %s2515 = scalar_lea.vmem [#allocation8], 1
        %2516 = vst [vmem:[%s2515] ss:$2 sm:$0xff] %v2232
        %s2517 = scalar_lea.vmem [#allocation8], 2
        %2518 = vst [vmem:[%s2517] ss:$2 sm:$0xff] %v2514
        %v2519 = vld [vmem:[#allocation4] sm:$0xff]
        %v2520 = vld [vmem:[#allocation4 + $0x8] sm:$0xff]
        %v2521 = vld [vmem:[#allocation4 + $0x1] sm:$0xff]
        %v2522 = vld [vmem:[#allocation4 + $0x9] sm:$0xff]
        %v2523 = vld [vmem:[#allocation4 + $0x2] sm:$0xff]
        %v2524 = vld [vmem:[#allocation4 + $0xa] sm:$0xff]
        %v2525 = vpack.c.bf16 %v2520, %v2519
        %v2526 = vpack.c.bf16 %v2522, %v2521
        %v2527 = vpack.c.bf16 %v2524, %v2523
        %s2528 = scalar_lea.vmem [#allocation10], 1344
        %v2529 = vld [vmem:[%s2528] sm:$0xf]
        %v2530 = vld [vmem:[%s2528 + $0x4] sm:$0xf]
        %v2531 = vld [vmem:[%s2528 + $0x8] sm:$0xf]
        %v2532 = vld [vmem:[%s2528 + $0xc] sm:$0xf]
        %v2533 = vld [vmem:[%s2528 + $0x10] sm:$0xf]
        %v2534 = vld [vmem:[%s2528 + $0x14] sm:$0xf]
        %v2535 = vld [vmem:[%s2528 + $0x18] sm:$0xf]
        %v2536 = vld [vmem:[%s2528 + $0x1c] sm:$0xf]
        %v2537 = vld [vmem:[%s2528 + $0x20] sm:$0xf]
        %v2538 = vld [vmem:[%s2528 + $0x24] sm:$0xf]
        %v2539 = vld [vmem:[%s2528 + $0x28] sm:$0xf]
        %v2540 = vld [vmem:[%s2528 + $0x2c] sm:$0xf]
        %v2541 = vld [vmem:[%s2528 + $0x30] sm:$0xf]
        %v2542 = vld [vmem:[%s2528 + $0x34] sm:$0xf]
        %v2543 = vld [vmem:[%s2528 + $0x38] sm:$0xf]
        %v2544 = vld [vmem:[%s2528 + $0x3c] sm:$0xf]
        %v2545 = vld [vmem:[%s2528 + $0x40] sm:$0xf]
        %v2546 = vld [vmem:[%s2528 + $0x44] sm:$0xf]
        %v2547 = vld [vmem:[%s2528 + $0x48] sm:$0xf]
        %v2548 = vld [vmem:[%s2528 + $0x4c] sm:$0xf]
        %v2549 = vld [vmem:[%s2528 + $0x50] sm:$0xf]
        %v2550 = vld [vmem:[%s2528 + $0x54] sm:$0xf]
        %v2551 = vld [vmem:[%s2528 + $0x58] sm:$0xf]
        %v2552 = vld [vmem:[%s2528 + $0x5c] sm:$0xf]
        %v2553 = vld [vmem:[%s2528 + $0x60] sm:$0xf]
        %v2554 = vld [vmem:[%s2528 + $0x64] sm:$0xf]
        %v2555 = vld [vmem:[%s2528 + $0x68] sm:$0xf]
        %v2556 = vld [vmem:[%s2528 + $0x6c] sm:$0xf]
        %v2557 = vld [vmem:[%s2528 + $0x70] sm:$0xf]
        %v2558 = vld [vmem:[%s2528 + $0x74] sm:$0xf]
        %v2559 = vld [vmem:[%s2528 + $0x78] sm:$0xf]
        %v2560 = vld [vmem:[%s2528 + $0x7c] sm:$0xf]
        %v2561 = vld [vmem:[%s2528 + $0x80] sm:$0xf]
        %v2562 = vld [vmem:[%s2528 + $0x84] sm:$0xf]
        %v2563 = vld [vmem:[%s2528 + $0x88] sm:$0xf]
        %v2564 = vld [vmem:[%s2528 + $0x8c] sm:$0xf]
        %v2565 = vld [vmem:[%s2528 + $0x90] sm:$0xf]
        %v2566 = vld [vmem:[%s2528 + $0x94] sm:$0xf]
        %v2567 = vld [vmem:[%s2528 + $0x98] sm:$0xf]
        %v2568 = vld [vmem:[%s2528 + $0x9c] sm:$0xf]
        %v2569 = vld [vmem:[%s2528 + $0xa0] sm:$0xf]
        %v2570 = vld [vmem:[%s2528 + $0xa4] sm:$0xf]
        %v2571 = vld [vmem:[%s2528 + $0xa8] sm:$0xf]
        %v2572 = vld [vmem:[%s2528 + $0xac] sm:$0xf]
        %v2573 = vld [vmem:[%s2528 + $0xb0] sm:$0xf]
        %v2574 = vld [vmem:[%s2528 + $0xb4] sm:$0xf]
        %v2575 = vld [vmem:[%s2528 + $0xb8] sm:$0xf]
        %v2576 = vld [vmem:[%s2528 + $0xbc] sm:$0xf]
        %s2577 = scalar_lea.vmem [#allocation13], 7
        %v2578 = vld [vmem:[%s2577] sm:$0x1]
        %v2580 = vlaneseq
        %v2581 = vshrl.u32 %v2580, 7
        %v2582 = vsub.s32 0, %v2581
        %v2583 = vrot.slane %v2578, %v2582
        %v2633 = vunpack.c.l.b16 %v2529
        %v2634 = vunpack.c.l.b16 %v2530
        %v2635 = vunpack.c.l.b16 %v2531
        %v2636 = vunpack.c.l.b16 %v2532
        %v2637 = vunpack.c.l.b16 %v2533
        %v2638 = vunpack.c.l.b16 %v2534
        %v2639 = vunpack.c.l.b16 %v2535
        %v2640 = vunpack.c.l.b16 %v2536
        %v2641 = vunpack.c.l.b16 %v2537
        %v2642 = vunpack.c.l.b16 %v2538
        %v2643 = vunpack.c.l.b16 %v2539
        %v2644 = vunpack.c.l.b16 %v2540
        %v2645 = vunpack.c.l.b16 %v2541
        %v2646 = vunpack.c.l.b16 %v2542
        %v2647 = vunpack.c.l.b16 %v2543
        %v2648 = vunpack.c.l.b16 %v2544
        %v2649 = vunpack.c.l.b16 %v2545
        %v2650 = vunpack.c.l.b16 %v2546
        %v2651 = vunpack.c.l.b16 %v2547
        %v2652 = vunpack.c.l.b16 %v2548
        %v2653 = vunpack.c.l.b16 %v2549
        %v2654 = vunpack.c.l.b16 %v2550
        %v2655 = vunpack.c.l.b16 %v2551
        %v2656 = vunpack.c.l.b16 %v2552
        %v2657 = vunpack.c.l.b16 %v2553
        %v2658 = vunpack.c.l.b16 %v2554
        %v2659 = vunpack.c.l.b16 %v2555
        %v2660 = vunpack.c.l.b16 %v2556
        %v2661 = vunpack.c.l.b16 %v2557
        %v2662 = vunpack.c.l.b16 %v2558
        %v2663 = vunpack.c.l.b16 %v2559
        %v2664 = vunpack.c.l.b16 %v2560
        %v2665 = vunpack.c.l.b16 %v2561
        %v2666 = vunpack.c.l.b16 %v2562
        %v2667 = vunpack.c.l.b16 %v2563
        %v2668 = vunpack.c.l.b16 %v2564
        %v2669 = vunpack.c.l.b16 %v2565
        %v2670 = vunpack.c.l.b16 %v2566
        %v2671 = vunpack.c.l.b16 %v2567
        %v2672 = vunpack.c.l.b16 %v2568
        %v2673 = vunpack.c.l.b16 %v2569
        %v2674 = vunpack.c.l.b16 %v2570
        %v2675 = vunpack.c.l.b16 %v2571
        %v2676 = vunpack.c.l.b16 %v2572
        %v2677 = vunpack.c.l.b16 %v2573
        %v2678 = vunpack.c.l.b16 %v2574
        %v2679 = vunpack.c.l.b16 %v2575
        %v2680 = vunpack.c.l.b16 %v2576
        %v2681 = vpack.c.b16 %v2634, %v2633
        %v2682 = vpack.c.b16 %v2636, %v2635
        %v2683 = vpack.c.b16 %v2638, %v2637
        %v2684 = vpack.c.b16 %v2640, %v2639
        %v2685 = vpack.c.b16 %v2642, %v2641
        %v2686 = vpack.c.b16 %v2644, %v2643
        %v2687 = vpack.c.b16 %v2646, %v2645
        %v2688 = vpack.c.b16 %v2648, %v2647
        %v2689 = vpack.c.b16 %v2650, %v2649
        %v2690 = vpack.c.b16 %v2652, %v2651
        %v2691 = vpack.c.b16 %v2654, %v2653
        %v2692 = vpack.c.b16 %v2656, %v2655
        %v2693 = vpack.c.b16 %v2658, %v2657
        %v2694 = vpack.c.b16 %v2660, %v2659
        %v2695 = vpack.c.b16 %v2662, %v2661
        %v2696 = vpack.c.b16 %v2664, %v2663
        %v2697 = vpack.c.b16 %v2666, %v2665
        %v2698 = vpack.c.b16 %v2668, %v2667
        %v2699 = vpack.c.b16 %v2670, %v2669
        %v2700 = vpack.c.b16 %v2672, %v2671
        %v2701 = vpack.c.b16 %v2674, %v2673
        %v2702 = vpack.c.b16 %v2676, %v2675
        %v2703 = vpack.c.b16 %v2678, %v2677
        %v2704 = vpack.c.b16 %v2680, %v2679
        %2729 = vmatprep.subr.bf16.mxu0 0
        %2730 = vmatpush1.bf16.msra.mxu0 %v2681
        %2731 = vmatprep.subr.bf16.mxu0 0
        %2732 = vmatpush1.bf16.msra.mxu0 %v2682
        %2733 = vmatprep.subr.bf16.mxu0 0
        %2734 = vmatpush1.bf16.msra.mxu0 %v2683
        %2735 = vmatprep.subr.bf16.mxu0 0
        %2736 = vmatpush1.bf16.msra.mxu0 %v2684
        %2737 = vmatprep.subr.bf16.mxu0 0
        %2738 = vmatpush1.bf16.msra.mxu0 %v2685
        %2739 = vmatprep.subr.bf16.mxu0 0
        %2740 = vmatpush1.bf16.msra.mxu0 %v2686
        %2741 = vmatprep.subr.bf16.mxu0 0
        %2742 = vmatpush1.bf16.msra.mxu0 %v2687
        %2743 = vmatprep.subr.bf16.mxu0 0
        %2744 = vmatpush1.bf16.msra.mxu0 %v2688
        %2745 = vmatprep.subr.bf16.mxu0 0
        %2746 = vmatpush1.bf16.msra.mxu0 %v2689
        %2747 = vmatprep.subr.bf16.mxu0 0
        %2748 = vmatpush1.bf16.msra.mxu0 %v2690
        %2749 = vmatprep.subr.bf16.mxu0 0
        %2750 = vmatpush1.bf16.msra.mxu0 %v2691
        %2751 = vmatprep.subr.bf16.mxu0 0
        %2752 = vmatpush1.bf16.msra.mxu0 %v2692
        %2753 = vmatprep.subr.bf16.mxu0 0
        %2754 = vmatpush1.bf16.msra.mxu0 %v2693
        %2755 = vmatprep.subr.bf16.mxu0 0
        %2756 = vmatpush1.bf16.msra.mxu0 %v2694
        %2757 = vmatprep.subr.bf16.mxu0 0
        %2758 = vmatpush1.bf16.msra.mxu0 %v2695
        %2759 = vmatprep.subr.bf16.mxu0 0
        %2760 = vmatpush1.bf16.msra.mxu0 %v2696
        %2761 = vmatprep.mubr.bf16.mxu0 %v2526
        %2762 = vmatmul.mubr.bf16.gmra.mrb[0].mxu0 %v2525
        %v2763 = vpop.f32.mrb[0].mxu0
        %v2764 = vadd.f32 %v2583, %v2763
        %v2765 = vpop.f32.mrb[0].mxu0
        %v2766 = vpop.f32.mrb[0].mxu0
        %v2767 = vadd.f32 %v2583, %v2766
        %v2768 = vpop.f32.mrb[0].mxu0
        %2769 = vdwg.mxu0
        %2770 = vmatprep.subr.bf16.mxu0 0
        %2771 = vmatpush1.bf16.msra.mxu0 %v2697
        %2772 = vmatprep.subr.bf16.mxu0 0
        %2773 = vmatpush1.bf16.msra.mxu0 %v2698
        %2774 = vmatprep.subr.bf16.mxu0 0
        %2775 = vmatpush1.bf16.msra.mxu0 %v2699
        %2776 = vmatprep.subr.bf16.mxu0 0
        %2777 = vmatpush1.bf16.msra.mxu0 %v2700
        %2778 = vmatprep.subr.bf16.mxu0 0
        %2779 = vmatpush1.bf16.msra.mxu0 %v2701
        %2780 = vmatprep.subr.bf16.mxu0 0
        %2781 = vmatpush1.bf16.msra.mxu0 %v2702
        %2782 = vmatprep.subr.bf16.mxu0 0
        %2783 = vmatpush1.bf16.msra.mxu0 %v2703
        %2784 = vmatprep.subr.bf16.mxu0 0
        %2785 = vmatpush1.bf16.msra.mxu0 %v2704
        %2786 = vmatprep.subr.bf16.mxu0 0
        %2787 = vmatpush1.bf16.msra.mxu0 0
        %2788 = vmatprep.subr.bf16.mxu0 0
        %2789 = vmatpush1.bf16.msra.mxu0 0
        %2790 = vmatprep.subr.bf16.mxu0 0
        %2791 = vmatpush1.bf16.msra.mxu0 0
        %2792 = vmatprep.subr.bf16.mxu0 0
        %2793 = vmatpush1.bf16.msra.mxu0 0
        %2794 = vmatprep.subr.bf16.mxu0 0
        %2795 = vmatpush1.bf16.msra.mxu0 0
        %2796 = vmatprep.subr.bf16.mxu0 0
        %2797 = vmatpush1.bf16.msra.mxu0 0
        %2798 = vmatprep.subr.bf16.mxu0 0
        %2799 = vmatpush1.bf16.msra.mxu0 0
        %2800 = vmatprep.subr.bf16.mxu0 0
        %2801 = vmatpush1.bf16.msra.mxu0 0
        %2802 = vmatprep.mubr.bf16.mxu0 0
        %2803 = vmatmul.mubr.bf16.gmra.mrb[0].mxu0 %v2527
        %v2804 = vpop.f32.mrb[0].mxu0
        %v2805 = vadd.f32 %v2764, %v2804
        %v2806 = vpop.f32.mrb[0].mxu0
        %v2807 = vpop.f32.mrb[0].mxu0
        %v2808 = vadd.f32 %v2767, %v2807
        %v2809 = vpop.f32.mrb[0].mxu0
        %2810 = vdwg.mxu0
        %v2811 = vmax.f32 %v2805, 0.0
        %v2812 = vmax.f32 %v2808, 0.0
        %v2813 = vld [vmem:[#allocation8 + $0x1] sm:$0xff]
        %v2814 = vld [vmem:[#allocation8 + $0x9] sm:$0xff]
        %v2815 = vadd.f32 %v2813, %v2811
        %v2816 = vadd.f32 %v2814, %v2812
        %2817 = vst [vmem:[#allocation8 + $0x1] sm:$0xff] %v2815
        %2818 = vst [vmem:[#allocation8 + $0x9] sm:$0xff] %v2816
        %v2819 = vld [vmem:[#allocation8] sm:$0xff]
        %v2820 = vld [vmem:[#allocation8 + $0x8] sm:$0xff]
        %v2821 = vld [vmem:[#allocation8 + $0x1] sm:$0xff]
        %v2822 = vld [vmem:[#allocation8 + $0x9] sm:$0xff]
        %v2823 = vld [vmem:[#allocation8 + $0x2] sm:$0xff]
        %v2824 = vld [vmem:[#allocation8 + $0xa] sm:$0xff]
        %v2825 = vpack.c.bf16 %v2820, %v2819
        %v2826 = vpack.c.bf16 %v2822, %v2821
        %v2827 = vpack.c.bf16 %v2824, %v2823
        %s2828 = scalar_lea.vmem [#allocation10], 960
        %v2829 = vld [vmem:[%s2828] sm:$0xf]
        %v2830 = vld [vmem:[%s2828 + $0x4] sm:$0xf]
        %v2831 = vld [vmem:[%s2828 + $0x8] sm:$0xf]
        %v2832 = vld [vmem:[%s2828 + $0xc] sm:$0xf]
        %v2833 = vld [vmem:[%s2828 + $0x10] sm:$0xf]
        %v2834 = vld [vmem:[%s2828 + $0x14] sm:$0xf]
        %v2835 = vld [vmem:[%s2828 + $0x18] sm:$0xf]
        %v2836 = vld [vmem:[%s2828 + $0x1c] sm:$0xf]
        %v2837 = vld [vmem:[%s2828 + $0x20] sm:$0xf]
        %v2838 = vld [vmem:[%s2828 + $0x24] sm:$0xf]
        %v2839 = vld [vmem:[%s2828 + $0x28] sm:$0xf]
        %v2840 = vld [vmem:[%s2828 + $0x2c] sm:$0xf]
        %v2841 = vld [vmem:[%s2828 + $0x30] sm:$0xf]
        %v2842 = vld [vmem:[%s2828 + $0x34] sm:$0xf]
        %v2843 = vld [vmem:[%s2828 + $0x38] sm:$0xf]
        %v2844 = vld [vmem:[%s2828 + $0x3c] sm:$0xf]
        %v2845 = vld [vmem:[%s2828 + $0x40] sm:$0xf]
        %v2846 = vld [vmem:[%s2828 + $0x44] sm:$0xf]
        %v2847 = vld [vmem:[%s2828 + $0x48] sm:$0xf]
        %v2848 = vld [vmem:[%s2828 + $0x4c] sm:$0xf]
        %v2849 = vld [vmem:[%s2828 + $0x50] sm:$0xf]
        %v2850 = vld [vmem:[%s2828 + $0x54] sm:$0xf]
        %v2851 = vld [vmem:[%s2828 + $0x58] sm:$0xf]
        %v2852 = vld [vmem:[%s2828 + $0x5c] sm:$0xf]
        %v2853 = vld [vmem:[%s2828 + $0x60] sm:$0xf]
        %v2854 = vld [vmem:[%s2828 + $0x64] sm:$0xf]
        %v2855 = vld [vmem:[%s2828 + $0x68] sm:$0xf]
        %v2856 = vld [vmem:[%s2828 + $0x6c] sm:$0xf]
        %v2857 = vld [vmem:[%s2828 + $0x70] sm:$0xf]
        %v2858 = vld [vmem:[%s2828 + $0x74] sm:$0xf]
        %v2859 = vld [vmem:[%s2828 + $0x78] sm:$0xf]
        %v2860 = vld [vmem:[%s2828 + $0x7c] sm:$0xf]
        %v2861 = vld [vmem:[%s2828 + $0x80] sm:$0xf]
        %v2862 = vld [vmem:[%s2828 + $0x84] sm:$0xf]
        %v2863 = vld [vmem:[%s2828 + $0x88] sm:$0xf]
        %v2864 = vld [vmem:[%s2828 + $0x8c] sm:$0xf]
        %v2865 = vld [vmem:[%s2828 + $0x90] sm:$0xf]
        %v2866 = vld [vmem:[%s2828 + $0x94] sm:$0xf]
        %v2867 = vld [vmem:[%s2828 + $0x98] sm:$0xf]
        %v2868 = vld [vmem:[%s2828 + $0x9c] sm:$0xf]
        %v2869 = vld [vmem:[%s2828 + $0xa0] sm:$0xf]
        %v2870 = vld [vmem:[%s2828 + $0xa4] sm:$0xf]
        %v2871 = vld [vmem:[%s2828 + $0xa8] sm:$0xf]
        %v2872 = vld [vmem:[%s2828 + $0xac] sm:$0xf]
        %v2873 = vld [vmem:[%s2828 + $0xb0] sm:$0xf]
        %v2874 = vld [vmem:[%s2828 + $0xb4] sm:$0xf]
        %v2875 = vld [vmem:[%s2828 + $0xb8] sm:$0xf]
        %v2876 = vld [vmem:[%s2828 + $0xbc] sm:$0xf]
        %s2877 = scalar_lea.vmem [#allocation13], 5
        %v2878 = vld [vmem:[%s2877] sm:$0x1]
        %v2880 = vlaneseq
        %v2881 = vshrl.u32 %v2880, 7
        %v2882 = vsub.s32 0, %v2881
        %v2883 = vrot.slane %v2878, %v2882
        %v2933 = vunpack.c.l.b16 %v2829
        %v2934 = vunpack.c.l.b16 %v2830
        %v2935 = vunpack.c.l.b16 %v2831
        %v2936 = vunpack.c.l.b16 %v2832
        %v2937 = vunpack.c.l.b16 %v2833
        %v2938 = vunpack.c.l.b16 %v2834
        %v2939 = vunpack.c.l.b16 %v2835
        %v2940 = vunpack.c.l.b16 %v2836
        %v2941 = vunpack.c.l.b16 %v2837
        %v2942 = vunpack.c.l.b16 %v2838
        %v2943 = vunpack.c.l.b16 %v2839
        %v2944 = vunpack.c.l.b16 %v2840
        %v2945 = vunpack.c.l.b16 %v2841
        %v2946 = vunpack.c.l.b16 %v2842
        %v2947 = vunpack.c.l.b16 %v2843
        %v2948 = vunpack.c.l.b16 %v2844
        %v2949 = vunpack.c.l.b16 %v2845
        %v2950 = vunpack.c.l.b16 %v2846
        %v2951 = vunpack.c.l.b16 %v2847
        %v2952 = vunpack.c.l.b16 %v2848
        %v2953 = vunpack.c.l.b16 %v2849
        %v2954 = vunpack.c.l.b16 %v2850
        %v2955 = vunpack.c.l.b16 %v2851
        %v2956 = vunpack.c.l.b16 %v2852
        %v2957 = vunpack.c.l.b16 %v2853
        %v2958 = vunpack.c.l.b16 %v2854
        %v2959 = vunpack.c.l.b16 %v2855
        %v2960 = vunpack.c.l.b16 %v2856
        %v2961 = vunpack.c.l.b16 %v2857
        %v2962 = vunpack.c.l.b16 %v2858
        %v2963 = vunpack.c.l.b16 %v2859
        %v2964 = vunpack.c.l.b16 %v2860
        %v2965 = vunpack.c.l.b16 %v2861
        %v2966 = vunpack.c.l.b16 %v2862
        %v2967 = vunpack.c.l.b16 %v2863
        %v2968 = vunpack.c.l.b16 %v2864
        %v2969 = vunpack.c.l.b16 %v2865
        %v2970 = vunpack.c.l.b16 %v2866
        %v2971 = vunpack.c.l.b16 %v2867
        %v2972 = vunpack.c.l.b16 %v2868
        %v2973 = vunpack.c.l.b16 %v2869
        %v2974 = vunpack.c.l.b16 %v2870
        %v2975 = vunpack.c.l.b16 %v2871
        %v2976 = vunpack.c.l.b16 %v2872
        %v2977 = vunpack.c.l.b16 %v2873
        %v2978 = vunpack.c.l.b16 %v2874
        %v2979 = vunpack.c.l.b16 %v2875
        %v2980 = vunpack.c.l.b16 %v2876
        %v2981 = vpack.c.b16 %v2934, %v2933
        %v2982 = vpack.c.b16 %v2936, %v2935
        %v2983 = vpack.c.b16 %v2938, %v2937
        %v2984 = vpack.c.b16 %v2940, %v2939
        %v2985 = vpack.c.b16 %v2942, %v2941
        %v2986 = vpack.c.b16 %v2944, %v2943
        %v2987 = vpack.c.b16 %v2946, %v2945
        %v2988 = vpack.c.b16 %v2948, %v2947
        %v2989 = vpack.c.b16 %v2950, %v2949
        %v2990 = vpack.c.b16 %v2952, %v2951
        %v2991 = vpack.c.b16 %v2954, %v2953
        %v2992 = vpack.c.b16 %v2956, %v2955
        %v2993 = vpack.c.b16 %v2958, %v2957
        %v2994 = vpack.c.b16 %v2960, %v2959
        %v2995 = vpack.c.b16 %v2962, %v2961
        %v2996 = vpack.c.b16 %v2964, %v2963
        %v2997 = vpack.c.b16 %v2966, %v2965
        %v2998 = vpack.c.b16 %v2968, %v2967
        %v2999 = vpack.c.b16 %v2970, %v2969
        %v3000 = vpack.c.b16 %v2972, %v2971
        %v3001 = vpack.c.b16 %v2974, %v2973
        %v3002 = vpack.c.b16 %v2976, %v2975
        %v3003 = vpack.c.b16 %v2978, %v2977
        %v3004 = vpack.c.b16 %v2980, %v2979
        %3029 = vmatprep.subr.bf16.mxu0 0
        %3030 = vmatpush1.bf16.msra.mxu0 %v2981
        %3031 = vmatprep.subr.bf16.mxu0 0
        %3032 = vmatpush1.bf16.msra.mxu0 %v2982
        %3033 = vmatprep.subr.bf16.mxu0 0
        %3034 = vmatpush1.bf16.msra.mxu0 %v2983
        %3035 = vmatprep.subr.bf16.mxu0 0
        %3036 = vmatpush1.bf16.msra.mxu0 %v2984
        %3037 = vmatprep.subr.bf16.mxu0 0
        %3038 = vmatpush1.bf16.msra.mxu0 %v2985
        %3039 = vmatprep.subr.bf16.mxu0 0
        %3040 = vmatpush1.bf16.msra.mxu0 %v2986
        %3041 = vmatprep.subr.bf16.mxu0 0
        %3042 = vmatpush1.bf16.msra.mxu0 %v2987
        %3043 = vmatprep.subr.bf16.mxu0 0
        %3044 = vmatpush1.bf16.msra.mxu0 %v2988
        %3045 = vmatprep.subr.bf16.mxu0 0
        %3046 = vmatpush1.bf16.msra.mxu0 %v2989
        %3047 = vmatprep.subr.bf16.mxu0 0
        %3048 = vmatpush1.bf16.msra.mxu0 %v2990
        %3049 = vmatprep.subr.bf16.mxu0 0
        %3050 = vmatpush1.bf16.msra.mxu0 %v2991
        %3051 = vmatprep.subr.bf16.mxu0 0
        %3052 = vmatpush1.bf16.msra.mxu0 %v2992
        %3053 = vmatprep.subr.bf16.mxu0 0
        %3054 = vmatpush1.bf16.msra.mxu0 %v2993
        %3055 = vmatprep.subr.bf16.mxu0 0
        %3056 = vmatpush1.bf16.msra.mxu0 %v2994
        %3057 = vmatprep.subr.bf16.mxu0 0
        %3058 = vmatpush1.bf16.msra.mxu0 %v2995
        %3059 = vmatprep.subr.bf16.mxu0 0
        %3060 = vmatpush1.bf16.msra.mxu0 %v2996
        %3061 = vmatprep.mubr.bf16.mxu0 %v2826
        %3062 = vmatmul.mubr.bf16.gmra.mrb[0].mxu0 %v2825
        %v3063 = vpop.f32.mrb[0].mxu0
        %v3064 = vadd.f32 %v2883, %v3063
        %v3065 = vpop.f32.mrb[0].mxu0
        %v3066 = vpop.f32.mrb[0].mxu0
        %v3067 = vadd.f32 %v2883, %v3066
        %v3068 = vpop.f32.mrb[0].mxu0
        %3069 = vdwg.mxu0
        %3070 = vmatprep.subr.bf16.mxu0 0
        %3071 = vmatpush1.bf16.msra.mxu0 %v2997
        %3072 = vmatprep.subr.bf16.mxu0 0
        %3073 = vmatpush1.bf16.msra.mxu0 %v2998
        %3074 = vmatprep.subr.bf16.mxu0 0
        %3075 = vmatpush1.bf16.msra.mxu0 %v2999
        %3076 = vmatprep.subr.bf16.mxu0 0
        %3077 = vmatpush1.bf16.msra.mxu0 %v3000
        %3078 = vmatprep.subr.bf16.mxu0 0
        %3079 = vmatpush1.bf16.msra.mxu0 %v3001
        %3080 = vmatprep.subr.bf16.mxu0 0
        %3081 = vmatpush1.bf16.msra.mxu0 %v3002
        %3082 = vmatprep.subr.bf16.mxu0 0
        %3083 = vmatpush1.bf16.msra.mxu0 %v3003
        %3084 = vmatprep.subr.bf16.mxu0 0
        %3085 = vmatpush1.bf16.msra.mxu0 %v3004
        %3086 = vmatprep.subr.bf16.mxu0 0
        %3087 = vmatpush1.bf16.msra.mxu0 0
        %3088 = vmatprep.subr.bf16.mxu0 0
        %3089 = vmatpush1.bf16.msra.mxu0 0
        %3090 = vmatprep.subr.bf16.mxu0 0
        %3091 = vmatpush1.bf16.msra.mxu0 0
        %3092 = vmatprep.subr.bf16.mxu0 0
        %3093 = vmatpush1.bf16.msra.mxu0 0
        %3094 = vmatprep.subr.bf16.mxu0 0
        %3095 = vmatpush1.bf16.msra.mxu0 0
        %3096 = vmatprep.subr.bf16.mxu0 0
        %3097 = vmatpush1.bf16.msra.mxu0 0
        %3098 = vmatprep.subr.bf16.mxu0 0
        %3099 = vmatpush1.bf16.msra.mxu0 0
        %3100 = vmatprep.subr.bf16.mxu0 0
        %3101 = vmatpush1.bf16.msra.mxu0 0
        %3102 = vmatprep.mubr.bf16.mxu0 0
        %3103 = vmatmul.mubr.bf16.gmra.mrb[0].mxu0 %v2827
        %v3104 = vpop.f32.mrb[0].mxu0
        %v3105 = vadd.f32 %v3064, %v3104
        %v3106 = vpop.f32.mrb[0].mxu0
        %v3107 = vpop.f32.mrb[0].mxu0
        %v3108 = vadd.f32 %v3067, %v3107
        %v3109 = vpop.f32.mrb[0].mxu0
        %3110 = vdwg.mxu0
        %v3111 = vmax.f32 %v3105, 0.0
        %v3112 = vmax.f32 %v3108, 0.0
        %3113 = vst [vmem:[%s366] sm:$0xff] %v3111
        %3114 = vst [vmem:[%s366 + $0x8] sm:$0xff] %v3112
        %3115 = vst [vmem:[#allocation7 + $0x1] sm:$0xff] %v3111
        %3116 = vst [vmem:[#allocation7 + $0x9] sm:$0xff] %v3112
        %v3117 = vld [vmem:[#allocation7] sm:$0xff]
        %v3118 = vld [vmem:[#allocation7 + $0x8] sm:$0xff]
        %v3119 = vld [vmem:[#allocation7 + $0x1] sm:$0xff]
        %v3120 = vld [vmem:[#allocation7 + $0x9] sm:$0xff]
        %v3121 = vld [vmem:[#allocation7 + $0x2] sm:$0xff]
        %v3122 = vld [vmem:[#allocation7 + $0xa] sm:$0xff]
        %v3123 = vpack.c.bf16 %v3118, %v3117
        %v3124 = vpack.c.bf16 %v3120, %v3119
        %v3125 = vpack.c.bf16 %v3122, %v3121
        %s3126 = scalar_lea.vmem [#allocation10], 2112
        %v3127 = vld [vmem:[%s3126] sm:$0xf]
        %v3128 = vld [vmem:[%s3126 + $0x4] sm:$0xf]
        %v3129 = vld [vmem:[%s3126 + $0x8] sm:$0xf]
        %v3130 = vld [vmem:[%s3126 + $0xc] sm:$0xf]
        %v3131 = vld [vmem:[%s3126 + $0x10] sm:$0xf]
        %v3132 = vld [vmem:[%s3126 + $0x14] sm:$0xf]
        %v3133 = vld [vmem:[%s3126 + $0x18] sm:$0xf]
        %v3134 = vld [vmem:[%s3126 + $0x1c] sm:$0xf]
        %v3135 = vld [vmem:[%s3126 + $0x20] sm:$0xf]
        %v3136 = vld [vmem:[%s3126 + $0x24] sm:$0xf]
        %v3137 = vld [vmem:[%s3126 + $0x28] sm:$0xf]
        %v3138 = vld [vmem:[%s3126 + $0x2c] sm:$0xf]
        %v3139 = vld [vmem:[%s3126 + $0x30] sm:$0xf]
        %v3140 = vld [vmem:[%s3126 + $0x34] sm:$0xf]
        %v3141 = vld [vmem:[%s3126 + $0x38] sm:$0xf]
        %v3142 = vld [vmem:[%s3126 + $0x3c] sm:$0xf]
        %v3143 = vld [vmem:[%s3126 + $0x40] sm:$0xf]
        %v3144 = vld [vmem:[%s3126 + $0x44] sm:$0xf]
        %v3145 = vld [vmem:[%s3126 + $0x48] sm:$0xf]
        %v3146 = vld [vmem:[%s3126 + $0x4c] sm:$0xf]
        %v3147 = vld [vmem:[%s3126 + $0x50] sm:$0xf]
        %v3148 = vld [vmem:[%s3126 + $0x54] sm:$0xf]
        %v3149 = vld [vmem:[%s3126 + $0x58] sm:$0xf]
        %v3150 = vld [vmem:[%s3126 + $0x5c] sm:$0xf]
        %v3151 = vld [vmem:[%s3126 + $0x60] sm:$0xf]
        %v3152 = vld [vmem:[%s3126 + $0x64] sm:$0xf]
        %v3153 = vld [vmem:[%s3126 + $0x68] sm:$0xf]
        %v3154 = vld [vmem:[%s3126 + $0x6c] sm:$0xf]
        %v3155 = vld [vmem:[%s3126 + $0x70] sm:$0xf]
        %v3156 = vld [vmem:[%s3126 + $0x74] sm:$0xf]
        %v3157 = vld [vmem:[%s3126 + $0x78] sm:$0xf]
        %v3158 = vld [vmem:[%s3126 + $0x7c] sm:$0xf]
        %v3159 = vld [vmem:[%s3126 + $0x80] sm:$0xf]
        %v3160 = vld [vmem:[%s3126 + $0x84] sm:$0xf]
        %v3161 = vld [vmem:[%s3126 + $0x88] sm:$0xf]
        %v3162 = vld [vmem:[%s3126 + $0x8c] sm:$0xf]
        %v3163 = vld [vmem:[%s3126 + $0x90] sm:$0xf]
        %v3164 = vld [vmem:[%s3126 + $0x94] sm:$0xf]
        %v3165 = vld [vmem:[%s3126 + $0x98] sm:$0xf]
        %v3166 = vld [vmem:[%s3126 + $0x9c] sm:$0xf]
        %v3167 = vld [vmem:[%s3126 + $0xa0] sm:$0xf]
        %v3168 = vld [vmem:[%s3126 + $0xa4] sm:$0xf]
        %v3169 = vld [vmem:[%s3126 + $0xa8] sm:$0xf]
        %v3170 = vld [vmem:[%s3126 + $0xac] sm:$0xf]
        %v3171 = vld [vmem:[%s3126 + $0xb0] sm:$0xf]
        %v3172 = vld [vmem:[%s3126 + $0xb4] sm:$0xf]
        %v3173 = vld [vmem:[%s3126 + $0xb8] sm:$0xf]
        %v3174 = vld [vmem:[%s3126 + $0xbc] sm:$0xf]
        %s3175 = scalar_lea.vmem [#allocation13], 11
        %v3176 = vld [vmem:[%s3175] sm:$0x1]
        %v3178 = vlaneseq
        %v3179 = vshrl.u32 %v3178, 7
        %v3180 = vsub.s32 0, %v3179
        %v3181 = vrot.slane %v3176, %v3180
        %v3231 = vunpack.c.l.b16 %v3127
        %v3232 = vunpack.c.l.b16 %v3128
        %v3233 = vunpack.c.l.b16 %v3129
        %v3234 = vunpack.c.l.b16 %v3130
        %v3235 = vunpack.c.l.b16 %v3131
        %v3236 = vunpack.c.l.b16 %v3132
        %v3237 = vunpack.c.l.b16 %v3133
        %v3238 = vunpack.c.l.b16 %v3134
        %v3239 = vunpack.c.l.b16 %v3135
        %v3240 = vunpack.c.l.b16 %v3136
        %v3241 = vunpack.c.l.b16 %v3137
        %v3242 = vunpack.c.l.b16 %v3138
        %v3243 = vunpack.c.l.b16 %v3139
        %v3244 = vunpack.c.l.b16 %v3140
        %v3245 = vunpack.c.l.b16 %v3141
        %v3246 = vunpack.c.l.b16 %v3142
        %v3247 = vunpack.c.l.b16 %v3143
        %v3248 = vunpack.c.l.b16 %v3144
        %v3249 = vunpack.c.l.b16 %v3145
        %v3250 = vunpack.c.l.b16 %v3146
        %v3251 = vunpack.c.l.b16 %v3147
        %v3252 = vunpack.c.l.b16 %v3148
        %v3253 = vunpack.c.l.b16 %v3149
        %v3254 = vunpack.c.l.b16 %v3150
        %v3255 = vunpack.c.l.b16 %v3151
        %v3256 = vunpack.c.l.b16 %v3152
        %v3257 = vunpack.c.l.b16 %v3153
        %v3258 = vunpack.c.l.b16 %v3154
        %v3259 = vunpack.c.l.b16 %v3155
        %v3260 = vunpack.c.l.b16 %v3156
        %v3261 = vunpack.c.l.b16 %v3157
        %v3262 = vunpack.c.l.b16 %v3158
        %v3263 = vunpack.c.l.b16 %v3159
        %v3264 = vunpack.c.l.b16 %v3160
        %v3265 = vunpack.c.l.b16 %v3161
        %v3266 = vunpack.c.l.b16 %v3162
        %v3267 = vunpack.c.l.b16 %v3163
        %v3268 = vunpack.c.l.b16 %v3164
        %v3269 = vunpack.c.l.b16 %v3165
        %v3270 = vunpack.c.l.b16 %v3166
        %v3271 = vunpack.c.l.b16 %v3167
        %v3272 = vunpack.c.l.b16 %v3168
        %v3273 = vunpack.c.l.b16 %v3169
        %v3274 = vunpack.c.l.b16 %v3170
        %v3275 = vunpack.c.l.b16 %v3171
        %v3276 = vunpack.c.l.b16 %v3172
        %v3277 = vunpack.c.l.b16 %v3173
        %v3278 = vunpack.c.l.b16 %v3174
        %v3279 = vpack.c.b16 %v3232, %v3231
        %v3280 = vpack.c.b16 %v3234, %v3233
        %v3281 = vpack.c.b16 %v3236, %v3235
        %v3282 = vpack.c.b16 %v3238, %v3237
        %v3283 = vpack.c.b16 %v3240, %v3239
        %v3284 = vpack.c.b16 %v3242, %v3241
        %v3285 = vpack.c.b16 %v3244, %v3243
        %v3286 = vpack.c.b16 %v3246, %v3245
        %v3287 = vpack.c.b16 %v3248, %v3247
        %v3288 = vpack.c.b16 %v3250, %v3249
        %v3289 = vpack.c.b16 %v3252, %v3251
        %v3290 = vpack.c.b16 %v3254, %v3253
        %v3291 = vpack.c.b16 %v3256, %v3255
        %v3292 = vpack.c.b16 %v3258, %v3257
        %v3293 = vpack.c.b16 %v3260, %v3259
        %v3294 = vpack.c.b16 %v3262, %v3261
        %v3295 = vpack.c.b16 %v3264, %v3263
        %v3296 = vpack.c.b16 %v3266, %v3265
        %v3297 = vpack.c.b16 %v3268, %v3267
        %v3298 = vpack.c.b16 %v3270, %v3269
        %v3299 = vpack.c.b16 %v3272, %v3271
        %v3300 = vpack.c.b16 %v3274, %v3273
        %v3301 = vpack.c.b16 %v3276, %v3275
        %v3302 = vpack.c.b16 %v3278, %v3277
        %3327 = vmatprep.subr.bf16.mxu0 0
        %3328 = vmatpush1.bf16.msra.mxu0 %v3279
        %3329 = vmatprep.subr.bf16.mxu0 0
        %3330 = vmatpush1.bf16.msra.mxu0 %v3280
        %3331 = vmatprep.subr.bf16.mxu0 0
        %3332 = vmatpush1.bf16.msra.mxu0 %v3281
        %3333 = vmatprep.subr.bf16.mxu0 0
        %3334 = vmatpush1.bf16.msra.mxu0 %v3282
        %3335 = vmatprep.subr.bf16.mxu0 0
        %3336 = vmatpush1.bf16.msra.mxu0 %v3283
        %3337 = vmatprep.subr.bf16.mxu0 0
        %3338 = vmatpush1.bf16.msra.mxu0 %v3284
        %3339 = vmatprep.subr.bf16.mxu0 0
        %3340 = vmatpush1.bf16.msra.mxu0 %v3285
        %3341 = vmatprep.subr.bf16.mxu0 0
        %3342 = vmatpush1.bf16.msra.mxu0 %v3286
        %3343 = vmatprep.subr.bf16.mxu0 0
        %3344 = vmatpush1.bf16.msra.mxu0 %v3287
        %3345 = vmatprep.subr.bf16.mxu0 0
        %3346 = vmatpush1.bf16.msra.mxu0 %v3288
        %3347 = vmatprep.subr.bf16.mxu0 0
        %3348 = vmatpush1.bf16.msra.mxu0 %v3289
        %3349 = vmatprep.subr.bf16.mxu0 0
        %3350 = vmatpush1.bf16.msra.mxu0 %v3290
        %3351 = vmatprep.subr.bf16.mxu0 0
        %3352 = vmatpush1.bf16.msra.mxu0 %v3291
        %3353 = vmatprep.subr.bf16.mxu0 0
        %3354 = vmatpush1.bf16.msra.mxu0 %v3292
        %3355 = vmatprep.subr.bf16.mxu0 0
        %3356 = vmatpush1.bf16.msra.mxu0 %v3293
        %3357 = vmatprep.subr.bf16.mxu0 0
        %3358 = vmatpush1.bf16.msra.mxu0 %v3294
        %3359 = vmatprep.mubr.bf16.mxu0 %v3124
        %3360 = vmatmul.mubr.bf16.gmra.mrb[0].mxu0 %v3123
        %v3361 = vpop.f32.mrb[0].mxu0
        %v3362 = vadd.f32 %v3181, %v3361
        %v3363 = vpop.f32.mrb[0].mxu0
        %v3364 = vpop.f32.mrb[0].mxu0
        %v3365 = vadd.f32 %v3181, %v3364
        %v3366 = vpop.f32.mrb[0].mxu0
        %3367 = vdwg.mxu0
        %3368 = vmatprep.subr.bf16.mxu0 0
        %3369 = vmatpush1.bf16.msra.mxu0 %v3295
        %3370 = vmatprep.subr.bf16.mxu0 0
        %3371 = vmatpush1.bf16.msra.mxu0 %v3296
        %3372 = vmatprep.subr.bf16.mxu0 0
        %3373 = vmatpush1.bf16.msra.mxu0 %v3297
        %3374 = vmatprep.subr.bf16.mxu0 0
        %3375 = vmatpush1.bf16.msra.mxu0 %v3298
        %3376 = vmatprep.subr.bf16.mxu0 0
        %3377 = vmatpush1.bf16.msra.mxu0 %v3299
        %3378 = vmatprep.subr.bf16.mxu0 0
        %3379 = vmatpush1.bf16.msra.mxu0 %v3300
        %3380 = vmatprep.subr.bf16.mxu0 0
        %3381 = vmatpush1.bf16.msra.mxu0 %v3301
        %3382 = vmatprep.subr.bf16.mxu0 0
        %3383 = vmatpush1.bf16.msra.mxu0 %v3302
        %3384 = vmatprep.subr.bf16.mxu0 0
        %3385 = vmatpush1.bf16.msra.mxu0 0
        %3386 = vmatprep.subr.bf16.mxu0 0
        %3387 = vmatpush1.bf16.msra.mxu0 0
        %3388 = vmatprep.subr.bf16.mxu0 0
        %3389 = vmatpush1.bf16.msra.mxu0 0
        %3390 = vmatprep.subr.bf16.mxu0 0
        %3391 = vmatpush1.bf16.msra.mxu0 0
        %3392 = vmatprep.subr.bf16.mxu0 0
        %3393 = vmatpush1.bf16.msra.mxu0 0
        %3394 = vmatprep.subr.bf16.mxu0 0
        %3395 = vmatpush1.bf16.msra.mxu0 0
        %3396 = vmatprep.subr.bf16.mxu0 0
        %3397 = vmatpush1.bf16.msra.mxu0 0
        %3398 = vmatprep.subr.bf16.mxu0 0
        %3399 = vmatpush1.bf16.msra.mxu0 0
        %3400 = vmatprep.mubr.bf16.mxu0 0
        %3401 = vmatmul.mubr.bf16.gmra.mrb[0].mxu0 %v3125
        %v3402 = vpop.f32.mrb[0].mxu0
        %v3403 = vadd.f32 %v3362, %v3402
        %v3404 = vpop.f32.mrb[0].mxu0
        %v3405 = vpop.f32.mrb[0].mxu0
        %v3406 = vadd.f32 %v3365, %v3405
        %v3407 = vpop.f32.mrb[0].mxu0
        %3408 = vdwg.mxu0
        %v3409 = vmax.f32 %v3403, 0.0
        %v3410 = vmax.f32 %v3406, 0.0
        %s3411 = scalar_lea.vmem [#allocation10], 2304
        %v3412 = vld [vmem:[%s3411] sm:$0xf]
        %v3413 = vld [vmem:[%s3411 + $0x4] sm:$0xf]
        %v3414 = vld [vmem:[%s3411 + $0x8] sm:$0xf]
        %v3415 = vld [vmem:[%s3411 + $0xc] sm:$0xf]
        %v3416 = vld [vmem:[%s3411 + $0x10] sm:$0xf]
        %v3417 = vld [vmem:[%s3411 + $0x14] sm:$0xf]
        %v3418 = vld [vmem:[%s3411 + $0x18] sm:$0xf]
        %v3419 = vld [vmem:[%s3411 + $0x1c] sm:$0xf]
        %v3420 = vld [vmem:[%s3411 + $0x20] sm:$0xf]
        %v3421 = vld [vmem:[%s3411 + $0x24] sm:$0xf]
        %v3422 = vld [vmem:[%s3411 + $0x28] sm:$0xf]
        %v3423 = vld [vmem:[%s3411 + $0x2c] sm:$0xf]
        %v3424 = vld [vmem:[%s3411 + $0x30] sm:$0xf]
        %v3425 = vld [vmem:[%s3411 + $0x34] sm:$0xf]
        %v3426 = vld [vmem:[%s3411 + $0x38] sm:$0xf]
        %v3427 = vld [vmem:[%s3411 + $0x3c] sm:$0xf]
        %v3428 = vld [vmem:[%s3411 + $0x40] sm:$0xf]
        %v3429 = vld [vmem:[%s3411 + $0x44] sm:$0xf]
        %v3430 = vld [vmem:[%s3411 + $0x48] sm:$0xf]
        %v3431 = vld [vmem:[%s3411 + $0x4c] sm:$0xf]
        %v3432 = vld [vmem:[%s3411 + $0x50] sm:$0xf]
        %v3433 = vld [vmem:[%s3411 + $0x54] sm:$0xf]
        %v3434 = vld [vmem:[%s3411 + $0x58] sm:$0xf]
        %v3435 = vld [vmem:[%s3411 + $0x5c] sm:$0xf]
        %v3436 = vld [vmem:[%s3411 + $0x60] sm:$0xf]
        %v3437 = vld [vmem:[%s3411 + $0x64] sm:$0xf]
        %v3438 = vld [vmem:[%s3411 + $0x68] sm:$0xf]
        %v3439 = vld [vmem:[%s3411 + $0x6c] sm:$0xf]
        %v3440 = vld [vmem:[%s3411 + $0x70] sm:$0xf]
        %v3441 = vld [vmem:[%s3411 + $0x74] sm:$0xf]
        %v3442 = vld [vmem:[%s3411 + $0x78] sm:$0xf]
        %v3443 = vld [vmem:[%s3411 + $0x7c] sm:$0xf]
        %v3444 = vld [vmem:[%s3411 + $0x80] sm:$0xf]
        %v3445 = vld [vmem:[%s3411 + $0x84] sm:$0xf]
        %v3446 = vld [vmem:[%s3411 + $0x88] sm:$0xf]
        %v3447 = vld [vmem:[%s3411 + $0x8c] sm:$0xf]
        %v3448 = vld [vmem:[%s3411 + $0x90] sm:$0xf]
        %v3449 = vld [vmem:[%s3411 + $0x94] sm:$0xf]
        %v3450 = vld [vmem:[%s3411 + $0x98] sm:$0xf]
        %v3451 = vld [vmem:[%s3411 + $0x9c] sm:$0xf]
        %v3452 = vld [vmem:[%s3411 + $0xa0] sm:$0xf]
        %v3453 = vld [vmem:[%s3411 + $0xa4] sm:$0xf]
        %v3454 = vld [vmem:[%s3411 + $0xa8] sm:$0xf]
        %v3455 = vld [vmem:[%s3411 + $0xac] sm:$0xf]
        %v3456 = vld [vmem:[%s3411 + $0xb0] sm:$0xf]
        %v3457 = vld [vmem:[%s3411 + $0xb4] sm:$0xf]
        %v3458 = vld [vmem:[%s3411 + $0xb8] sm:$0xf]
        %v3459 = vld [vmem:[%s3411 + $0xbc] sm:$0xf]
        %s3460 = scalar_lea.vmem [#allocation13], 12
        %v3461 = vld [vmem:[%s3460] sm:$0x1]
        %v3463 = vlaneseq
        %v3464 = vshrl.u32 %v3463, 7
        %v3465 = vsub.s32 0, %v3464
        %v3466 = vrot.slane %v3461, %v3465
        %v3516 = vunpack.c.l.b16 %v3412
        %v3517 = vunpack.c.l.b16 %v3413
        %v3518 = vunpack.c.l.b16 %v3414
        %v3519 = vunpack.c.l.b16 %v3415
        %v3520 = vunpack.c.l.b16 %v3416
        %v3521 = vunpack.c.l.b16 %v3417
        %v3522 = vunpack.c.l.b16 %v3418
        %v3523 = vunpack.c.l.b16 %v3419
        %v3524 = vunpack.c.l.b16 %v3420
        %v3525 = vunpack.c.l.b16 %v3421
        %v3526 = vunpack.c.l.b16 %v3422
        %v3527 = vunpack.c.l.b16 %v3423
        %v3528 = vunpack.c.l.b16 %v3424
        %v3529 = vunpack.c.l.b16 %v3425
        %v3530 = vunpack.c.l.b16 %v3426
        %v3531 = vunpack.c.l.b16 %v3427
        %v3532 = vunpack.c.l.b16 %v3428
        %v3533 = vunpack.c.l.b16 %v3429
        %v3534 = vunpack.c.l.b16 %v3430
        %v3535 = vunpack.c.l.b16 %v3431
        %v3536 = vunpack.c.l.b16 %v3432
        %v3537 = vunpack.c.l.b16 %v3433
        %v3538 = vunpack.c.l.b16 %v3434
        %v3539 = vunpack.c.l.b16 %v3435
        %v3540 = vunpack.c.l.b16 %v3436
        %v3541 = vunpack.c.l.b16 %v3437
        %v3542 = vunpack.c.l.b16 %v3438
        %v3543 = vunpack.c.l.b16 %v3439
        %v3544 = vunpack.c.l.b16 %v3440
        %v3545 = vunpack.c.l.b16 %v3441
        %v3546 = vunpack.c.l.b16 %v3442
        %v3547 = vunpack.c.l.b16 %v3443
        %v3548 = vunpack.c.l.b16 %v3444
        %v3549 = vunpack.c.l.b16 %v3445
        %v3550 = vunpack.c.l.b16 %v3446
        %v3551 = vunpack.c.l.b16 %v3447
        %v3552 = vunpack.c.l.b16 %v3448
        %v3553 = vunpack.c.l.b16 %v3449
        %v3554 = vunpack.c.l.b16 %v3450
        %v3555 = vunpack.c.l.b16 %v3451
        %v3556 = vunpack.c.l.b16 %v3452
        %v3557 = vunpack.c.l.b16 %v3453
        %v3558 = vunpack.c.l.b16 %v3454
        %v3559 = vunpack.c.l.b16 %v3455
        %v3560 = vunpack.c.l.b16 %v3456
        %v3561 = vunpack.c.l.b16 %v3457
        %v3562 = vunpack.c.l.b16 %v3458
        %v3563 = vunpack.c.l.b16 %v3459
        %v3564 = vpack.c.b16 %v3517, %v3516
        %v3565 = vpack.c.b16 %v3519, %v3518
        %v3566 = vpack.c.b16 %v3521, %v3520
        %v3567 = vpack.c.b16 %v3523, %v3522
        %v3568 = vpack.c.b16 %v3525, %v3524
        %v3569 = vpack.c.b16 %v3527, %v3526
        %v3570 = vpack.c.b16 %v3529, %v3528
        %v3571 = vpack.c.b16 %v3531, %v3530
        %v3572 = vpack.c.b16 %v3533, %v3532
        %v3573 = vpack.c.b16 %v3535, %v3534
        %v3574 = vpack.c.b16 %v3537, %v3536
        %v3575 = vpack.c.b16 %v3539, %v3538
        %v3576 = vpack.c.b16 %v3541, %v3540
        %v3577 = vpack.c.b16 %v3543, %v3542
        %v3578 = vpack.c.b16 %v3545, %v3544
        %v3579 = vpack.c.b16 %v3547, %v3546
        %v3580 = vpack.c.b16 %v3549, %v3548
        %v3581 = vpack.c.b16 %v3551, %v3550
        %v3582 = vpack.c.b16 %v3553, %v3552
        %v3583 = vpack.c.b16 %v3555, %v3554
        %v3584 = vpack.c.b16 %v3557, %v3556
        %v3585 = vpack.c.b16 %v3559, %v3558
        %v3586 = vpack.c.b16 %v3561, %v3560
        %v3587 = vpack.c.b16 %v3563, %v3562
        %3612 = vmatprep.subr.bf16.mxu0 0
        %3613 = vmatpush1.bf16.msra.mxu0 %v3564
        %3614 = vmatprep.subr.bf16.mxu0 0
        %3615 = vmatpush1.bf16.msra.mxu0 %v3565
        %3616 = vmatprep.subr.bf16.mxu0 0
        %3617 = vmatpush1.bf16.msra.mxu0 %v3566
        %3618 = vmatprep.subr.bf16.mxu0 0
        %3619 = vmatpush1.bf16.msra.mxu0 %v3567
        %3620 = vmatprep.subr.bf16.mxu0 0
        %3621 = vmatpush1.bf16.msra.mxu0 %v3568
        %3622 = vmatprep.subr.bf16.mxu0 0
        %3623 = vmatpush1.bf16.msra.mxu0 %v3569
        %3624 = vmatprep.subr.bf16.mxu0 0
        %3625 = vmatpush1.bf16.msra.mxu0 %v3570
        %3626 = vmatprep.subr.bf16.mxu0 0
        %3627 = vmatpush1.bf16.msra.mxu0 %v3571
        %3628 = vmatprep.subr.bf16.mxu0 0
        %3629 = vmatpush1.bf16.msra.mxu0 %v3572
        %3630 = vmatprep.subr.bf16.mxu0 0
        %3631 = vmatpush1.bf16.msra.mxu0 %v3573
        %3632 = vmatprep.subr.bf16.mxu0 0
        %3633 = vmatpush1.bf16.msra.mxu0 %v3574
        %3634 = vmatprep.subr.bf16.mxu0 0
        %3635 = vmatpush1.bf16.msra.mxu0 %v3575
        %3636 = vmatprep.subr.bf16.mxu0 0
        %3637 = vmatpush1.bf16.msra.mxu0 %v3576
        %3638 = vmatprep.subr.bf16.mxu0 0
        %3639 = vmatpush1.bf16.msra.mxu0 %v3577
        %3640 = vmatprep.subr.bf16.mxu0 0
        %3641 = vmatpush1.bf16.msra.mxu0 %v3578
        %3642 = vmatprep.subr.bf16.mxu0 0
        %3643 = vmatpush1.bf16.msra.mxu0 %v3579
        %3644 = vmatprep.mubr.bf16.mxu0 %v3124
        %3645 = vmatmul.mubr.bf16.gmra.mrb[0].mxu0 %v3123
        %v3646 = vpop.f32.mrb[0].mxu0
        %v3647 = vadd.f32 %v3466, %v3646
        %v3648 = vpop.f32.mrb[0].mxu0
        %v3649 = vpop.f32.mrb[0].mxu0
        %v3650 = vadd.f32 %v3466, %v3649
        %v3651 = vpop.f32.mrb[0].mxu0
        %3652 = vdwg.mxu0
        %3653 = vmatprep.subr.bf16.mxu0 0
        %3654 = vmatpush1.bf16.msra.mxu0 %v3580
        %3655 = vmatprep.subr.bf16.mxu0 0
        %3656 = vmatpush1.bf16.msra.mxu0 %v3581
        %3657 = vmatprep.subr.bf16.mxu0 0
        %3658 = vmatpush1.bf16.msra.mxu0 %v3582
        %3659 = vmatprep.subr.bf16.mxu0 0
        %3660 = vmatpush1.bf16.msra.mxu0 %v3583
        %3661 = vmatprep.subr.bf16.mxu0 0
        %3662 = vmatpush1.bf16.msra.mxu0 %v3584
        %3663 = vmatprep.subr.bf16.mxu0 0
        %3664 = vmatpush1.bf16.msra.mxu0 %v3585
        %3665 = vmatprep.subr.bf16.mxu0 0
        %3666 = vmatpush1.bf16.msra.mxu0 %v3586
        %3667 = vmatprep.subr.bf16.mxu0 0
        %3668 = vmatpush1.bf16.msra.mxu0 %v3587
        %3669 = vmatprep.subr.bf16.mxu0 0
        %3670 = vmatpush1.bf16.msra.mxu0 0
        %3671 = vmatprep.subr.bf16.mxu0 0
        %3672 = vmatpush1.bf16.msra.mxu0 0
        %3673 = vmatprep.subr.bf16.mxu0 0
        %3674 = vmatpush1.bf16.msra.mxu0 0
        %3675 = vmatprep.subr.bf16.mxu0 0
        %3676 = vmatpush1.bf16.msra.mxu0 0
        %3677 = vmatprep.subr.bf16.mxu0 0
        %3678 = vmatpush1.bf16.msra.mxu0 0
        %3679 = vmatprep.subr.bf16.mxu0 0
        %3680 = vmatpush1.bf16.msra.mxu0 0
        %3681 = vmatprep.subr.bf16.mxu0 0
        %3682 = vmatpush1.bf16.msra.mxu0 0
        %3683 = vmatprep.subr.bf16.mxu0 0
        %3684 = vmatpush1.bf16.msra.mxu0 0
        %3685 = vmatprep.mubr.bf16.mxu0 0
        %3686 = vmatmul.mubr.bf16.gmra.mrb[0].mxu0 %v3125
        %v3687 = vpop.f32.mrb[0].mxu0
        %v3688 = vadd.f32 %v3647, %v3687
        %v3689 = vpop.f32.mrb[0].mxu0
        %v3690 = vpop.f32.mrb[0].mxu0
        %v3691 = vadd.f32 %v3650, %v3690
        %v3692 = vpop.f32.mrb[0].mxu0
        %3693 = vdwg.mxu0
        %v3694 = vmax.f32 %v3688, 0.0
        %v3695 = vmax.f32 %v3691, 0.0
        %s3696 = scalar_lea.vmem [#allocation9], 1
        %3697 = vst [vmem:[%s3696] ss:$2 sm:$0xff] %v3409
        %s3698 = scalar_lea.vmem [#allocation9], 17
        %3699 = vst [vmem:[%s3698] ss:$2 sm:$0xff] %v3410
        %s3700 = scalar_lea.vmem [#allocation9], 2
        %3701 = vst [vmem:[%s3700] ss:$2 sm:$0xff] %v3694
        %s3702 = scalar_lea.vmem [#allocation9], 18
        %3703 = vst [vmem:[%s3702] ss:$2 sm:$0xff] %v3695
        %v3704 = vld [vmem:[#allocation3] sm:$0xff]
        %v3705 = vld [vmem:[#allocation3 + $0x8] sm:$0xff]
        %v3706 = vld [vmem:[#allocation3 + $0x10] sm:$0xff]
        %v3707 = vld [vmem:[#allocation3 + $0x18] sm:$0xff]
        %v3708 = vld [vmem:[#allocation3 + $0x1] sm:$0xff]
        %v3709 = vld [vmem:[#allocation3 + $0x9] sm:$0xff]
        %v3710 = vld [vmem:[#allocation3 + $0x11] sm:$0xff]
        %v3711 = vld [vmem:[#allocation3 + $0x19] sm:$0xff]
        %v3712 = vld [vmem:[#allocation3 + $0x2] sm:$0xff]
        %v3713 = vld [vmem:[#allocation3 + $0xa] sm:$0xff]
        %v3714 = vld [vmem:[#allocation3 + $0x12] sm:$0xff]
        %v3715 = vld [vmem:[#allocation3 + $0x1a] sm:$0xff]
        %v3716 = vpack.c.bf16 %v3705, %v3704
        %v3717 = vpack.c.bf16 %v3709, %v3708
        %v3718 = vpack.c.bf16 %v3713, %v3712
        %v3719 = vpack.c.bf16 %v3707, %v3706
        %v3720 = vpack.c.bf16 %v3711, %v3710
        %v3721 = vpack.c.bf16 %v3715, %v3714
        %s3722 = scalar_lea.vmem [#allocation10], 1536
        %v3723 = vld [vmem:[%s3722] sm:$0xf]
        %v3724 = vld [vmem:[%s3722 + $0x4] sm:$0xf]
        %v3725 = vld [vmem:[%s3722 + $0x8] sm:$0xf]
        %v3726 = vld [vmem:[%s3722 + $0xc] sm:$0xf]
        %v3727 = vld [vmem:[%s3722 + $0x10] sm:$0xf]
        %v3728 = vld [vmem:[%s3722 + $0x14] sm:$0xf]
        %v3729 = vld [vmem:[%s3722 + $0x18] sm:$0xf]
        %v3730 = vld [vmem:[%s3722 + $0x1c] sm:$0xf]
        %v3731 = vld [vmem:[%s3722 + $0x20] sm:$0xf]
        %v3732 = vld [vmem:[%s3722 + $0x24] sm:$0xf]
        %v3733 = vld [vmem:[%s3722 + $0x28] sm:$0xf]
        %v3734 = vld [vmem:[%s3722 + $0x2c] sm:$0xf]
        %v3735 = vld [vmem:[%s3722 + $0x30] sm:$0xf]
        %v3736 = vld [vmem:[%s3722 + $0x34] sm:$0xf]
        %v3737 = vld [vmem:[%s3722 + $0x38] sm:$0xf]
        %v3738 = vld [vmem:[%s3722 + $0x3c] sm:$0xf]
        %v3739 = vld [vmem:[%s3722 + $0x40] sm:$0xf]
        %v3740 = vld [vmem:[%s3722 + $0x44] sm:$0xf]
        %v3741 = vld [vmem:[%s3722 + $0x48] sm:$0xf]
        %v3742 = vld [vmem:[%s3722 + $0x4c] sm:$0xf]
        %v3743 = vld [vmem:[%s3722 + $0x50] sm:$0xf]
        %v3744 = vld [vmem:[%s3722 + $0x54] sm:$0xf]
        %v3745 = vld [vmem:[%s3722 + $0x58] sm:$0xf]
        %v3746 = vld [vmem:[%s3722 + $0x5c] sm:$0xf]
        %v3747 = vld [vmem:[%s3722 + $0x60] sm:$0xf]
        %v3748 = vld [vmem:[%s3722 + $0x64] sm:$0xf]
        %v3749 = vld [vmem:[%s3722 + $0x68] sm:$0xf]
        %v3750 = vld [vmem:[%s3722 + $0x6c] sm:$0xf]
        %v3751 = vld [vmem:[%s3722 + $0x70] sm:$0xf]
        %v3752 = vld [vmem:[%s3722 + $0x74] sm:$0xf]
        %v3753 = vld [vmem:[%s3722 + $0x78] sm:$0xf]
        %v3754 = vld [vmem:[%s3722 + $0x7c] sm:$0xf]
        %v3755 = vld [vmem:[%s3722 + $0x80] sm:$0xf]
        %v3756 = vld [vmem:[%s3722 + $0x84] sm:$0xf]
        %v3757 = vld [vmem:[%s3722 + $0x88] sm:$0xf]
        %v3758 = vld [vmem:[%s3722 + $0x8c] sm:$0xf]
        %v3759 = vld [vmem:[%s3722 + $0x90] sm:$0xf]
        %v3760 = vld [vmem:[%s3722 + $0x94] sm:$0xf]
        %v3761 = vld [vmem:[%s3722 + $0x98] sm:$0xf]
        %v3762 = vld [vmem:[%s3722 + $0x9c] sm:$0xf]
        %v3763 = vld [vmem:[%s3722 + $0xa0] sm:$0xf]
        %v3764 = vld [vmem:[%s3722 + $0xa4] sm:$0xf]
        %v3765 = vld [vmem:[%s3722 + $0xa8] sm:$0xf]
        %v3766 = vld [vmem:[%s3722 + $0xac] sm:$0xf]
        %v3767 = vld [vmem:[%s3722 + $0xb0] sm:$0xf]
        %v3768 = vld [vmem:[%s3722 + $0xb4] sm:$0xf]
        %v3769 = vld [vmem:[%s3722 + $0xb8] sm:$0xf]
        %v3770 = vld [vmem:[%s3722 + $0xbc] sm:$0xf]
        %s3771 = scalar_lea.vmem [#allocation13], 8
        %v3772 = vld [vmem:[%s3771] sm:$0x1]
        %v3774 = vlaneseq
        %v3775 = vshrl.u32 %v3774, 7
        %v3776 = vsub.s32 0, %v3775
        %v3777 = vrot.slane %v3772, %v3776
        %v3827 = vunpack.c.l.b16 %v3723
        %v3828 = vunpack.c.l.b16 %v3724
        %v3829 = vunpack.c.l.b16 %v3725
        %v3830 = vunpack.c.l.b16 %v3726
        %v3831 = vunpack.c.l.b16 %v3727
        %v3832 = vunpack.c.l.b16 %v3728
        %v3833 = vunpack.c.l.b16 %v3729
        %v3834 = vunpack.c.l.b16 %v3730
        %v3835 = vunpack.c.l.b16 %v3731
        %v3836 = vunpack.c.l.b16 %v3732
        %v3837 = vunpack.c.l.b16 %v3733
        %v3838 = vunpack.c.l.b16 %v3734
        %v3839 = vunpack.c.l.b16 %v3735
        %v3840 = vunpack.c.l.b16 %v3736
        %v3841 = vunpack.c.l.b16 %v3737
        %v3842 = vunpack.c.l.b16 %v3738
        %v3843 = vunpack.c.l.b16 %v3739
        %v3844 = vunpack.c.l.b16 %v3740
        %v3845 = vunpack.c.l.b16 %v3741
        %v3846 = vunpack.c.l.b16 %v3742
        %v3847 = vunpack.c.l.b16 %v3743
        %v3848 = vunpack.c.l.b16 %v3744
        %v3849 = vunpack.c.l.b16 %v3745
        %v3850 = vunpack.c.l.b16 %v3746
        %v3851 = vunpack.c.l.b16 %v3747
        %v3852 = vunpack.c.l.b16 %v3748
        %v3853 = vunpack.c.l.b16 %v3749
        %v3854 = vunpack.c.l.b16 %v3750
        %v3855 = vunpack.c.l.b16 %v3751
        %v3856 = vunpack.c.l.b16 %v3752
        %v3857 = vunpack.c.l.b16 %v3753
        %v3858 = vunpack.c.l.b16 %v3754
        %v3859 = vunpack.c.l.b16 %v3755
        %v3860 = vunpack.c.l.b16 %v3756
        %v3861 = vunpack.c.l.b16 %v3757
        %v3862 = vunpack.c.l.b16 %v3758
        %v3863 = vunpack.c.l.b16 %v3759
        %v3864 = vunpack.c.l.b16 %v3760
        %v3865 = vunpack.c.l.b16 %v3761
        %v3866 = vunpack.c.l.b16 %v3762
        %v3867 = vunpack.c.l.b16 %v3763
        %v3868 = vunpack.c.l.b16 %v3764
        %v3869 = vunpack.c.l.b16 %v3765
        %v3870 = vunpack.c.l.b16 %v3766
        %v3871 = vunpack.c.l.b16 %v3767
        %v3872 = vunpack.c.l.b16 %v3768
        %v3873 = vunpack.c.l.b16 %v3769
        %v3874 = vunpack.c.l.b16 %v3770
        %v3875 = vpack.c.b16 %v3828, %v3827
        %v3876 = vpack.c.b16 %v3830, %v3829
        %v3877 = vpack.c.b16 %v3832, %v3831
        %v3878 = vpack.c.b16 %v3834, %v3833
        %v3879 = vpack.c.b16 %v3836, %v3835
        %v3880 = vpack.c.b16 %v3838, %v3837
        %v3881 = vpack.c.b16 %v3840, %v3839
        %v3882 = vpack.c.b16 %v3842, %v3841
        %v3883 = vpack.c.b16 %v3844, %v3843
        %v3884 = vpack.c.b16 %v3846, %v3845
        %v3885 = vpack.c.b16 %v3848, %v3847
        %v3886 = vpack.c.b16 %v3850, %v3849
        %v3887 = vpack.c.b16 %v3852, %v3851
        %v3888 = vpack.c.b16 %v3854, %v3853
        %v3889 = vpack.c.b16 %v3856, %v3855
        %v3890 = vpack.c.b16 %v3858, %v3857
        %v3891 = vpack.c.b16 %v3860, %v3859
        %v3892 = vpack.c.b16 %v3862, %v3861
        %v3893 = vpack.c.b16 %v3864, %v3863
        %v3894 = vpack.c.b16 %v3866, %v3865
        %v3895 = vpack.c.b16 %v3868, %v3867
        %v3896 = vpack.c.b16 %v3870, %v3869
        %v3897 = vpack.c.b16 %v3872, %v3871
        %v3898 = vpack.c.b16 %v3874, %v3873
        %3923 = vmatprep.subr.bf16.mxu0 0
        %3924 = vmatpush1.bf16.msra.mxu0 %v3875
        %3925 = vmatprep.subr.bf16.mxu0 0
        %3926 = vmatpush1.bf16.msra.mxu0 %v3876
        %3927 = vmatprep.subr.bf16.mxu0 0
        %3928 = vmatpush1.bf16.msra.mxu0 %v3877
        %3929 = vmatprep.subr.bf16.mxu0 0
        %3930 = vmatpush1.bf16.msra.mxu0 %v3878
        %3931 = vmatprep.subr.bf16.mxu0 0
        %3932 = vmatpush1.bf16.msra.mxu0 %v3879
        %3933 = vmatprep.subr.bf16.mxu0 0
        %3934 = vmatpush1.bf16.msra.mxu0 %v3880
        %3935 = vmatprep.subr.bf16.mxu0 0
        %3936 = vmatpush1.bf16.msra.mxu0 %v3881
        %3937 = vmatprep.subr.bf16.mxu0 0
        %3938 = vmatpush1.bf16.msra.mxu0 %v3882
        %3939 = vmatprep.subr.bf16.mxu0 0
        %3940 = vmatpush1.bf16.msra.mxu0 %v3883
        %3941 = vmatprep.subr.bf16.mxu0 0
        %3942 = vmatpush1.bf16.msra.mxu0 %v3884
        %3943 = vmatprep.subr.bf16.mxu0 0
        %3944 = vmatpush1.bf16.msra.mxu0 %v3885
        %3945 = vmatprep.subr.bf16.mxu0 0
        %3946 = vmatpush1.bf16.msra.mxu0 %v3886
        %3947 = vmatprep.subr.bf16.mxu0 0
        %3948 = vmatpush1.bf16.msra.mxu0 %v3887
        %3949 = vmatprep.subr.bf16.mxu0 0
        %3950 = vmatpush1.bf16.msra.mxu0 %v3888
        %3951 = vmatprep.subr.bf16.mxu0 0
        %3952 = vmatpush1.bf16.msra.mxu0 %v3889
        %3953 = vmatprep.subr.bf16.mxu0 0
        %3954 = vmatpush1.bf16.msra.mxu0 %v3890
        %3955 = vmatprep.mubr.bf16.mxu0 %v3717
        %3956 = vmatmul.mubr.bf16.gmra.mrb[0].mxu0 %v3716
        %v3957 = vpop.f32.mrb[0].mxu0
        %v3958 = vadd.f32 %v3777, %v3957
        %v3959 = vpop.f32.mrb[0].mxu0
        %v3960 = vpop.f32.mrb[0].mxu0
        %v3961 = vadd.f32 %v3777, %v3960
        %v3962 = vpop.f32.mrb[0].mxu0
        %3963 = vmatprep.mubr.bf16.mxu0 %v3720
        %3964 = vmatmul.mubr.bf16.gmra.mrb[0].mxu0 %v3719
        %v3965 = vpop.f32.mrb[0].mxu0
        %v3966 = vadd.f32 %v3777, %v3965
        %v3967 = vpop.f32.mrb[0].mxu0
        %v3968 = vpop.f32.mrb[0].mxu0
        %v3969 = vadd.f32 %v3777, %v3968
        %v3970 = vpop.f32.mrb[0].mxu0
        %3971 = vdwg.mxu0
        %3972 = vmatprep.subr.bf16.mxu0 0
        %3973 = vmatpush1.bf16.msra.mxu0 %v3891
        %3974 = vmatprep.subr.bf16.mxu0 0
        %3975 = vmatpush1.bf16.msra.mxu0 %v3892
        %3976 = vmatprep.subr.bf16.mxu0 0
        %3977 = vmatpush1.bf16.msra.mxu0 %v3893
        %3978 = vmatprep.subr.bf16.mxu0 0
        %3979 = vmatpush1.bf16.msra.mxu0 %v3894
        %3980 = vmatprep.subr.bf16.mxu0 0
        %3981 = vmatpush1.bf16.msra.mxu0 %v3895
        %3982 = vmatprep.subr.bf16.mxu0 0
        %3983 = vmatpush1.bf16.msra.mxu0 %v3896
        %3984 = vmatprep.subr.bf16.mxu0 0
        %3985 = vmatpush1.bf16.msra.mxu0 %v3897
        %3986 = vmatprep.subr.bf16.mxu0 0
        %3987 = vmatpush1.bf16.msra.mxu0 %v3898
        %3988 = vmatprep.subr.bf16.mxu0 0
        %3989 = vmatpush1.bf16.msra.mxu0 0
        %3990 = vmatprep.subr.bf16.mxu0 0
        %3991 = vmatpush1.bf16.msra.mxu0 0
        %3992 = vmatprep.subr.bf16.mxu0 0
        %3993 = vmatpush1.bf16.msra.mxu0 0
        %3994 = vmatprep.subr.bf16.mxu0 0
        %3995 = vmatpush1.bf16.msra.mxu0 0
        %3996 = vmatprep.subr.bf16.mxu0 0
        %3997 = vmatpush1.bf16.msra.mxu0 0
        %3998 = vmatprep.subr.bf16.mxu0 0
        %3999 = vmatpush1.bf16.msra.mxu0 0
        %4000 = vmatprep.subr.bf16.mxu0 0
        %4001 = vmatpush1.bf16.msra.mxu0 0
        %4002 = vmatprep.subr.bf16.mxu0 0
        %4003 = vmatpush1.bf16.msra.mxu0 0
        %4004 = vmatprep.mubr.bf16.mxu0 0
        %4005 = vmatmul.mubr.bf16.gmra.mrb[0].mxu0 %v3718
        %v4006 = vpop.f32.mrb[0].mxu0
        %v4007 = vadd.f32 %v3958, %v4006
        %v4008 = vpop.f32.mrb[0].mxu0
        %v4009 = vpop.f32.mrb[0].mxu0
        %v4010 = vadd.f32 %v3961, %v4009
        %v4011 = vpop.f32.mrb[0].mxu0
        %4012 = vmatprep.mubr.bf16.mxu0 0
        %4013 = vmatmul.mubr.bf16.gmra.mrb[0].mxu0 %v3721
        %v4014 = vpop.f32.mrb[0].mxu0
        %v4015 = vadd.f32 %v3966, %v4014
        %v4016 = vpop.f32.mrb[0].mxu0
        %v4017 = vpop.f32.mrb[0].mxu0
        %v4018 = vadd.f32 %v3969, %v4017
        %v4019 = vpop.f32.mrb[0].mxu0
        %4020 = vdwg.mxu0
        %v4021 = vmax.f32 %v4007, 0.0
        %v4022 = vmax.f32 %v4010, 0.0
        %v4023 = vmax.f32 %v4015, 0.0
        %v4024 = vmax.f32 %v4018, 0.0
        %v4025 = vld [vmem:[#allocation9 + $0x1] sm:$0xff]
        %v4026 = vld [vmem:[#allocation9 + $0x9] sm:$0xff]
        %v4027 = vld [vmem:[#allocation9 + $0x11] sm:$0xff]
        %v4028 = vld [vmem:[#allocation9 + $0x19] sm:$0xff]
        %v4029 = vadd.f32 %v4025, %v4021
        %v4030 = vadd.f32 %v4026, %v4022
        %v4031 = vadd.f32 %v4027, %v4023
        %v4032 = vadd.f32 %v4028, %v4024
        %4033 = vst [vmem:[#allocation9 + $0x1] sm:$0xff] %v4029
        %4034 = vst [vmem:[#allocation9 + $0x9] sm:$0xff] %v4030
        %4035 = vst [vmem:[#allocation9 + $0x11] sm:$0xff] %v4031
        %4036 = vst [vmem:[#allocation9 + $0x19] sm:$0xff] %v4032
        %v4037 = vld [vmem:[#allocation9] sm:$0xff]
        %v4038 = vld [vmem:[#allocation9 + $0x8] sm:$0xff]
        %v4039 = vld [vmem:[#allocation9 + $0x10] sm:$0xff]
        %v4040 = vld [vmem:[#allocation9 + $0x18] sm:$0xff]
        %v4041 = vld [vmem:[#allocation9 + $0x1] sm:$0xff]
        %v4042 = vld [vmem:[#allocation9 + $0x9] sm:$0xff]
        %v4043 = vld [vmem:[#allocation9 + $0x11] sm:$0xff]
        %v4044 = vld [vmem:[#allocation9 + $0x19] sm:$0xff]
        %v4045 = vld [vmem:[#allocation9 + $0x2] sm:$0xff]
        %v4046 = vld [vmem:[#allocation9 + $0xa] sm:$0xff]
        %v4047 = vld [vmem:[#allocation9 + $0x12] sm:$0xff]
        %v4048 = vld [vmem:[#allocation9 + $0x1a] sm:$0xff]
        %v4049 = vpack.c.bf16 %v4038, %v4037
        %v4050 = vpack.c.bf16 %v4042, %v4041
        %v4051 = vpack.c.bf16 %v4046, %v4045
        %v4052 = vpack.c.bf16 %v4040, %v4039
        %v4053 = vpack.c.bf16 %v4044, %v4043
        %v4054 = vpack.c.bf16 %v4048, %v4047
        %s4055 = scalar_lea.vmem [#allocation10], 1152
        %v4056 = vld [vmem:[%s4055] sm:$0xf]
        %v4057 = vld [vmem:[%s4055 + $0x4] sm:$0xf]
        %v4058 = vld [vmem:[%s4055 + $0x8] sm:$0xf]
        %v4059 = vld [vmem:[%s4055 + $0xc] sm:$0xf]
        %v4060 = vld [vmem:[%s4055 + $0x10] sm:$0xf]
        %v4061 = vld [vmem:[%s4055 + $0x14] sm:$0xf]
        %v4062 = vld [vmem:[%s4055 + $0x18] sm:$0xf]
        %v4063 = vld [vmem:[%s4055 + $0x1c] sm:$0xf]
        %v4064 = vld [vmem:[%s4055 + $0x20] sm:$0xf]
        %v4065 = vld [vmem:[%s4055 + $0x24] sm:$0xf]
        %v4066 = vld [vmem:[%s4055 + $0x28] sm:$0xf]
        %v4067 = vld [vmem:[%s4055 + $0x2c] sm:$0xf]
        %v4068 = vld [vmem:[%s4055 + $0x30] sm:$0xf]
        %v4069 = vld [vmem:[%s4055 + $0x34] sm:$0xf]
        %v4070 = vld [vmem:[%s4055 + $0x38] sm:$0xf]
        %v4071 = vld [vmem:[%s4055 + $0x3c] sm:$0xf]
        %v4072 = vld [vmem:[%s4055 + $0x40] sm:$0xf]
        %v4073 = vld [vmem:[%s4055 + $0x44] sm:$0xf]
        %v4074 = vld [vmem:[%s4055 + $0x48] sm:$0xf]
        %v4075 = vld [vmem:[%s4055 + $0x4c] sm:$0xf]
        %v4076 = vld [vmem:[%s4055 + $0x50] sm:$0xf]
        %v4077 = vld [vmem:[%s4055 + $0x54] sm:$0xf]
        %v4078 = vld [vmem:[%s4055 + $0x58] sm:$0xf]
        %v4079 = vld [vmem:[%s4055 + $0x5c] sm:$0xf]
        %v4080 = vld [vmem:[%s4055 + $0x60] sm:$0xf]
        %v4081 = vld [vmem:[%s4055 + $0x64] sm:$0xf]
        %v4082 = vld [vmem:[%s4055 + $0x68] sm:$0xf]
        %v4083 = vld [vmem:[%s4055 + $0x6c] sm:$0xf]
        %v4084 = vld [vmem:[%s4055 + $0x70] sm:$0xf]
        %v4085 = vld [vmem:[%s4055 + $0x74] sm:$0xf]
        %v4086 = vld [vmem:[%s4055 + $0x78] sm:$0xf]
        %v4087 = vld [vmem:[%s4055 + $0x7c] sm:$0xf]
        %v4088 = vld [vmem:[%s4055 + $0x80] sm:$0xf]
        %v4089 = vld [vmem:[%s4055 + $0x84] sm:$0xf]
        %v4090 = vld [vmem:[%s4055 + $0x88] sm:$0xf]
        %v4091 = vld [vmem:[%s4055 + $0x8c] sm:$0xf]
        %v4092 = vld [vmem:[%s4055 + $0x90] sm:$0xf]
        %v4093 = vld [vmem:[%s4055 + $0x94] sm:$0xf]
        %v4094 = vld [vmem:[%s4055 + $0x98] sm:$0xf]
        %v4095 = vld [vmem:[%s4055 + $0x9c] sm:$0xf]
        %v4096 = vld [vmem:[%s4055 + $0xa0] sm:$0xf]
        %v4097 = vld [vmem:[%s4055 + $0xa4] sm:$0xf]
        %v4098 = vld [vmem:[%s4055 + $0xa8] sm:$0xf]
        %v4099 = vld [vmem:[%s4055 + $0xac] sm:$0xf]
        %v4100 = vld [vmem:[%s4055 + $0xb0] sm:$0xf]
        %v4101 = vld [vmem:[%s4055 + $0xb4] sm:$0xf]
        %v4102 = vld [vmem:[%s4055 + $0xb8] sm:$0xf]
        %v4103 = vld [vmem:[%s4055 + $0xbc] sm:$0xf]
        %s4104 = scalar_lea.vmem [#allocation13], 6
        %v4105 = vld [vmem:[%s4104] sm:$0x1]
        %v4107 = vlaneseq
        %v4108 = vshrl.u32 %v4107, 7
        %v4109 = vsub.s32 0, %v4108
        %v4110 = vrot.slane %v4105, %v4109
        %v4160 = vunpack.c.l.b16 %v4056
        %v4161 = vunpack.c.l.b16 %v4057
        %v4162 = vunpack.c.l.b16 %v4058
        %v4163 = vunpack.c.l.b16 %v4059
        %v4164 = vunpack.c.l.b16 %v4060
        %v4165 = vunpack.c.l.b16 %v4061
        %v4166 = vunpack.c.l.b16 %v4062
        %v4167 = vunpack.c.l.b16 %v4063
        %v4168 = vunpack.c.l.b16 %v4064
        %v4169 = vunpack.c.l.b16 %v4065
        %v4170 = vunpack.c.l.b16 %v4066
        %v4171 = vunpack.c.l.b16 %v4067
        %v4172 = vunpack.c.l.b16 %v4068
        %v4173 = vunpack.c.l.b16 %v4069
        %v4174 = vunpack.c.l.b16 %v4070
        %v4175 = vunpack.c.l.b16 %v4071
        %v4176 = vunpack.c.l.b16 %v4072
        %v4177 = vunpack.c.l.b16 %v4073
        %v4178 = vunpack.c.l.b16 %v4074
        %v4179 = vunpack.c.l.b16 %v4075
        %v4180 = vunpack.c.l.b16 %v4076
        %v4181 = vunpack.c.l.b16 %v4077
        %v4182 = vunpack.c.l.b16 %v4078
        %v4183 = vunpack.c.l.b16 %v4079
        %v4184 = vunpack.c.l.b16 %v4080
        %v4185 = vunpack.c.l.b16 %v4081
        %v4186 = vunpack.c.l.b16 %v4082
        %v4187 = vunpack.c.l.b16 %v4083
        %v4188 = vunpack.c.l.b16 %v4084
        %v4189 = vunpack.c.l.b16 %v4085
        %v4190 = vunpack.c.l.b16 %v4086
        %v4191 = vunpack.c.l.b16 %v4087
        %v4192 = vunpack.c.l.b16 %v4088
        %v4193 = vunpack.c.l.b16 %v4089
        %v4194 = vunpack.c.l.b16 %v4090
        %v4195 = vunpack.c.l.b16 %v4091
        %v4196 = vunpack.c.l.b16 %v4092
        %v4197 = vunpack.c.l.b16 %v4093
        %v4198 = vunpack.c.l.b16 %v4094
        %v4199 = vunpack.c.l.b16 %v4095
        %v4200 = vunpack.c.l.b16 %v4096
        %v4201 = vunpack.c.l.b16 %v4097
        %v4202 = vunpack.c.l.b16 %v4098
        %v4203 = vunpack.c.l.b16 %v4099
        %v4204 = vunpack.c.l.b16 %v4100
        %v4205 = vunpack.c.l.b16 %v4101
        %v4206 = vunpack.c.l.b16 %v4102
        %v4207 = vunpack.c.l.b16 %v4103
        %v4208 = vpack.c.b16 %v4161, %v4160
        %v4209 = vpack.c.b16 %v4163, %v4162
        %v4210 = vpack.c.b16 %v4165, %v4164
        %v4211 = vpack.c.b16 %v4167, %v4166
        %v4212 = vpack.c.b16 %v4169, %v4168
        %v4213 = vpack.c.b16 %v4171, %v4170
        %v4214 = vpack.c.b16 %v4173, %v4172
        %v4215 = vpack.c.b16 %v4175, %v4174
        %v4216 = vpack.c.b16 %v4177, %v4176
        %v4217 = vpack.c.b16 %v4179, %v4178
        %v4218 = vpack.c.b16 %v4181, %v4180
        %v4219 = vpack.c.b16 %v4183, %v4182
        %v4220 = vpack.c.b16 %v4185, %v4184
        %v4221 = vpack.c.b16 %v4187, %v4186
        %v4222 = vpack.c.b16 %v4189, %v4188
        %v4223 = vpack.c.b16 %v4191, %v4190
        %v4224 = vpack.c.b16 %v4193, %v4192
        %v4225 = vpack.c.b16 %v4195, %v4194
        %v4226 = vpack.c.b16 %v4197, %v4196
        %v4227 = vpack.c.b16 %v4199, %v4198
        %v4228 = vpack.c.b16 %v4201, %v4200
        %v4229 = vpack.c.b16 %v4203, %v4202
        %v4230 = vpack.c.b16 %v4205, %v4204
        %v4231 = vpack.c.b16 %v4207, %v4206
        %4256 = vmatprep.subr.bf16.mxu0 0
        %4257 = vmatpush1.bf16.msra.mxu0 %v4208
        %4258 = vmatprep.subr.bf16.mxu0 0
        %4259 = vmatpush1.bf16.msra.mxu0 %v4209
        %4260 = vmatprep.subr.bf16.mxu0 0
        %4261 = vmatpush1.bf16.msra.mxu0 %v4210
        %4262 = vmatprep.subr.bf16.mxu0 0
        %4263 = vmatpush1.bf16.msra.mxu0 %v4211
        %4264 = vmatprep.subr.bf16.mxu0 0
        %4265 = vmatpush1.bf16.msra.mxu0 %v4212
        %4266 = vmatprep.subr.bf16.mxu0 0
        %4267 = vmatpush1.bf16.msra.mxu0 %v4213
        %4268 = vmatprep.subr.bf16.mxu0 0
        %4269 = vmatpush1.bf16.msra.mxu0 %v4214
        %4270 = vmatprep.subr.bf16.mxu0 0
        %4271 = vmatpush1.bf16.msra.mxu0 %v4215
        %4272 = vmatprep.subr.bf16.mxu0 0
        %4273 = vmatpush1.bf16.msra.mxu0 %v4216
        %4274 = vmatprep.subr.bf16.mxu0 0
        %4275 = vmatpush1.bf16.msra.mxu0 %v4217
        %4276 = vmatprep.subr.bf16.mxu0 0
        %4277 = vmatpush1.bf16.msra.mxu0 %v4218
        %4278 = vmatprep.subr.bf16.mxu0 0
        %4279 = vmatpush1.bf16.msra.mxu0 %v4219
        %4280 = vmatprep.subr.bf16.mxu0 0
        %4281 = vmatpush1.bf16.msra.mxu0 %v4220
        %4282 = vmatprep.subr.bf16.mxu0 0
        %4283 = vmatpush1.bf16.msra.mxu0 %v4221
        %4284 = vmatprep.subr.bf16.mxu0 0
        %4285 = vmatpush1.bf16.msra.mxu0 %v4222
        %4286 = vmatprep.subr.bf16.mxu0 0
        %4287 = vmatpush1.bf16.msra.mxu0 %v4223
        %4288 = vmatprep.mubr.bf16.mxu0 %v4050
        %4289 = vmatmul.mubr.bf16.gmra.mrb[0].mxu0 %v4049
        %v4290 = vpop.f32.mrb[0].mxu0
        %v4291 = vadd.f32 %v4110, %v4290
        %v4292 = vpop.f32.mrb[0].mxu0
        %v4293 = vpop.f32.mrb[0].mxu0
        %v4294 = vadd.f32 %v4110, %v4293
        %v4295 = vpop.f32.mrb[0].mxu0
        %4296 = vmatprep.mubr.bf16.mxu0 %v4053
        %4297 = vmatmul.mubr.bf16.gmra.mrb[0].mxu0 %v4052
        %v4298 = vpop.f32.mrb[0].mxu0
        %v4299 = vadd.f32 %v4110, %v4298
        %v4300 = vpop.f32.mrb[0].mxu0
        %v4301 = vpop.f32.mrb[0].mxu0
        %v4302 = vadd.f32 %v4110, %v4301
        %v4303 = vpop.f32.mrb[0].mxu0
        %4304 = vdwg.mxu0
        %4305 = vmatprep.subr.bf16.mxu0 0
        %4306 = vmatpush1.bf16.msra.mxu0 %v4224
        %4307 = vmatprep.subr.bf16.mxu0 0
        %4308 = vmatpush1.bf16.msra.mxu0 %v4225
        %4309 = vmatprep.subr.bf16.mxu0 0
        %4310 = vmatpush1.bf16.msra.mxu0 %v4226
        %4311 = vmatprep.subr.bf16.mxu0 0
        %4312 = vmatpush1.bf16.msra.mxu0 %v4227
        %4313 = vmatprep.subr.bf16.mxu0 0
        %4314 = vmatpush1.bf16.msra.mxu0 %v4228
        %4315 = vmatprep.subr.bf16.mxu0 0
        %4316 = vmatpush1.bf16.msra.mxu0 %v4229
        %4317 = vmatprep.subr.bf16.mxu0 0
        %4318 = vmatpush1.bf16.msra.mxu0 %v4230
        %4319 = vmatprep.subr.bf16.mxu0 0
        %4320 = vmatpush1.bf16.msra.mxu0 %v4231
        %4321 = vmatprep.subr.bf16.mxu0 0
        %4322 = vmatpush1.bf16.msra.mxu0 0
        %4323 = vmatprep.subr.bf16.mxu0 0
        %4324 = vmatpush1.bf16.msra.mxu0 0
        %4325 = vmatprep.subr.bf16.mxu0 0
        %4326 = vmatpush1.bf16.msra.mxu0 0
        %4327 = vmatprep.subr.bf16.mxu0 0
        %4328 = vmatpush1.bf16.msra.mxu0 0
        %4329 = vmatprep.subr.bf16.mxu0 0
        %4330 = vmatpush1.bf16.msra.mxu0 0
        %4331 = vmatprep.subr.bf16.mxu0 0
        %4332 = vmatpush1.bf16.msra.mxu0 0
        %4333 = vmatprep.subr.bf16.mxu0 0
        %4334 = vmatpush1.bf16.msra.mxu0 0
        %4335 = vmatprep.subr.bf16.mxu0 0
        %4336 = vmatpush1.bf16.msra.mxu0 0
        %4337 = vmatprep.mubr.bf16.mxu0 0
        %4338 = vmatmul.mubr.bf16.gmra.mrb[0].mxu0 %v4051
        %v4339 = vpop.f32.mrb[0].mxu0
        %v4340 = vadd.f32 %v4291, %v4339
        %v4341 = vpop.f32.mrb[0].mxu0
        %v4342 = vpop.f32.mrb[0].mxu0
        %v4343 = vadd.f32 %v4294, %v4342
        %v4344 = vpop.f32.mrb[0].mxu0
        %4345 = vmatprep.mubr.bf16.mxu0 0
        %4346 = vmatmul.mubr.bf16.gmra.mrb[0].mxu0 %v4054
        %v4347 = vpop.f32.mrb[0].mxu0
        %v4348 = vadd.f32 %v4299, %v4347
        %v4349 = vpop.f32.mrb[0].mxu0
        %v4350 = vpop.f32.mrb[0].mxu0
        %v4351 = vadd.f32 %v4302, %v4350
        %v4352 = vpop.f32.mrb[0].mxu0
        %4353 = vdwg.mxu0
        %v4354 = vmax.f32 %v4340, 0.0
        %v4355 = vmax.f32 %v4343, 0.0
        %v4356 = vmax.f32 %v4348, 0.0
        %v4357 = vmax.f32 %v4351, 0.0
        %4358 = vst [vmem:[%s373] sm:$0xff] %v4354
        %4359 = vst [vmem:[%s373 + $0x8] sm:$0xff] %v4355
        %4360 = vst [vmem:[%s373 + $0x10] sm:$0xff] %v4356
        %4361 = vst [vmem:[%s373 + $0x18] sm:$0xff] %v4357
        %s4362 = sand.u32 %s110, 1
        %s4363 = scalar_lea.sflag [#allocation12], %s4362
        %s4364 = sand.u32 %s110, 1
        %s4365 = smul.addr %s4364, 32
        %s4366 = scalar_lea.vmem [#allocation15], %s4365
        %s4367 = sand.u32 %s34, 1
        %s4368 = scalar_lea.sflag [#allocation17], %s4367
        %s4369 = sand.u32 %s136, 1
        %s4370 = smul.addr %s4369, 16
        %s4371 = scalar_lea.vmem [#allocation16], %s4370
        %s4372 = sand.u32 %s34, 1
        %s4373 = scalar_lea.sflag [#allocation17], %s4372
        %s4374 = sand.u32 %s162, 1
        %s4375 = smul.addr %s4374, 8
        %s4376 = scalar_lea.vmem [#allocation18], %s4375
        %s4377 = sand.u32 %s34, 1
        %s4378 = scalar_lea.sflag [#allocation20], %s4377
        %s4379 = sand.u32 %s188, 1
        %s4380 = smul.addr %s4379, 8
        %s4381 = scalar_lea.vmem [#allocation19], %s4380
        %s4382 = sand.u32 %s34, 1
        %s4383 = scalar_lea.sflag [#allocation20], %s4382
        %s4384 = sand.u32 %s214, 1
        %s4385 = smul.addr %s4384, 16
        %s4386 = scalar_lea.vmem [#allocation21], %s4385
        %s4387 = sand.u32 %s240, 1
        %s4388 = scalar_lea.sflag [#allocation23], %s4387
        %s4389 = sand.u32 %s240, 1
        %s4390 = smul.addr %s4389, 32
        %s4391 = scalar_lea.vmem [#allocation22], %s4390
        // Predicated region
        $region41: #{tpu_custom_call.1} parent=31 // pred_check
          %p4392 = pneg %p120
        $region42: #{tpu_custom_call.1} parent=31 // pred_check_branch
          %4394 = sbr.rel (%p4392) target = $region44
        $region43: #{tpu_custom_call.1} parent=31 // pred_region
          %s4396 = ssub.s32 512, 512
          %4397 = vsyncadd %s4363, %s4396
          %s4398 = smul.addr %s34, 4
          %s4399 = smul.addr %s4398, 128
          %s4400 = scalar_lea.hbm %s3, %s4399
          %s4401 = sshll.u32 %s4366, 4
          %s4402 = int_to_ptr.vmem [resolvable:$true] %s4401
          %4407 = dma.vmem_to_hbm [thread:$0]  %s4402, 512, %s4400, %s4363, 128, 128, 8
        $region44: #{tpu_custom_call.1} parent=31 // pred_fallthru
          _
        // Predicated region
        $region45: #{tpu_custom_call.1} parent=31 // pred_check
          %p4408 = pneg %p146
        $region46: #{tpu_custom_call.1} parent=31 // pred_check_branch
          %4410 = sbr.rel (%p4408) target = $region48
        $region47: #{tpu_custom_call.1} parent=31 // pred_region
          %s4412 = ssub.s32 256, 256
          %4413 = vsyncadd %s4368, %s4412
          %s4414 = smul.addr %s34, 2
          %s4415 = smul.addr %s4414, 128
          %s4416 = scalar_lea.hbm %s4, %s4415
          %s4417 = sshll.u32 %s4371, 4
          %s4418 = int_to_ptr.vmem [resolvable:$true] %s4417
          %4423 = dma.vmem_to_hbm [thread:$0]  %s4418, 256, %s4416, %s4368, 128, 128, 8
        $region48: #{tpu_custom_call.1} parent=31 // pred_fallthru
          _
        // Predicated region
        $region49: #{tpu_custom_call.1} parent=31 // pred_check
          %p4424 = pneg %p172
        $region50: #{tpu_custom_call.1} parent=31 // pred_check_branch
          %4426 = sbr.rel (%p4424) target = $region52
        $region51: #{tpu_custom_call.1} parent=31 // pred_region
          %s4428 = ssub.s32 128, 128
          %4429 = vsyncadd %s4373, %s4428
          %s4430 = smul.addr %s34, 128
          %s4431 = scalar_lea.hbm %s5, %s4430
          %s4433 = sshll.u32 %s4376, 4
          %s4434 = int_to_ptr.vmem [resolvable:$true] %s4433
          %4436 = dma.vmem_to_hbm [thread:$0]  %s4434, 128, %s4431, %s4373
        $region52: #{tpu_custom_call.1} parent=31 // pred_fallthru
          _
        // Predicated region
        $region53: #{tpu_custom_call.1} parent=31 // pred_check
          %p4437 = pneg %p198
        $region54: #{tpu_custom_call.1} parent=31 // pred_check_branch
          %4439 = sbr.rel (%p4437) target = $region56
        $region55: #{tpu_custom_call.1} parent=31 // pred_region
          %s4441 = ssub.s32 128, 128
          %4442 = vsyncadd %s4378, %s4441
          %s4443 = smul.addr %s34, 128
          %s4444 = scalar_lea.hbm %s6, %s4443
          %s4446 = sshll.u32 %s4381, 4
          %s4447 = int_to_ptr.vmem [resolvable:$true] %s4446
          %4449 = dma.vmem_to_hbm [thread:$0]  %s4447, 128, %s4444, %s4378
        $region56: #{tpu_custom_call.1} parent=31 // pred_fallthru
          _
        // Predicated region
        $region57: #{tpu_custom_call.1} parent=31 // pred_check
          %p4450 = pneg %p224
        $region58: #{tpu_custom_call.1} parent=31 // pred_check_branch
          %4452 = sbr.rel (%p4450) target = $region60
        $region59: #{tpu_custom_call.1} parent=31 // pred_region
          %s4454 = ssub.s32 256, 256
          %4455 = vsyncadd %s4383, %s4454
          %s4456 = smul.addr %s34, 2
          %s4457 = smul.addr %s4456, 128
          %s4458 = scalar_lea.hbm %s7, %s4457
          %s4459 = sshll.u32 %s4386, 4
          %s4460 = int_to_ptr.vmem [resolvable:$true] %s4459
          %4465 = dma.vmem_to_hbm [thread:$0]  %s4460, 256, %s4458, %s4383, 128, 128, 8
        $region60: #{tpu_custom_call.1} parent=31 // pred_fallthru
          _
        // Predicated region
        $region61: #{tpu_custom_call.1} parent=31 // pred_check
          %p4466 = pneg %p250
        $region62: #{tpu_custom_call.1} parent=31 // pred_check_branch
          %4468 = sbr.rel (%p4466) target = $region64
        $region63: #{tpu_custom_call.1} parent=31 // pred_region
          %s4470 = ssub.s32 512, 512
          %4471 = vsyncadd %s4388, %s4470
          %s4472 = smul.addr %s34, 4
          %s4473 = smul.addr %s4472, 128
          %s4474 = scalar_lea.hbm %s8, %s4473
          %s4475 = sshll.u32 %s4391, 4
          %s4476 = int_to_ptr.vmem [resolvable:$true] %s4475
          %4481 = dma.vmem_to_hbm [thread:$0]  %s4476, 512, %s4474, %s4388, 128, 128, 8
        $region64: #{tpu_custom_call.1} parent=31 // pred_fallthru
          _
      $region32: #{tpu_custom_call.1} parent=5 // pred_fallthru
        _
      %p4482 = scmp.le.s32.totalorder 2, %s29
      // Predicated region
      $region65: #{tpu_custom_call.1} parent=5 // pred_check
        %p4483 = pneg %p4482
      $region66: #{tpu_custom_call.1} parent=5 // pred_check_branch
        %4485 = sbr.rel (%p4483) target = $region68
      $region67: #{tpu_custom_call.1} parent=5 // pred_region
        %s4486 = ssub.s32 %s29, 2
        // Predicated region
        $region69: #{tpu_custom_call.1} parent=67 // pred_check
          %p4487 = pneg %p126
        $region70: #{tpu_custom_call.1} parent=67 // pred_check_branch
          %4489 = sbr.rel (%p4487) target = $region72
        $region71: #{tpu_custom_call.1} parent=67 // pred_region
          %s4490 = sand.u32 %s111, 1
          %s4491 = scalar_lea.sflag [#allocation12], %s4490
          %s4492 = sand.u32 %s111, 1
          %s4493 = smul.addr %s4492, 32
          %s4494 = scalar_lea.vmem [#allocation15], %s4493
          %4495 = dma.done %s4491, 512
        $region72: #{tpu_custom_call.1} parent=67 // pred_fallthru
          _
        // Predicated region
        $region73: #{tpu_custom_call.1} parent=67 // pred_check
          %p4496 = pneg %p152
        $region74: #{tpu_custom_call.1} parent=67 // pred_check_branch
          %4498 = sbr.rel (%p4496) target = $region76
        $region75: #{tpu_custom_call.1} parent=67 // pred_region
          %s4499 = sand.u32 %s35, 1
          %s4500 = scalar_lea.sflag [#allocation17], %s4499
          %s4501 = sand.u32 %s137, 1
          %s4502 = smul.addr %s4501, 16
          %s4503 = scalar_lea.vmem [#allocation16], %s4502
          %4504 = dma.done %s4500, 256
        $region76: #{tpu_custom_call.1} parent=67 // pred_fallthru
          _
        // Predicated region
        $region77: #{tpu_custom_call.1} parent=67 // pred_check
          %p4505 = pneg %p178
        $region78: #{tpu_custom_call.1} parent=67 // pred_check_branch
          %4507 = sbr.rel (%p4505) target = $region80
        $region79: #{tpu_custom_call.1} parent=67 // pred_region
          %s4508 = sand.u32 %s35, 1
          %s4509 = scalar_lea.sflag [#allocation17], %s4508
          %s4510 = sand.u32 %s163, 1
          %s4511 = smul.addr %s4510, 8
          %s4512 = scalar_lea.vmem [#allocation18], %s4511
          %4513 = dma.done %s4509, 128
        $region80: #{tpu_custom_call.1} parent=67 // pred_fallthru
          _
        // Predicated region
        $region81: #{tpu_custom_call.1} parent=67 // pred_check
          %p4514 = pneg %p204
        $region82: #{tpu_custom_call.1} parent=67 // pred_check_branch
          %4516 = sbr.rel (%p4514) target = $region84
        $region83: #{tpu_custom_call.1} parent=67 // pred_region
          %s4517 = sand.u32 %s35, 1
          %s4518 = scalar_lea.sflag [#allocation20], %s4517
          %s4519 = sand.u32 %s189, 1
          %s4520 = smul.addr %s4519, 8
          %s4521 = scalar_lea.vmem [#allocation19], %s4520
          %4522 = dma.done %s4518, 128
        $region84: #{tpu_custom_call.1} parent=67 // pred_fallthru
          _
        // Predicated region
        $region85: #{tpu_custom_call.1} parent=67 // pred_check
          %p4523 = pneg %p230
        $region86: #{tpu_custom_call.1} parent=67 // pred_check_branch
          %4525 = sbr.rel (%p4523) target = $region88
        $region87: #{tpu_custom_call.1} parent=67 // pred_region
          %s4526 = sand.u32 %s35, 1
          %s4527 = scalar_lea.sflag [#allocation20], %s4526
          %s4528 = sand.u32 %s215, 1
          %s4529 = smul.addr %s4528, 16
          %s4530 = scalar_lea.vmem [#allocation21], %s4529
          %4531 = dma.done %s4527, 256
        $region88: #{tpu_custom_call.1} parent=67 // pred_fallthru
          _
        // Predicated region
        $region89: #{tpu_custom_call.1} parent=67 // pred_check
          %p4532 = pneg %p256
        $region90: #{tpu_custom_call.1} parent=67 // pred_check_branch
          %4534 = sbr.rel (%p4532) target = $region92
        $region91: #{tpu_custom_call.1} parent=67 // pred_region
          %s4535 = sand.u32 %s241, 1
          %s4536 = scalar_lea.sflag [#allocation23], %s4535
          %s4537 = sand.u32 %s241, 1
          %s4538 = smul.addr %s4537, 32
          %s4539 = scalar_lea.vmem [#allocation22], %s4538
          %4540 = dma.done %s4536, 512
        $region92: #{tpu_custom_call.1} parent=67 // pred_fallthru
          _
      $region68: #{tpu_custom_call.1} parent=5 // pred_fallthru
        _
    $region6: #{tpu_custom_call.1} parent=1 // loop_footer
      %s33 = sadd.s32 1, %s29
    $region7: #{tpu_custom_call.1} parent=1 // loop_footer_branch
      %28 = sbr.rel target = $region3
    $region8: #{tpu_custom_call.1} parent=1 // loop_exit
      _
    %4541 = vsyncpa [#allocation11], 1
    %s4542 = scalar_lea.sflag [#allocation11], 1
    %4543 = vsyncpa %s4542, 1
    %4544 = vsyncpa [#allocation14], 1
    %4545 = vsyncpa [#allocation12], 1
    %s4546 = scalar_lea.sflag [#allocation12], 1
    %4547 = vsyncpa %s4546, 1
    %4548 = vsyncpa [#allocation17], 1
    %s4549 = scalar_lea.sflag [#allocation17], 1
    %4550 = vsyncpa %s4549, 1
    %4551 = vsyncpa [#allocation20], 1
    %s4552 = scalar_lea.sflag [#allocation20], 1
    %4553 = vsyncpa %s4552, 1
    %4554 = vsyncpa [#allocation23], 1
    %s4555 = scalar_lea.sflag [#allocation23], 1
    %4556 = vsyncpa %s4555, 1

</llo_original>
